<compile_context>
chip_gen: v7x
topology: tpu7x:2x2x1
jax: 0.10.0
libtpu: 0.0.40
codegen_flags: <defaults>
</compile_context>

<pallas_src>
import jax
import jax.numpy as jnp
from jax import lax
from jax.experimental import pallas as pl
from jax.experimental.pallas import tpu as pltpu

H = 100      # logical hidden size (PyTorch)
HP = 128     # padded, lane-aligned hidden size used inside the kernel
SW = 640     # sentiment slab width: 0:300 btc, 300:600 axs, 600/601 bias lanes


# ---------------------------------------------------------------------------
# Fused Pallas kernel.
#   Row layout per timestep (R = 8 rows): rows 0:B = btc batch, B:2B = axs
#   batch, rest zero.  Gate blocks are 128 lanes wide: LSTM [i|f|g|o] (512),
#   GRU [r|z|n] (384).  Per-branch weights are stacked along K:
#   weight rows 0:128 multiply the btc half of the widened state, rows
#   128:256 the axs half; the widened state is row-masked so branches never
#   mix.  Everything VMEM-resident; grid=() single invocation.
# ---------------------------------------------------------------------------
def guess_kernel(price_ref, sent_ref, w_xih_ref, w_lhh_ref, w_gih_ref,
                 w_ghh_ref, rowsc_ref, w_fin_ref, out_ref, gru_ref):
    R = rowsc_ref.shape[0]                 # padded rows per timestep (mult of 8)
    T = price_ref.shape[0] // R
    G2 = 2 * HP                            # packed (btc|axs) matmul K width

    # Hoisted constants (loaded/sliced once, VMEM-resident).
    w_lhh = w_lhh_ref[...]                         # (256, 512) bf16
    w_gih = w_gih_ref[...]                         # (256, 384) bf16
    w_ghh = w_ghh_ref[...]                         # (256, 384) bf16
    bgi = rowsc_ref[:, 0:3 * HP]                   # (R, 384) per-row GRU b_ih
    bgh = rowsc_ref[:, 3 * HP:6 * HP]              # (R, 384) per-row GRU b_hh
    maskw = rowsc_ref[:, 6 * HP:8 * HP]            # (R, 256) branch/row mask
    w_gf = w_fin_ref[0:G2, :]                      # (256, 1) collapsed gru tail
    w_sf = w_fin_ref[G2:, :]                       # (640, 1) collapsed sent tail

    # Hoisted LSTM input projection over all timesteps (per-branch biases are
    # folded in via the two indicator lanes of price_ref).
    xg_all = jnp.dot(price_ref[...], w_xih_ref[...],
                     preferred_element_type=jnp.float32)        # (T*R, 512)

    h = jnp.zeros((R, HP), jnp.float32)            # LSTM hidden (packed rows)
    c = jnp.zeros((R, HP), jnp.float32)            # LSTM cell
    hg = jnp.zeros((R, HP), jnp.float32)           # GRU hidden
    h_w = jnp.zeros((R, G2), jnp.bfloat16)         # widened/masked LSTM hidden
    hg_w = jnp.zeros((R, G2), jnp.bfloat16)        # widened/masked GRU hidden

    for t in range(T):                             # static unroll (T small)
        xg = xg_all[t * R:(t + 1) * R, :]          # 8-row aligned static slice

        # ---- fused both-branch LSTM step (gate blocks [i|f|g|o]) ----
        gates = xg + jnp.dot(h_w, w_lhh, preferred_element_type=jnp.float32)
        i = jax.nn.sigmoid(gates[:, 0:HP])
        f = jax.nn.sigmoid(gates[:, HP:2 * HP])
        g = jnp.tanh(gates[:, 2 * HP:3 * HP])
        o = jax.nn.sigmoid(gates[:, 3 * HP:4 * HP])
        c = f * c + i * g
        h = o * jnp.tanh(c)
        h_w = (jnp.concatenate([h, h], axis=1) * maskw).astype(jnp.bfloat16)

        # ---- fused both-branch GRU step (gate blocks [r|z|n]) ----
        gi = jnp.dot(h_w, w_gih, preferred_element_type=jnp.float32) + bgi
        gh = jnp.dot(hg_w, w_ghh, preferred_element_type=jnp.float32) + bgh
        r = jax.nn.sigmoid(gi[:, 0:HP] + gh[:, 0:HP])
        z = jax.nn.sigmoid(gi[:, HP:2 * HP] + gh[:, HP:2 * HP])
        n = jnp.tanh(gi[:, 2 * HP:3 * HP] + r * gh[:, 2 * HP:3 * HP])
        hg = (1.0 - z) * n + z * hg
        hg_wide = jnp.concatenate([hg, hg], axis=1) * maskw     # f32 (R, 256)
        hg_w = hg_wide.astype(jnp.bfloat16)
        gru_ref[t * R:(t + 1) * R, :] = hg_wide    # stream into VMEM scratch

    # Collapsed (activation-free) linear tail, f32: per-row contribution of
    # each branch.  Biases arrive through the sentiment indicator lanes.
    out_ref[...] = (
        jnp.dot(gru_ref[...], w_gf, preferred_element_type=jnp.float32)
        + jnp.dot(sent_ref[...], w_sf, preferred_element_type=jnp.float32))


# ---------------------------------------------------------------------------
# Parameter construction (deterministic, PyTorch-style uniform init, already
# transposed to (in, out) layout; biases shaped (1, out)).
# ---------------------------------------------------------------------------
def _uniform(key, shape, fan):
    bound = 1.0 / float(fan) ** 0.5
    return jax.random.uniform(key, shape, jnp.float32, -bound, bound)


def make_branch_params(key, features):
    ks = iter(jax.random.split(key, 20))
    p = {}
    # LSTM(features, 100): gate column order [i|f|g|o], each width 100.
    p["wl_ih"] = _uniform(next(ks), (features, 4 * H), H)
    p["wl_hh"] = _uniform(next(ks), (H, 4 * H), H)
    p["bl"] = _uniform(next(ks), (1, 4 * H), H) + _uniform(next(ks), (1, 4 * H), H)
    # GRU(100, 100): gate order [r|z|n]; b_ih / b_hh kept separate (n-gate).
    p["wg_ih"] = _uniform(next(ks), (H, 3 * H), H)
    p["wg_hh"] = _uniform(next(ks), (H, 3 * H), H)
    p["bg_ih"] = _uniform(next(ks), (1, 3 * H), H)
    p["bg_hh"] = _uniform(next(ks), (1, 3 * H), H)
    # fc: Linear(100, 100)
    p["wfc"] = _uniform(next(ks), (H, H), H)
    p["bfc"] = _uniform(next(ks), (1, H), H)
    # dense5: Linear(300, 5)
    p["wd5"] = _uniform(next(ks), (3 * H, 5), 3 * H)
    p["bd5"] = _uniform(next(ks), (1, 5), 3 * H)
    # dense10: Linear(5, 10)
    p["wd10"] = _uniform(next(ks), (5, 10), 5)
    p["bd10"] = _uniform(next(ks), (1, 10), 5)
    # dense10_c: Linear(110, 10)
    p["wc"] = _uniform(next(ks), (110, 10), 110)
    p["bc"] = _uniform(next(ks), (1, 10), 110)
    return p


def make_params(key, features):
    k_btc, k_axs, k_f = jax.random.split(key, 3)
    return {
        "btc": make_branch_params(k_btc, features),
        "axs": make_branch_params(k_axs, features),
        "wf": _uniform(k_f, (20, 1), 20),
        "bf": _uniform(jax.random.fold_in(k_f, 1), (1, 1), 20),
    }


# ---------------------------------------------------------------------------
# Host-side packing: raw per-branch params -> padded slabs with the
# branch-row-stacked / K-stacked layout the kernel expects, plus the collapsed
# (activation-free) linear tail.  Recurrent weights are cast to bf16.
# ---------------------------------------------------------------------------
def pack_params(params, features):
    pb, pa = params["btc"], params["axs"]
    F = features
    KXP = ((2 * F + 2 + 7) // 8) * 8              # price-row width (padded)

    w_xih = jnp.zeros((KXP, 4 * HP), jnp.float32)   # x-proj (+ bias rows 2F, 2F+1)
    w_lhh = jnp.zeros((2 * HP, 4 * HP), jnp.float32)  # LSTM h->gates, K-stacked
    w_gih = jnp.zeros((2 * HP, 3 * HP), jnp.float32)  # GRU  x->gates, K-stacked
    w_ghh = jnp.zeros((2 * HP, 3 * HP), jnp.float32)  # GRU  h->gates, K-stacked
    bg2 = jnp.zeros((2, 6 * HP), jnp.float32)         # per-branch [b_ih | b_hh]

    for br, p in ((0, pb), (1, pa)):
        row0 = br * HP
        # LSTM gates i, f, g, o -> column blocks gidx*HP
        for gidx in range(4):
            col0 = gidx * HP
            src = slice(gidx * H, (gidx + 1) * H)
            w_xih = w_xih.at[br * F:(br + 1) * F, col0:col0 + H].set(p["wl_ih"][:, src])
            w_xih = w_xih.at[2 * F + br, col0:col0 + H].set(p["bl"][0, src])
            w_lhh = w_lhh.at[row0:row0 + H, col0:col0 + H].set(p["wl_hh"][:, src])
        # GRU gates r, z, n
        for gidx in range(3):
            col0 = gidx * HP
            src = slice(gidx * H, (gidx + 1) * H)
            w_gih = w_gih.at[row0:row0 + H, col0:col0 + H].set(p["wg_ih"][:, src])
            w_ghh = w_ghh.at[row0:row0 + H, col0:col0 + H].set(p["wg_hh"][:, src])
            bg2 = bg2.at[br, col0:col0 + H].set(p["bg_ih"][0, src])
            bg2 = bg2.at[br, 3 * HP + col0:3 * HP + col0 + H].set(p["bg_hh"][0, src])

    # Collapse fc -> dense10_c -> dense_final and dense5 -> dense10 ->
    # dense10_c -> dense_final (no activations between them in the PyTorch code).
    wf, bf = params["wf"], params["bf"]
    w_gf = jnp.zeros((2 * HP, 1), jnp.float32)
    w_sf = jnp.zeros((SW, 1), jnp.float32)
    for br, p in ((0, pb), (1, pa)):
        wf_q = wf[br * 10:(br + 1) * 10, :]                     # (10, 1)
        wc_top, wc_bot = p["wc"][0:H, :], p["wc"][H:H + 10, :]
        a_gru = p["wfc"] @ wc_top @ wf_q                        # (100, 1)
        a_sent = p["wd5"] @ p["wd10"] @ wc_bot @ wf_q           # (300, 1)
        bias_q = (p["bfc"] @ wc_top + p["bd5"] @ p["wd10"] @ wc_bot
                  + p["bd10"] @ wc_bot + p["bc"]) @ wf_q        # (1, 1)
        w_gf = w_gf.at[br * HP:br * HP + H, :].set(a_gru)
        w_sf = w_sf.at[br * 300:br * 300 + 300, :].set(a_sent)
        w_sf = w_sf.at[600 + br, 0].set(bias_q[0, 0])
    w_sf = w_sf.at[600, 0].add(bf[0, 0])        # dense_final bias -> btc bias lane

    return {
        "w_xih": w_xih,
        "w_lhh": w_lhh.astype(jnp.bfloat16),
        "w_gih": w_gih.astype(jnp.bfloat16),
        "w_ghh": w_ghh.astype(jnp.bfloat16),
        "bg2": bg2,
        "w_fin": jnp.concatenate([w_gf, w_sf], axis=0),          # (896, 1)
        "kxp": KXP,
    }


# ---------------------------------------------------------------------------
# Wrapper: pure layout plumbing (time-major, row padding, indicator lanes),
# one pallas_call, then the branch-pair sum + reshape to (B, T, 1).
# ---------------------------------------------------------------------------
def guess_forward(btc_price, btc_sentiment, axs_price, axs_sentiment, packed):
    # axs_price accepted for API parity but unused (faithful to the PyTorch code).
    del axs_price
    B, T, F = btc_price.shape
    R = max(8, ((2 * B + 7) // 8) * 8)           # padded rows per timestep
    KXP = packed["kxp"]
    assert 2 * B <= R

    # Price rows: btc rows carry price in lanes 0:F (+ indicator lane 2F),
    # axs rows carry the SAME btc price in lanes F:2F (+ indicator 2F+1).
    p_tm = jnp.transpose(btc_price.astype(jnp.float32), (1, 0, 2))    # (T, B, F)
    price = jnp.zeros((T, R, KXP), jnp.float32)
    price = price.at[:, 0:B, 0:F].set(p_tm)
    price = price.at[:, B:2 * B, F:2 * F].set(p_tm)
    price = price.at[:, 0:B, 2 * F].set(1.0)
    price = price.at[:, B:2 * B, 2 * F + 1].set(1.0)
    price_rows = price.reshape(T * R, KXP)

    # Sentiment rows: btc sentiment in lanes 0:300 of btc rows, axs sentiment
    # in lanes 300:600 of axs rows, tail-bias indicator lanes 600/601.
    s_btc = jnp.transpose(btc_sentiment.reshape(B, T, -1).astype(jnp.float32), (1, 0, 2))
    s_axs = jnp.transpose(axs_sentiment.reshape(B, T, -1).astype(jnp.float32), (1, 0, 2))
    assert s_btc.shape[-1] == 3 * H and s_axs.shape[-1] == 3 * H
    sent = jnp.zeros((T, R, SW), jnp.float32)
    sent = sent.at[:, 0:B, 0:300].set(s_btc)
    sent = sent.at[:, B:2 * B, 300:600].set(s_axs)
    sent = sent.at[:, 0:B, 600].set(1.0)
    sent = sent.at[:, B:2 * B, 601].set(1.0)
    sent_rows = sent.reshape(T * R, SW)

    # Per-row constants: branch-specific GRU biases + the branch/row mask used
    # to widen the packed hidden state for the K-stacked matmuls.
    bg2 = packed["bg2"]
    rowsc = jnp.zeros((R, 8 * HP), jnp.float32)
    rowsc = rowsc.at[0:B, 0:6 * HP].set(jnp.broadcast_to(bg2[0], (B, 6 * HP)))
    rowsc = rowsc.at[B:2 * B, 0:6 * HP].set(jnp.broadcast_to(bg2[1], (B, 6 * HP)))
    rowsc = rowsc.at[0:B, 6 * HP:7 * HP].set(1.0)          # btc half of the mask
    rowsc = rowsc.at[B:2 * B, 7 * HP:8 * HP].set(1.0)      # axs half of the mask

    args = [price_rows, sent_rows, packed["w_xih"], packed["w_lhh"],
            packed["w_gih"], packed["w_ghh"], rowsc, packed["w_fin"]]

    out_rows = pl.pallas_call(
        guess_kernel,
        out_shape=jax.ShapeDtypeStruct((T * R, 1), jnp.float32),
        in_specs=[pl.BlockSpec(memory_space=pltpu.MemorySpace.VMEM)] * len(args),
        out_specs=pl.BlockSpec(memory_space=pltpu.MemorySpace.VMEM),
        scratch_shapes=[pltpu.VMEM((T * R, 2 * HP), jnp.float32)],
    )(*args)

    # Combine the two branch rows per (t, b) and go back to (B, T, 1).
    o = out_rows.reshape(T, R)
    final = o[:, 0:B] + o[:, B:2 * B]                       # (T, B)
    return jnp.transpose(final, (1, 0))[:, :, None]


# ---------------------------------------------------------------------------
# Plain-JAX reference (unfused, f32, H=100) for a correctness check.
# ---------------------------------------------------------------------------
def _lstm_scan(x, w_ih, w_hh, b):
    B, T, F = x.shape
    h0 = jnp.zeros((B, H), jnp.float32)
    c0 = jnp.zeros((B, H), jnp.float32)
    outs0 = jnp.zeros((B, T, H), jnp.float32)

    def body(t, carry):
        h, c, outs = carry
        xt = lax.dynamic_slice(x, (0, t, 0), (B, 1, F)).reshape(B, F)
        gates = xt @ w_ih + h @ w_hh + b
        i = jax.nn.sigmoid(gates[:, 0:H])
        f = jax.nn.sigmoid(gates[:, H:2 * H])
        g = jnp.tanh(gates[:, 2 * H:3 * H])
        o = jax.nn.sigmoid(gates[:, 3 * H:4 * H])
        c = f * c + i * g
        h = o * jnp.tanh(c)
        outs = lax.dynamic_update_slice(outs, h[:, None, :], (0, t, 0))
        return h, c, outs

    _, _, outs = lax.fori_loop(0, T, body, (h0, c0, outs0))
    return outs


def _gru_scan(x, w_ih, w_hh, b_ih, b_hh):
    B, T, F = x.shape
    h0 = jnp.zeros((B, H), jnp.float32)
    outs0 = jnp.zeros((B, T, H), jnp.float32)

    def body(t, carry):
        h, outs = carry
        xt = lax.dynamic_slice(x, (0, t, 0), (B, 1, F)).reshape(B, F)
        gi = xt @ w_ih + b_ih
        gh = h @ w_hh + b_hh
        r = jax.nn.sigmoid(gi[:, 0:H] + gh[:, 0:H])
        z = jax.nn.sigmoid(gi[:, H:2 * H] + gh[:, H:2 * H])
        n = jnp.tanh(gi[:, 2 * H:3 * H] + r * gh[:, 2 * H:3 * H])
        h = (1.0 - z) * n + z * h
        outs = lax.dynamic_update_slice(outs, h[:, None, :], (0, t, 0))
        return h, outs

    _, outs = lax.fori_loop(0, T, body, (h0, outs0))
    return outs


def guess_reference(btc_price, btc_sentiment, axs_sentiment, params):
    B, T, _ = btc_price.shape
    btc_sent = btc_sentiment.reshape(B, T, -1)
    axs_sent = axs_sentiment.reshape(B, T, -1)

    def branch(q, sent):
        lstm_out = _lstm_scan(btc_price, q["wl_ih"], q["wl_hh"], q["bl"])
        gru_out = _gru_scan(lstm_out, q["wg_ih"], q["wg_hh"], q["bg_ih"], q["bg_hh"])
        block = gru_out @ q["wfc"] + q["bfc"]
        s5 = sent @ q["wd5"] + q["bd5"]
        s10 = s5 @ q["wd10"] + q["bd10"]
        cat = jnp.concatenate([block, s10], axis=-1)
        return cat @ q["wc"] + q["bc"]

    btc_out = branch(params["btc"], btc_sent)
    axs_out = branch(params["axs"], axs_sent)
    fin = jnp.concatenate([btc_out, axs_out], axis=-1)
    return fin @ params["wf"] + params["bf"]


if __name__ == "__main__":
    B, T, F = 2, 8, 4            # batch, sequence length, price features
    key = jax.random.PRNGKey(0)
    k_p, k1, k2, k3, k4 = jax.random.split(key, 5)

    params = make_params(k_p, F)
    packed = pack_params(params, F)

    btc_price = jax.random.normal(k1, (B, T, F), jnp.float32)
    axs_price = jax.random.normal(k2, (B, T, F), jnp.float32)
    btc_sentiment = jax.random.normal(k3, (B, T, 3, 100), jnp.float32)
    axs_sentiment = jax.random.normal(k4, (B, T, 3, 100), jnp.float32)

    out = guess_forward(btc_price, btc_sentiment, axs_price, axs_sentiment, packed)
    out = jax.block_until_ready(out)

    ref = jax.block_until_ready(
        guess_reference(btc_price, btc_sentiment, axs_sentiment, params))

    assert out.shape == (B, T, 1), out.shape
    assert bool(jnp.all(jnp.isfinite(out)))
    # Recurrent weights / recurrent LHS are bf16 (f32 accumulate), so compare
    # against the f32 reference with a bf16-appropriate tolerance.
    assert bool(jnp.allclose(out, ref, atol=5e-3, rtol=5e-3)), float(
        jnp.max(jnp.abs(out - ref)))
    print("KERNEL_OK")
</pallas_src>

<mosaic_0001>
module attributes {stable_mosaic.version = 11 : i64} {
  func.func @guess_kernel(%arg0: memref<64x16xf32, #tpu.memory_space<vmem>>, %arg1: memref<64x640xf32, #tpu.memory_space<vmem>>, %arg2: memref<16x512xf32, #tpu.memory_space<vmem>>, %arg3: memref<256x512xbf16, #tpu.memory_space<vmem>>, %arg4: memref<256x384xbf16, #tpu.memory_space<vmem>>, %arg5: memref<256x384xbf16, #tpu.memory_space<vmem>>, %arg6: memref<8x1024xf32, #tpu.memory_space<vmem>>, %arg7: memref<896x1xf32, #tpu.memory_space<vmem>>, %arg8: memref<64x1xf32, #tpu.memory_space<vmem>>, %arg9: memref<64x256xf32, #tpu.memory_space<vmem>>) attributes {dimension_semantics = [], scalar_prefetch = 0 : i64, scratch_operands = 1 : i64, tpu.core_type = #tpu.core_type<tc>} {
    %c0 = arith.constant 0 : index
    %c0_0 = arith.constant 0 : index
    %0 = vector.load %arg3[%c0, %c0_0] : memref<256x512xbf16, #tpu.memory_space<vmem>>, vector<256x512xbf16>
    %c0_1 = arith.constant 0 : index
    %c0_2 = arith.constant 0 : index
    %1 = vector.load %arg4[%c0_1, %c0_2] : memref<256x384xbf16, #tpu.memory_space<vmem>>, vector<256x384xbf16>
    %c0_3 = arith.constant 0 : index
    %c0_4 = arith.constant 0 : index
    %2 = vector.load %arg5[%c0_3, %c0_4] : memref<256x384xbf16, #tpu.memory_space<vmem>>, vector<256x384xbf16>
    %c0_5 = arith.constant 0 : index
    %c0_6 = arith.constant 0 : index
    %3 = vector.load %arg6[%c0_5, %c0_6] : memref<8x1024xf32, #tpu.memory_space<vmem>>, vector<8x384xf32>
    %c0_7 = arith.constant 0 : index
    %c384 = arith.constant 384 : index
    %4 = vector.load %arg6[%c0_7, %c384] : memref<8x1024xf32, #tpu.memory_space<vmem>>, vector<8x384xf32>
    %c0_8 = arith.constant 0 : index
    %c768 = arith.constant 768 : index
    %5 = vector.load %arg6[%c0_8, %c768] : memref<8x1024xf32, #tpu.memory_space<vmem>>, vector<8x256xf32>
    %c0_9 = arith.constant 0 : index
    %c0_10 = arith.constant 0 : index
    %6 = vector.load %arg7[%c0_9, %c0_10] : memref<896x1xf32, #tpu.memory_space<vmem>>, vector<256x1xf32>
    %c256 = arith.constant 256 : index
    %c0_11 = arith.constant 0 : index
    %7 = vector.load %arg7[%c256, %c0_11] : memref<896x1xf32, #tpu.memory_space<vmem>>, vector<640x1xf32>
    %c0_12 = arith.constant 0 : index
    %c0_13 = arith.constant 0 : index
    %8 = vector.load %arg0[%c0_12, %c0_13] : memref<64x16xf32, #tpu.memory_space<vmem>>, vector<64x16xf32>
    %c0_14 = arith.constant 0 : index
    %c0_15 = arith.constant 0 : index
    %9 = vector.load %arg2[%c0_14, %c0_15] : memref<16x512xf32, #tpu.memory_space<vmem>>, vector<16x512xf32>
    %cst = arith.constant dense<0.000000e+00> : vector<64x512xf32>
    %10 = tpu.matmul %8, %9, %cst {dimension_numbers = #tpu.dot_dimension_numbers<[1], [0], [0], [1], [0, 0, 1, 1], [], []>} : vector<64x16xf32>, vector<16x512xf32>, vector<64x512xf32> -> vector<64x512xf32>
    %cst_16 = arith.constant 0.000000e+00 : f32
    %11 = vector.broadcast %cst_16 : f32 to vector<8x128xf32>
    %cst_17 = arith.constant 0.000000e+00 : f32
    %12 = vector.broadcast %cst_17 : f32 to vector<8x128xf32>
    %cst_18 = arith.constant 0.000000e+00 : bf16
    %13 = vector.broadcast %cst_18 : bf16 to vector<8x256xbf16>
    %cst_19 = arith.constant 0.000000e+00 : bf16
    %14 = vector.broadcast %cst_19 : bf16 to vector<8x256xbf16>
    %15 = vector.extract_strided_slice %10 {offsets = [0, 0], sizes = [8, 512], strides = [1, 1]} : vector<64x512xf32> to vector<8x512xf32>
    %cst_20 = arith.constant dense<0.000000e+00> : vector<8x512xf32>
    %16 = tpu.matmul %13, %0, %cst_20 {dimension_numbers = #tpu.dot_dimension_numbers<[1], [0], [0], [1], [0, 0, 1, 1], [], []>} : vector<8x256xbf16>, vector<256x512xbf16>, vector<8x512xf32> -> vector<8x512xf32>
    %17 = arith.addf %15, %16 : vector<8x512xf32>
    %18 = vector.extract_strided_slice %17 {offsets = [0, 0], sizes = [8, 128], strides = [1, 1]} : vector<8x512xf32> to vector<8x128xf32>
    %19 = arith.negf %18 : vector<8x128xf32>
    %20 = math.exp %19 : vector<8x128xf32>
    %cst_21 = arith.constant 1.000000e+00 : f32
    %21 = vector.broadcast %cst_21 : f32 to vector<8x128xf32>
    %22 = arith.addf %21, %20 : vector<8x128xf32>
    %23 = arith.divf %21, %22 : vector<8x128xf32>
    %24 = vector.extract_strided_slice %17 {offsets = [0, 128], sizes = [8, 128], strides = [1, 1]} : vector<8x512xf32> to vector<8x128xf32>
    %25 = arith.negf %24 : vector<8x128xf32>
    %26 = math.exp %25 : vector<8x128xf32>
    %cst_22 = arith.constant 1.000000e+00 : f32
    %27 = vector.broadcast %cst_22 : f32 to vector<8x128xf32>
    %28 = arith.addf %27, %26 : vector<8x128xf32>
    %29 = arith.divf %27, %28 : vector<8x128xf32>
    %30 = vector.extract_strided_slice %17 {offsets = [0, 256], sizes = [8, 128], strides = [1, 1]} : vector<8x512xf32> to vector<8x128xf32>
    %31 = math.tanh %30 : vector<8x128xf32>
    %32 = vector.extract_strided_slice %17 {offsets = [0, 384], sizes = [8, 128], strides = [1, 1]} : vector<8x512xf32> to vector<8x128xf32>
    %33 = arith.negf %32 : vector<8x128xf32>
    %34 = math.exp %33 : vector<8x128xf32>
    %cst_23 = arith.constant 1.000000e+00 : f32
    %35 = vector.broadcast %cst_23 : f32 to vector<8x128xf32>
    %36 = arith.addf %35, %34 : vector<8x128xf32>
    %37 = arith.divf %35, %36 : vector<8x128xf32>
    %38 = arith.mulf %29, %11 : vector<8x128xf32>
    %39 = arith.mulf %23, %31 : vector<8x128xf32>
    %40 = arith.addf %38, %39 : vector<8x128xf32>
    %41 = math.tanh %40 : vector<8x128xf32>
    %42 = arith.mulf %37, %41 : vector<8x128xf32>
    %43 = tpu.concatenate %42, %42 in 1 : vector<8x128xf32>, vector<8x128xf32> -> vector<8x256xf32>
    %44 = arith.mulf %43, %5 : vector<8x256xf32>
    %45 = arith.truncf %44 : vector<8x256xf32> to vector<8x256xbf16>
    %cst_24 = arith.constant dense<0.000000e+00> : vector<8x384xf32>
    %46 = tpu.matmul %45, %1, %cst_24 {dimension_numbers = #tpu.dot_dimension_numbers<[1], [0], [0], [1], [0, 0, 1, 1], [], []>} : vector<8x256xbf16>, vector<256x384xbf16>, vector<8x384xf32> -> vector<8x384xf32>
    %47 = arith.addf %46, %3 : vector<8x384xf32>
    %cst_25 = arith.constant dense<0.000000e+00> : vector<8x384xf32>
    %48 = tpu.matmul %14, %2, %cst_25 {dimension_numbers = #tpu.dot_dimension_numbers<[1], [0], [0], [1], [0, 0, 1, 1], [], []>} : vector<8x256xbf16>, vector<256x384xbf16>, vector<8x384xf32> -> vector<8x384xf32>
    %49 = arith.addf %48, %4 : vector<8x384xf32>
    %50 = vector.extract_strided_slice %47 {offsets = [0, 0], sizes = [8, 128], strides = [1, 1]} : vector<8x384xf32> to vector<8x128xf32>
    %51 = vector.extract_strided_slice %49 {offsets = [0, 0], sizes = [8, 128], strides = [1, 1]} : vector<8x384xf32> to vector<8x128xf32>
    %52 = arith.addf %50, %51 : vector<8x128xf32>
    %53 = arith.negf %52 : vector<8x128xf32>
    %54 = math.exp %53 : vector<8x128xf32>
    %cst_26 = arith.constant 1.000000e+00 : f32
    %55 = vector.broadcast %cst_26 : f32 to vector<8x128xf32>
    %56 = arith.addf %55, %54 : vector<8x128xf32>
    %57 = arith.divf %55, %56 : vector<8x128xf32>
    %58 = vector.extract_strided_slice %47 {offsets = [0, 128], sizes = [8, 128], strides = [1, 1]} : vector<8x384xf32> to vector<8x128xf32>
    %59 = vector.extract_strided_slice %49 {offsets = [0, 128], sizes = [8, 128], strides = [1, 1]} : vector<8x384xf32> to vector<8x128xf32>
    %60 = arith.addf %58, %59 : vector<8x128xf32>
    %61 = arith.negf %60 : vector<8x128xf32>
    %62 = math.exp %61 : vector<8x128xf32>
    %cst_27 = arith.constant 1.000000e+00 : f32
    %63 = vector.broadcast %cst_27 : f32 to vector<8x128xf32>
    %64 = arith.addf %63, %62 : vector<8x128xf32>
    %65 = arith.divf %63, %64 : vector<8x128xf32>
    %66 = vector.extract_strided_slice %47 {offsets = [0, 256], sizes = [8, 128], strides = [1, 1]} : vector<8x384xf32> to vector<8x128xf32>
    %67 = vector.extract_strided_slice %49 {offsets = [0, 256], sizes = [8, 128], strides = [1, 1]} : vector<8x384xf32> to vector<8x128xf32>
    %68 = arith.mulf %57, %67 : vector<8x128xf32>
    %69 = arith.addf %66, %68 : vector<8x128xf32>
    %70 = math.tanh %69 : vector<8x128xf32>
    %cst_28 = arith.constant 1.000000e+00 : f32
    %71 = vector.broadcast %cst_28 : f32 to vector<8x128xf32>
    %72 = arith.subf %71, %65 : vector<8x128xf32>
    %73 = arith.mulf %72, %70 : vector<8x128xf32>
    %74 = arith.mulf %65, %12 : vector<8x128xf32>
    %75 = arith.addf %73, %74 : vector<8x128xf32>
    %76 = tpu.concatenate %75, %75 in 1 : vector<8x128xf32>, vector<8x128xf32> -> vector<8x256xf32>
    %77 = arith.mulf %76, %5 : vector<8x256xf32>
    %78 = arith.truncf %77 : vector<8x256xf32> to vector<8x256xbf16>
    %c0_29 = arith.constant 0 : index
    %c0_30 = arith.constant 0 : index
    %79 = vector.load %arg9[%c0_29, %c0_30] : memref<64x256xf32, #tpu.memory_space<vmem>>, vector<8x256xf32>
    tpu.vector_store %arg9[%c0_29, %c0_30], %77 {strides = array<i32>} : memref<64x256xf32, #tpu.memory_space<vmem>>, vector<8x256xf32>,
    %80 = vector.extract_strided_slice %10 {offsets = [8, 0], sizes = [8, 512], strides = [1, 1]} : vector<64x512xf32> to vector<8x512xf32>
    %cst_31 = arith.constant dense<0.000000e+00> : vector<8x512xf32>
    %81 = tpu.matmul %45, %0, %cst_31 {dimension_numbers = #tpu.dot_dimension_numbers<[1], [0], [0], [1], [0, 0, 1, 1], [], []>} : vector<8x256xbf16>, vector<256x512xbf16>, vector<8x512xf32> -> vector<8x512xf32>
    %82 = arith.addf %80, %81 : vector<8x512xf32>
    %83 = vector.extract_strided_slice %82 {offsets = [0, 0], sizes = [8, 128], strides = [1, 1]} : vector<8x512xf32> to vector<8x128xf32>
    %84 = arith.negf %83 : vector<8x128xf32>
    %85 = math.exp %84 : vector<8x128xf32>
    %cst_32 = arith.constant 1.000000e+00 : f32
    %86 = vector.broadcast %cst_32 : f32 to vector<8x128xf32>
    %87 = arith.addf %86, %85 : vector<8x128xf32>
    %88 = arith.divf %86, %87 : vector<8x128xf32>
    %89 = vector.extract_strided_slice %82 {offsets = [0, 128], sizes = [8, 128], strides = [1, 1]} : vector<8x512xf32> to vector<8x128xf32>
    %90 = arith.negf %89 : vector<8x128xf32>
    %91 = math.exp %90 : vector<8x128xf32>
    %cst_33 = arith.constant 1.000000e+00 : f32
    %92 = vector.broadcast %cst_33 : f32 to vector<8x128xf32>
    %93 = arith.addf %92, %91 : vector<8x128xf32>
    %94 = arith.divf %92, %93 : vector<8x128xf32>
    %95 = vector.extract_strided_slice %82 {offsets = [0, 256], sizes = [8, 128], strides = [1, 1]} : vector<8x512xf32> to vector<8x128xf32>
    %96 = math.tanh %95 : vector<8x128xf32>
    %97 = vector.extract_strided_slice %82 {offsets = [0, 384], sizes = [8, 128], strides = [1, 1]} : vector<8x512xf32> to vector<8x128xf32>
    %98 = arith.negf %97 : vector<8x128xf32>
    %99 = math.exp %98 : vector<8x128xf32>
    %cst_34 = arith.constant 1.000000e+00 : f32
    %100 = vector.broadcast %cst_34 : f32 to vector<8x128xf32>
    %101 = arith.addf %100, %99 : vector<8x128xf32>
    %102 = arith.divf %100, %101 : vector<8x128xf32>
    %103 = arith.mulf %94, %40 : vector<8x128xf32>
    %104 = arith.mulf %88, %96 : vector<8x128xf32>
    %105 = arith.addf %103, %104 : vector<8x128xf32>
    %106 = math.tanh %105 : vector<8x128xf32>
    %107 = arith.mulf %102, %106 : vector<8x128xf32>
    %108 = tpu.concatenate %107, %107 in 1 : vector<8x128xf32>, vector<8x128xf32> -> vector<8x256xf32>
    %109 = arith.mulf %108, %5 : vector<8x256xf32>
    %110 = arith.truncf %109 : vector<8x256xf32> to vector<8x256xbf16>
    %cst_35 = arith.constant dense<0.000000e+00> : vector<8x384xf32>
    %111 = tpu.matmul %110, %1, %cst_35 {dimension_numbers = #tpu.dot_dimension_numbers<[1], [0], [0], [1], [0, 0, 1, 1], [], []>} : vector<8x256xbf16>, vector<256x384xbf16>, vector<8x384xf32> -> vector<8x384xf32>
    %112 = arith.addf %111, %3 : vector<8x384xf32>
    %cst_36 = arith.constant dense<0.000000e+00> : vector<8x384xf32>
    %113 = tpu.matmul %78, %2, %cst_36 {dimension_numbers = #tpu.dot_dimension_numbers<[1], [0], [0], [1], [0, 0, 1, 1], [], []>} : vector<8x256xbf16>, vector<256x384xbf16>, vector<8x384xf32> -> vector<8x384xf32>
    %114 = arith.addf %113, %4 : vector<8x384xf32>
    %115 = vector.extract_strided_slice %112 {offsets = [0, 0], sizes = [8, 128], strides = [1, 1]} : vector<8x384xf32> to vector<8x128xf32>
    %116 = vector.extract_strided_slice %114 {offsets = [0, 0], sizes = [8, 128], strides = [1, 1]} : vector<8x384xf32> to vector<8x128xf32>
    %117 = arith.addf %115, %116 : vector<8x128xf32>
    %118 = arith.negf %117 : vector<8x128xf32>
    %119 = math.exp %118 : vector<8x128xf32>
    %cst_37 = arith.constant 1.000000e+00 : f32
    %120 = vector.broadcast %cst_37 : f32 to vector<8x128xf32>
    %121 = arith.addf %120, %119 : vector<8x128xf32>
    %122 = arith.divf %120, %121 : vector<8x128xf32>
    %123 = vector.extract_strided_slice %112 {offsets = [0, 128], sizes = [8, 128], strides = [1, 1]} : vector<8x384xf32> to vector<8x128xf32>
    %124 = vector.extract_strided_slice %114 {offsets = [0, 128], sizes = [8, 128], strides = [1, 1]} : vector<8x384xf32> to vector<8x128xf32>
    %125 = arith.addf %123, %124 : vector<8x128xf32>
    %126 = arith.negf %125 : vector<8x128xf32>
    %127 = math.exp %126 : vector<8x128xf32>
    %cst_38 = arith.constant 1.000000e+00 : f32
    %128 = vector.broadcast %cst_38 : f32 to vector<8x128xf32>
    %129 = arith.addf %128, %127 : vector<8x128xf32>
    %130 = arith.divf %128, %129 : vector<8x128xf32>
    %131 = vector.extract_strided_slice %112 {offsets = [0, 256], sizes = [8, 128], strides = [1, 1]} : vector<8x384xf32> to vector<8x128xf32>
    %132 = vector.extract_strided_slice %114 {offsets = [0, 256], sizes = [8, 128], strides = [1, 1]} : vector<8x384xf32> to vector<8x128xf32>
    %133 = arith.mulf %122, %132 : vector<8x128xf32>
    %134 = arith.addf %131, %133 : vector<8x128xf32>
    %135 = math.tanh %134 : vector<8x128xf32>
    %cst_39 = arith.constant 1.000000e+00 : f32
    %136 = vector.broadcast %cst_39 : f32 to vector<8x128xf32>
    %137 = arith.subf %136, %130 : vector<8x128xf32>
    %138 = arith.mulf %137, %135 : vector<8x128xf32>
    %139 = arith.mulf %130, %75 : vector<8x128xf32>
    %140 = arith.addf %138, %139 : vector<8x128xf32>
    %141 = tpu.concatenate %140, %140 in 1 : vector<8x128xf32>, vector<8x128xf32> -> vector<8x256xf32>
    %142 = arith.mulf %141, %5 : vector<8x256xf32>
    %143 = arith.truncf %142 : vector<8x256xf32> to vector<8x256xbf16>
    %c8 = arith.constant 8 : index
    %c0_40 = arith.constant 0 : index
    %144 = vector.load %arg9[%c8, %c0_40] : memref<64x256xf32, #tpu.memory_space<vmem>>, vector<8x256xf32>
    tpu.vector_store %arg9[%c8, %c0_40], %142 {strides = array<i32>} : memref<64x256xf32, #tpu.memory_space<vmem>>, vector<8x256xf32>,
    %145 = vector.extract_strided_slice %10 {offsets = [16, 0], sizes = [8, 512], strides = [1, 1]} : vector<64x512xf32> to vector<8x512xf32>
    %cst_41 = arith.constant dense<0.000000e+00> : vector<8x512xf32>
    %146 = tpu.matmul %110, %0, %cst_41 {dimension_numbers = #tpu.dot_dimension_numbers<[1], [0], [0], [1], [0, 0, 1, 1], [], []>} : vector<8x256xbf16>, vector<256x512xbf16>, vector<8x512xf32> -> vector<8x512xf32>
    %147 = arith.addf %145, %146 : vector<8x512xf32>
    %148 = vector.extract_strided_slice %147 {offsets = [0, 0], sizes = [8, 128], strides = [1, 1]} : vector<8x512xf32> to vector<8x128xf32>
    %149 = arith.negf %148 : vector<8x128xf32>
    %150 = math.exp %149 : vector<8x128xf32>
    %cst_42 = arith.constant 1.000000e+00 : f32
    %151 = vector.broadcast %cst_42 : f32 to vector<8x128xf32>
    %152 = arith.addf %151, %150 : vector<8x128xf32>
    %153 = arith.divf %151, %152 : vector<8x128xf32>
    %154 = vector.extract_strided_slice %147 {offsets = [0, 128], sizes = [8, 128], strides = [1, 1]} : vector<8x512xf32> to vector<8x128xf32>
    %155 = arith.negf %154 : vector<8x128xf32>
    %156 = math.exp %155 : vector<8x128xf32>
    %cst_43 = arith.constant 1.000000e+00 : f32
    %157 = vector.broadcast %cst_43 : f32 to vector<8x128xf32>
    %158 = arith.addf %157, %156 : vector<8x128xf32>
    %159 = arith.divf %157, %158 : vector<8x128xf32>
    %160 = vector.extract_strided_slice %147 {offsets = [0, 256], sizes = [8, 128], strides = [1, 1]} : vector<8x512xf32> to vector<8x128xf32>
    %161 = math.tanh %160 : vector<8x128xf32>
    %162 = vector.extract_strided_slice %147 {offsets = [0, 384], sizes = [8, 128], strides = [1, 1]} : vector<8x512xf32> to vector<8x128xf32>
    %163 = arith.negf %162 : vector<8x128xf32>
    %164 = math.exp %163 : vector<8x128xf32>
    %cst_44 = arith.constant 1.000000e+00 : f32
    %165 = vector.broadcast %cst_44 : f32 to vector<8x128xf32>
    %166 = arith.addf %165, %164 : vector<8x128xf32>
    %167 = arith.divf %165, %166 : vector<8x128xf32>
    %168 = arith.mulf %159, %105 : vector<8x128xf32>
    %169 = arith.mulf %153, %161 : vector<8x128xf32>
    %170 = arith.addf %168, %169 : vector<8x128xf32>
    %171 = math.tanh %170 : vector<8x128xf32>
    %172 = arith.mulf %167, %171 : vector<8x128xf32>
    %173 = tpu.concatenate %172, %172 in 1 : vector<8x128xf32>, vector<8x128xf32> -> vector<8x256xf32>
    %174 = arith.mulf %173, %5 : vector<8x256xf32>
    %175 = arith.truncf %174 : vector<8x256xf32> to vector<8x256xbf16>
    %cst_45 = arith.constant dense<0.000000e+00> : vector<8x384xf32>
    %176 = tpu.matmul %175, %1, %cst_45 {dimension_numbers = #tpu.dot_dimension_numbers<[1], [0], [0], [1], [0, 0, 1, 1], [], []>} : vector<8x256xbf16>, vector<256x384xbf16>, vector<8x384xf32> -> vector<8x384xf32>
    %177 = arith.addf %176, %3 : vector<8x384xf32>
    %cst_46 = arith.constant dense<0.000000e+00> : vector<8x384xf32>
    %178 = tpu.matmul %143, %2, %cst_46 {dimension_numbers = #tpu.dot_dimension_numbers<[1], [0], [0], [1], [0, 0, 1, 1], [], []>} : vector<8x256xbf16>, vector<256x384xbf16>, vector<8x384xf32> -> vector<8x384xf32>
    %179 = arith.addf %178, %4 : vector<8x384xf32>
    %180 = vector.extract_strided_slice %177 {offsets = [0, 0], sizes = [8, 128], strides = [1, 1]} : vector<8x384xf32> to vector<8x128xf32>
    %181 = vector.extract_strided_slice %179 {offsets = [0, 0], sizes = [8, 128], strides = [1, 1]} : vector<8x384xf32> to vector<8x128xf32>
    %182 = arith.addf %180, %181 : vector<8x128xf32>
    %183 = arith.negf %182 : vector<8x128xf32>
    %184 = math.exp %183 : vector<8x128xf32>
    %cst_47 = arith.constant 1.000000e+00 : f32
    %185 = vector.broadcast %cst_47 : f32 to vector<8x128xf32>
    %186 = arith.addf %185, %184 : vector<8x128xf32>
    %187 = arith.divf %185, %186 : vector<8x128xf32>
    %188 = vector.extract_strided_slice %177 {offsets = [0, 128], sizes = [8, 128], strides = [1, 1]} : vector<8x384xf32> to vector<8x128xf32>
    %189 = vector.extract_strided_slice %179 {offsets = [0, 128], sizes = [8, 128], strides = [1, 1]} : vector<8x384xf32> to vector<8x128xf32>
    %190 = arith.addf %188, %189 : vector<8x128xf32>
    %191 = arith.negf %190 : vector<8x128xf32>
    %192 = math.exp %191 : vector<8x128xf32>
    %cst_48 = arith.constant 1.000000e+00 : f32
    %193 = vector.broadcast %cst_48 : f32 to vector<8x128xf32>
    %194 = arith.addf %193, %192 : vector<8x128xf32>
    %195 = arith.divf %193, %194 : vector<8x128xf32>
    %196 = vector.extract_strided_slice %177 {offsets = [0, 256], sizes = [8, 128], strides = [1, 1]} : vector<8x384xf32> to vector<8x128xf32>
    %197 = vector.extract_strided_slice %179 {offsets = [0, 256], sizes = [8, 128], strides = [1, 1]} : vector<8x384xf32> to vector<8x128xf32>
    %198 = arith.mulf %187, %197 : vector<8x128xf32>
    %199 = arith.addf %196, %198 : vector<8x128xf32>
    %200 = math.tanh %199 : vector<8x128xf32>
    %cst_49 = arith.constant 1.000000e+00 : f32
    %201 = vector.broadcast %cst_49 : f32 to vector<8x128xf32>
    %202 = arith.subf %201, %195 : vector<8x128xf32>
    %203 = arith.mulf %202, %200 : vector<8x128xf32>
    %204 = arith.mulf %195, %140 : vector<8x128xf32>
    %205 = arith.addf %203, %204 : vector<8x128xf32>
    %206 = tpu.concatenate %205, %205 in 1 : vector<8x128xf32>, vector<8x128xf32> -> vector<8x256xf32>
    %207 = arith.mulf %206, %5 : vector<8x256xf32>
    %208 = arith.truncf %207 : vector<8x256xf32> to vector<8x256xbf16>
    %c16 = arith.constant 16 : index
    %c0_50 = arith.constant 0 : index
    %209 = vector.load %arg9[%c16, %c0_50] : memref<64x256xf32, #tpu.memory_space<vmem>>, vector<8x256xf32>
    tpu.vector_store %arg9[%c16, %c0_50], %207 {strides = array<i32>} : memref<64x256xf32, #tpu.memory_space<vmem>>, vector<8x256xf32>,
    %210 = vector.extract_strided_slice %10 {offsets = [24, 0], sizes = [8, 512], strides = [1, 1]} : vector<64x512xf32> to vector<8x512xf32>
    %cst_51 = arith.constant dense<0.000000e+00> : vector<8x512xf32>
    %211 = tpu.matmul %175, %0, %cst_51 {dimension_numbers = #tpu.dot_dimension_numbers<[1], [0], [0], [1], [0, 0, 1, 1], [], []>} : vector<8x256xbf16>, vector<256x512xbf16>, vector<8x512xf32> -> vector<8x512xf32>
    %212 = arith.addf %210, %211 : vector<8x512xf32>
    %213 = vector.extract_strided_slice %212 {offsets = [0, 0], sizes = [8, 128], strides = [1, 1]} : vector<8x512xf32> to vector<8x128xf32>
    %214 = arith.negf %213 : vector<8x128xf32>
    %215 = math.exp %214 : vector<8x128xf32>
    %cst_52 = arith.constant 1.000000e+00 : f32
    %216 = vector.broadcast %cst_52 : f32 to vector<8x128xf32>
    %217 = arith.addf %216, %215 : vector<8x128xf32>
    %218 = arith.divf %216, %217 : vector<8x128xf32>
    %219 = vector.extract_strided_slice %212 {offsets = [0, 128], sizes = [8, 128], strides = [1, 1]} : vector<8x512xf32> to vector<8x128xf32>
    %220 = arith.negf %219 : vector<8x128xf32>
    %221 = math.exp %220 : vector<8x128xf32>
    %cst_53 = arith.constant 1.000000e+00 : f32
    %222 = vector.broadcast %cst_53 : f32 to vector<8x128xf32>
    %223 = arith.addf %222, %221 : vector<8x128xf32>
    %224 = arith.divf %222, %223 : vector<8x128xf32>
    %225 = vector.extract_strided_slice %212 {offsets = [0, 256], sizes = [8, 128], strides = [1, 1]} : vector<8x512xf32> to vector<8x128xf32>
    %226 = math.tanh %225 : vector<8x128xf32>
    %227 = vector.extract_strided_slice %212 {offsets = [0, 384], sizes = [8, 128], strides = [1, 1]} : vector<8x512xf32> to vector<8x128xf32>
    %228 = arith.negf %227 : vector<8x128xf32>
    %229 = math.exp %228 : vector<8x128xf32>
    %cst_54 = arith.constant 1.000000e+00 : f32
    %230 = vector.broadcast %cst_54 : f32 to vector<8x128xf32>
    %231 = arith.addf %230, %229 : vector<8x128xf32>
    %232 = arith.divf %230, %231 : vector<8x128xf32>
    %233 = arith.mulf %224, %170 : vector<8x128xf32>
    %234 = arith.mulf %218, %226 : vector<8x128xf32>
    %235 = arith.addf %233, %234 : vector<8x128xf32>
    %236 = math.tanh %235 : vector<8x128xf32>
    %237 = arith.mulf %232, %236 : vector<8x128xf32>
    %238 = tpu.concatenate %237, %237 in 1 : vector<8x128xf32>, vector<8x128xf32> -> vector<8x256xf32>
    %239 = arith.mulf %238, %5 : vector<8x256xf32>
    %240 = arith.truncf %239 : vector<8x256xf32> to vector<8x256xbf16>
    %cst_55 = arith.constant dense<0.000000e+00> : vector<8x384xf32>
    %241 = tpu.matmul %240, %1, %cst_55 {dimension_numbers = #tpu.dot_dimension_numbers<[1], [0], [0], [1], [0, 0, 1, 1], [], []>} : vector<8x256xbf16>, vector<256x384xbf16>, vector<8x384xf32> -> vector<8x384xf32>
    %242 = arith.addf %241, %3 : vector<8x384xf32>
    %cst_56 = arith.constant dense<0.000000e+00> : vector<8x384xf32>
    %243 = tpu.matmul %208, %2, %cst_56 {dimension_numbers = #tpu.dot_dimension_numbers<[1], [0], [0], [1], [0, 0, 1, 1], [], []>} : vector<8x256xbf16>, vector<256x384xbf16>, vector<8x384xf32> -> vector<8x384xf32>
    %244 = arith.addf %243, %4 : vector<8x384xf32>
    %245 = vector.extract_strided_slice %242 {offsets = [0, 0], sizes = [8, 128], strides = [1, 1]} : vector<8x384xf32> to vector<8x128xf32>
    %246 = vector.extract_strided_slice %244 {offsets = [0, 0], sizes = [8, 128], strides = [1, 1]} : vector<8x384xf32> to vector<8x128xf32>
    %247 = arith.addf %245, %246 : vector<8x128xf32>
    %248 = arith.negf %247 : vector<8x128xf32>
    %249 = math.exp %248 : vector<8x128xf32>
    %cst_57 = arith.constant 1.000000e+00 : f32
    %250 = vector.broadcast %cst_57 : f32 to vector<8x128xf32>
    %251 = arith.addf %250, %249 : vector<8x128xf32>
    %252 = arith.divf %250, %251 : vector<8x128xf32>
    %253 = vector.extract_strided_slice %242 {offsets = [0, 128], sizes = [8, 128], strides = [1, 1]} : vector<8x384xf32> to vector<8x128xf32>
    %254 = vector.extract_strided_slice %244 {offsets = [0, 128], sizes = [8, 128], strides = [1, 1]} : vector<8x384xf32> to vector<8x128xf32>
    %255 = arith.addf %253, %254 : vector<8x128xf32>
    %256 = arith.negf %255 : vector<8x128xf32>
    %257 = math.exp %256 : vector<8x128xf32>
    %cst_58 = arith.constant 1.000000e+00 : f32
    %258 = vector.broadcast %cst_58 : f32 to vector<8x128xf32>
    %259 = arith.addf %258, %257 : vector<8x128xf32>
    %260 = arith.divf %258, %259 : vector<8x128xf32>
    %261 = vector.extract_strided_slice %242 {offsets = [0, 256], sizes = [8, 128], strides = [1, 1]} : vector<8x384xf32> to vector<8x128xf32>
    %262 = vector.extract_strided_slice %244 {offsets = [0, 256], sizes = [8, 128], strides = [1, 1]} : vector<8x384xf32> to vector<8x128xf32>
    %263 = arith.mulf %252, %262 : vector<8x128xf32>
    %264 = arith.addf %261, %263 : vector<8x128xf32>
    %265 = math.tanh %264 : vector<8x128xf32>
    %cst_59 = arith.constant 1.000000e+00 : f32
    %266 = vector.broadcast %cst_59 : f32 to vector<8x128xf32>
    %267 = arith.subf %266, %260 : vector<8x128xf32>
    %268 = arith.mulf %267, %265 : vector<8x128xf32>
    %269 = arith.mulf %260, %205 : vector<8x128xf32>
    %270 = arith.addf %268, %269 : vector<8x128xf32>
    %271 = tpu.concatenate %270, %270 in 1 : vector<8x128xf32>, vector<8x128xf32> -> vector<8x256xf32>
    %272 = arith.mulf %271, %5 : vector<8x256xf32>
    %273 = arith.truncf %272 : vector<8x256xf32> to vector<8x256xbf16>
    %c24 = arith.constant 24 : index
    %c0_60 = arith.constant 0 : index
    %274 = vector.load %arg9[%c24, %c0_60] : memref<64x256xf32, #tpu.memory_space<vmem>>, vector<8x256xf32>
    tpu.vector_store %arg9[%c24, %c0_60], %272 {strides = array<i32>} : memref<64x256xf32, #tpu.memory_space<vmem>>, vector<8x256xf32>,
    %275 = vector.extract_strided_slice %10 {offsets = [32, 0], sizes = [8, 512], strides = [1, 1]} : vector<64x512xf32> to vector<8x512xf32>
    %cst_61 = arith.constant dense<0.000000e+00> : vector<8x512xf32>
    %276 = tpu.matmul %240, %0, %cst_61 {dimension_numbers = #tpu.dot_dimension_numbers<[1], [0], [0], [1], [0, 0, 1, 1], [], []>} : vector<8x256xbf16>, vector<256x512xbf16>, vector<8x512xf32> -> vector<8x512xf32>
    %277 = arith.addf %275, %276 : vector<8x512xf32>
    %278 = vector.extract_strided_slice %277 {offsets = [0, 0], sizes = [8, 128], strides = [1, 1]} : vector<8x512xf32> to vector<8x128xf32>
    %279 = arith.negf %278 : vector<8x128xf32>
    %280 = math.exp %279 : vector<8x128xf32>
    %cst_62 = arith.constant 1.000000e+00 : f32
    %281 = vector.broadcast %cst_62 : f32 to vector<8x128xf32>
    %282 = arith.addf %281, %280 : vector<8x128xf32>
    %283 = arith.divf %281, %282 : vector<8x128xf32>
    %284 = vector.extract_strided_slice %277 {offsets = [0, 128], sizes = [8, 128], strides = [1, 1]} : vector<8x512xf32> to vector<8x128xf32>
    %285 = arith.negf %284 : vector<8x128xf32>
    %286 = math.exp %285 : vector<8x128xf32>
    %cst_63 = arith.constant 1.000000e+00 : f32
    %287 = vector.broadcast %cst_63 : f32 to vector<8x128xf32>
    %288 = arith.addf %287, %286 : vector<8x128xf32>
    %289 = arith.divf %287, %288 : vector<8x128xf32>
    %290 = vector.extract_strided_slice %277 {offsets = [0, 256], sizes = [8, 128], strides = [1, 1]} : vector<8x512xf32> to vector<8x128xf32>
    %291 = math.tanh %290 : vector<8x128xf32>
    %292 = vector.extract_strided_slice %277 {offsets = [0, 384], sizes = [8, 128], strides = [1, 1]} : vector<8x512xf32> to vector<8x128xf32>
    %293 = arith.negf %292 : vector<8x128xf32>
    %294 = math.exp %293 : vector<8x128xf32>
    %cst_64 = arith.constant 1.000000e+00 : f32
    %295 = vector.broadcast %cst_64 : f32 to vector<8x128xf32>
    %296 = arith.addf %295, %294 : vector<8x128xf32>
    %297 = arith.divf %295, %296 : vector<8x128xf32>
    %298 = arith.mulf %289, %235 : vector<8x128xf32>
    %299 = arith.mulf %283, %291 : vector<8x128xf32>
    %300 = arith.addf %298, %299 : vector<8x128xf32>
    %301 = math.tanh %300 : vector<8x128xf32>
    %302 = arith.mulf %297, %301 : vector<8x128xf32>
    %303 = tpu.concatenate %302, %302 in 1 : vector<8x128xf32>, vector<8x128xf32> -> vector<8x256xf32>
    %304 = arith.mulf %303, %5 : vector<8x256xf32>
    %305 = arith.truncf %304 : vector<8x256xf32> to vector<8x256xbf16>
    %cst_65 = arith.constant dense<0.000000e+00> : vector<8x384xf32>
    %306 = tpu.matmul %305, %1, %cst_65 {dimension_numbers = #tpu.dot_dimension_numbers<[1], [0], [0], [1], [0, 0, 1, 1], [], []>} : vector<8x256xbf16>, vector<256x384xbf16>, vector<8x384xf32> -> vector<8x384xf32>
    %307 = arith.addf %306, %3 : vector<8x384xf32>
    %cst_66 = arith.constant dense<0.000000e+00> : vector<8x384xf32>
    %308 = tpu.matmul %273, %2, %cst_66 {dimension_numbers = #tpu.dot_dimension_numbers<[1], [0], [0], [1], [0, 0, 1, 1], [], []>} : vector<8x256xbf16>, vector<256x384xbf16>, vector<8x384xf32> -> vector<8x384xf32>
    %309 = arith.addf %308, %4 : vector<8x384xf32>
    %310 = vector.extract_strided_slice %307 {offsets = [0, 0], sizes = [8, 128], strides = [1, 1]} : vector<8x384xf32> to vector<8x128xf32>
    %311 = vector.extract_strided_slice %309 {offsets = [0, 0], sizes = [8, 128], strides = [1, 1]} : vector<8x384xf32> to vector<8x128xf32>
    %312 = arith.addf %310, %311 : vector<8x128xf32>
    %313 = arith.negf %312 : vector<8x128xf32>
    %314 = math.exp %313 : vector<8x128xf32>
    %cst_67 = arith.constant 1.000000e+00 : f32
    %315 = vector.broadcast %cst_67 : f32 to vector<8x128xf32>
    %316 = arith.addf %315, %314 : vector<8x128xf32>
    %317 = arith.divf %315, %316 : vector<8x128xf32>
    %318 = vector.extract_strided_slice %307 {offsets = [0, 128], sizes = [8, 128], strides = [1, 1]} : vector<8x384xf32> to vector<8x128xf32>
    %319 = vector.extract_strided_slice %309 {offsets = [0, 128], sizes = [8, 128], strides = [1, 1]} : vector<8x384xf32> to vector<8x128xf32>
    %320 = arith.addf %318, %319 : vector<8x128xf32>
    %321 = arith.negf %320 : vector<8x128xf32>
    %322 = math.exp %321 : vector<8x128xf32>
    %cst_68 = arith.constant 1.000000e+00 : f32
    %323 = vector.broadcast %cst_68 : f32 to vector<8x128xf32>
    %324 = arith.addf %323, %322 : vector<8x128xf32>
    %325 = arith.divf %323, %324 : vector<8x128xf32>
    %326 = vector.extract_strided_slice %307 {offsets = [0, 256], sizes = [8, 128], strides = [1, 1]} : vector<8x384xf32> to vector<8x128xf32>
    %327 = vector.extract_strided_slice %309 {offsets = [0, 256], sizes = [8, 128], strides = [1, 1]} : vector<8x384xf32> to vector<8x128xf32>
    %328 = arith.mulf %317, %327 : vector<8x128xf32>
    %329 = arith.addf %326, %328 : vector<8x128xf32>
    %330 = math.tanh %329 : vector<8x128xf32>
    %cst_69 = arith.constant 1.000000e+00 : f32
    %331 = vector.broadcast %cst_69 : f32 to vector<8x128xf32>
    %332 = arith.subf %331, %325 : vector<8x128xf32>
    %333 = arith.mulf %332, %330 : vector<8x128xf32>
    %334 = arith.mulf %325, %270 : vector<8x128xf32>
    %335 = arith.addf %333, %334 : vector<8x128xf32>
    %336 = tpu.concatenate %335, %335 in 1 : vector<8x128xf32>, vector<8x128xf32> -> vector<8x256xf32>
    %337 = arith.mulf %336, %5 : vector<8x256xf32>
    %338 = arith.truncf %337 : vector<8x256xf32> to vector<8x256xbf16>
    %c32 = arith.constant 32 : index
    %c0_70 = arith.constant 0 : index
    %339 = vector.load %arg9[%c32, %c0_70] : memref<64x256xf32, #tpu.memory_space<vmem>>, vector<8x256xf32>
    tpu.vector_store %arg9[%c32, %c0_70], %337 {strides = array<i32>} : memref<64x256xf32, #tpu.memory_space<vmem>>, vector<8x256xf32>,
    %340 = vector.extract_strided_slice %10 {offsets = [40, 0], sizes = [8, 512], strides = [1, 1]} : vector<64x512xf32> to vector<8x512xf32>
    %cst_71 = arith.constant dense<0.000000e+00> : vector<8x512xf32>
    %341 = tpu.matmul %305, %0, %cst_71 {dimension_numbers = #tpu.dot_dimension_numbers<[1], [0], [0], [1], [0, 0, 1, 1], [], []>} : vector<8x256xbf16>, vector<256x512xbf16>, vector<8x512xf32> -> vector<8x512xf32>
    %342 = arith.addf %340, %341 : vector<8x512xf32>
    %343 = vector.extract_strided_slice %342 {offsets = [0, 0], sizes = [8, 128], strides = [1, 1]} : vector<8x512xf32> to vector<8x128xf32>
    %344 = arith.negf %343 : vector<8x128xf32>
    %345 = math.exp %344 : vector<8x128xf32>
    %cst_72 = arith.constant 1.000000e+00 : f32
    %346 = vector.broadcast %cst_72 : f32 to vector<8x128xf32>
    %347 = arith.addf %346, %345 : vector<8x128xf32>
    %348 = arith.divf %346, %347 : vector<8x128xf32>
    %349 = vector.extract_strided_slice %342 {offsets = [0, 128], sizes = [8, 128], strides = [1, 1]} : vector<8x512xf32> to vector<8x128xf32>
    %350 = arith.negf %349 : vector<8x128xf32>
    %351 = math.exp %350 : vector<8x128xf32>
    %cst_73 = arith.constant 1.000000e+00 : f32
    %352 = vector.broadcast %cst_73 : f32 to vector<8x128xf32>
    %353 = arith.addf %352, %351 : vector<8x128xf32>
    %354 = arith.divf %352, %353 : vector<8x128xf32>
    %355 = vector.extract_strided_slice %342 {offsets = [0, 256], sizes = [8, 128], strides = [1, 1]} : vector<8x512xf32> to vector<8x128xf32>
    %356 = math.tanh %355 : vector<8x128xf32>
    %357 = vector.extract_strided_slice %342 {offsets = [0, 384], sizes = [8, 128], strides = [1, 1]} : vector<8x512xf32> to vector<8x128xf32>
    %358 = arith.negf %357 : vector<8x128xf32>
    %359 = math.exp %358 : vector<8x128xf32>
    %cst_74 = arith.constant 1.000000e+00 : f32
    %360 = vector.broadcast %cst_74 : f32 to vector<8x128xf32>
    %361 = arith.addf %360, %359 : vector<8x128xf32>
    %362 = arith.divf %360, %361 : vector<8x128xf32>
    %363 = arith.mulf %354, %300 : vector<8x128xf32>
    %364 = arith.mulf %348, %356 : vector<8x128xf32>
    %365 = arith.addf %363, %364 : vector<8x128xf32>
    %366 = math.tanh %365 : vector<8x128xf32>
    %367 = arith.mulf %362, %366 : vector<8x128xf32>
    %368 = tpu.concatenate %367, %367 in 1 : vector<8x128xf32>, vector<8x128xf32> -> vector<8x256xf32>
    %369 = arith.mulf %368, %5 : vector<8x256xf32>
    %370 = arith.truncf %369 : vector<8x256xf32> to vector<8x256xbf16>
    %cst_75 = arith.constant dense<0.000000e+00> : vector<8x384xf32>
    %371 = tpu.matmul %370, %1, %cst_75 {dimension_numbers = #tpu.dot_dimension_numbers<[1], [0], [0], [1], [0, 0, 1, 1], [], []>} : vector<8x256xbf16>, vector<256x384xbf16>, vector<8x384xf32> -> vector<8x384xf32>
    %372 = arith.addf %371, %3 : vector<8x384xf32>
    %cst_76 = arith.constant dense<0.000000e+00> : vector<8x384xf32>
    %373 = tpu.matmul %338, %2, %cst_76 {dimension_numbers = #tpu.dot_dimension_numbers<[1], [0], [0], [1], [0, 0, 1, 1], [], []>} : vector<8x256xbf16>, vector<256x384xbf16>, vector<8x384xf32> -> vector<8x384xf32>
    %374 = arith.addf %373, %4 : vector<8x384xf32>
    %375 = vector.extract_strided_slice %372 {offsets = [0, 0], sizes = [8, 128], strides = [1, 1]} : vector<8x384xf32> to vector<8x128xf32>
    %376 = vector.extract_strided_slice %374 {offsets = [0, 0], sizes = [8, 128], strides = [1, 1]} : vector<8x384xf32> to vector<8x128xf32>
    %377 = arith.addf %375, %376 : vector<8x128xf32>
    %378 = arith.negf %377 : vector<8x128xf32>
    %379 = math.exp %378 : vector<8x128xf32>
    %cst_77 = arith.constant 1.000000e+00 : f32
    %380 = vector.broadcast %cst_77 : f32 to vector<8x128xf32>
    %381 = arith.addf %380, %379 : vector<8x128xf32>
    %382 = arith.divf %380, %381 : vector<8x128xf32>
    %383 = vector.extract_strided_slice %372 {offsets = [0, 128], sizes = [8, 128], strides = [1, 1]} : vector<8x384xf32> to vector<8x128xf32>
    %384 = vector.extract_strided_slice %374 {offsets = [0, 128], sizes = [8, 128], strides = [1, 1]} : vector<8x384xf32> to vector<8x128xf32>
    %385 = arith.addf %383, %384 : vector<8x128xf32>
    %386 = arith.negf %385 : vector<8x128xf32>
    %387 = math.exp %386 : vector<8x128xf32>
    %cst_78 = arith.constant 1.000000e+00 : f32
    %388 = vector.broadcast %cst_78 : f32 to vector<8x128xf32>
    %389 = arith.addf %388, %387 : vector<8x128xf32>
    %390 = arith.divf %388, %389 : vector<8x128xf32>
    %391 = vector.extract_strided_slice %372 {offsets = [0, 256], sizes = [8, 128], strides = [1, 1]} : vector<8x384xf32> to vector<8x128xf32>
    %392 = vector.extract_strided_slice %374 {offsets = [0, 256], sizes = [8, 128], strides = [1, 1]} : vector<8x384xf32> to vector<8x128xf32>
    %393 = arith.mulf %382, %392 : vector<8x128xf32>
    %394 = arith.addf %391, %393 : vector<8x128xf32>
    %395 = math.tanh %394 : vector<8x128xf32>
    %cst_79 = arith.constant 1.000000e+00 : f32
    %396 = vector.broadcast %cst_79 : f32 to vector<8x128xf32>
    %397 = arith.subf %396, %390 : vector<8x128xf32>
    %398 = arith.mulf %397, %395 : vector<8x128xf32>
    %399 = arith.mulf %390, %335 : vector<8x128xf32>
    %400 = arith.addf %398, %399 : vector<8x128xf32>
    %401 = tpu.concatenate %400, %400 in 1 : vector<8x128xf32>, vector<8x128xf32> -> vector<8x256xf32>
    %402 = arith.mulf %401, %5 : vector<8x256xf32>
    %403 = arith.truncf %402 : vector<8x256xf32> to vector<8x256xbf16>
    %c40 = arith.constant 40 : index
    %c0_80 = arith.constant 0 : index
    %404 = vector.load %arg9[%c40, %c0_80] : memref<64x256xf32, #tpu.memory_space<vmem>>, vector<8x256xf32>
    tpu.vector_store %arg9[%c40, %c0_80], %402 {strides = array<i32>} : memref<64x256xf32, #tpu.memory_space<vmem>>, vector<8x256xf32>,
    %405 = vector.extract_strided_slice %10 {offsets = [48, 0], sizes = [8, 512], strides = [1, 1]} : vector<64x512xf32> to vector<8x512xf32>
    %cst_81 = arith.constant dense<0.000000e+00> : vector<8x512xf32>
    %406 = tpu.matmul %370, %0, %cst_81 {dimension_numbers = #tpu.dot_dimension_numbers<[1], [0], [0], [1], [0, 0, 1, 1], [], []>} : vector<8x256xbf16>, vector<256x512xbf16>, vector<8x512xf32> -> vector<8x512xf32>
    %407 = arith.addf %405, %406 : vector<8x512xf32>
    %408 = vector.extract_strided_slice %407 {offsets = [0, 0], sizes = [8, 128], strides = [1, 1]} : vector<8x512xf32> to vector<8x128xf32>
    %409 = arith.negf %408 : vector<8x128xf32>
    %410 = math.exp %409 : vector<8x128xf32>
    %cst_82 = arith.constant 1.000000e+00 : f32
    %411 = vector.broadcast %cst_82 : f32 to vector<8x128xf32>
    %412 = arith.addf %411, %410 : vector<8x128xf32>
    %413 = arith.divf %411, %412 : vector<8x128xf32>
    %414 = vector.extract_strided_slice %407 {offsets = [0, 128], sizes = [8, 128], strides = [1, 1]} : vector<8x512xf32> to vector<8x128xf32>
    %415 = arith.negf %414 : vector<8x128xf32>
    %416 = math.exp %415 : vector<8x128xf32>
    %cst_83 = arith.constant 1.000000e+00 : f32
    %417 = vector.broadcast %cst_83 : f32 to vector<8x128xf32>
    %418 = arith.addf %417, %416 : vector<8x128xf32>
    %419 = arith.divf %417, %418 : vector<8x128xf32>
    %420 = vector.extract_strided_slice %407 {offsets = [0, 256], sizes = [8, 128], strides = [1, 1]} : vector<8x512xf32> to vector<8x128xf32>
    %421 = math.tanh %420 : vector<8x128xf32>
    %422 = vector.extract_strided_slice %407 {offsets = [0, 384], sizes = [8, 128], strides = [1, 1]} : vector<8x512xf32> to vector<8x128xf32>
    %423 = arith.negf %422 : vector<8x128xf32>
    %424 = math.exp %423 : vector<8x128xf32>
    %cst_84 = arith.constant 1.000000e+00 : f32
    %425 = vector.broadcast %cst_84 : f32 to vector<8x128xf32>
    %426 = arith.addf %425, %424 : vector<8x128xf32>
    %427 = arith.divf %425, %426 : vector<8x128xf32>
    %428 = arith.mulf %419, %365 : vector<8x128xf32>
    %429 = arith.mulf %413, %421 : vector<8x128xf32>
    %430 = arith.addf %428, %429 : vector<8x128xf32>
    %431 = math.tanh %430 : vector<8x128xf32>
    %432 = arith.mulf %427, %431 : vector<8x128xf32>
    %433 = tpu.concatenate %432, %432 in 1 : vector<8x128xf32>, vector<8x128xf32> -> vector<8x256xf32>
    %434 = arith.mulf %433, %5 : vector<8x256xf32>
    %435 = arith.truncf %434 : vector<8x256xf32> to vector<8x256xbf16>
    %cst_85 = arith.constant dense<0.000000e+00> : vector<8x384xf32>
    %436 = tpu.matmul %435, %1, %cst_85 {dimension_numbers = #tpu.dot_dimension_numbers<[1], [0], [0], [1], [0, 0, 1, 1], [], []>} : vector<8x256xbf16>, vector<256x384xbf16>, vector<8x384xf32> -> vector<8x384xf32>
    %437 = arith.addf %436, %3 : vector<8x384xf32>
    %cst_86 = arith.constant dense<0.000000e+00> : vector<8x384xf32>
    %438 = tpu.matmul %403, %2, %cst_86 {dimension_numbers = #tpu.dot_dimension_numbers<[1], [0], [0], [1], [0, 0, 1, 1], [], []>} : vector<8x256xbf16>, vector<256x384xbf16>, vector<8x384xf32> -> vector<8x384xf32>
    %439 = arith.addf %438, %4 : vector<8x384xf32>
    %440 = vector.extract_strided_slice %437 {offsets = [0, 0], sizes = [8, 128], strides = [1, 1]} : vector<8x384xf32> to vector<8x128xf32>
    %441 = vector.extract_strided_slice %439 {offsets = [0, 0], sizes = [8, 128], strides = [1, 1]} : vector<8x384xf32> to vector<8x128xf32>
    %442 = arith.addf %440, %441 : vector<8x128xf32>
    %443 = arith.negf %442 : vector<8x128xf32>
    %444 = math.exp %443 : vector<8x128xf32>
    %cst_87 = arith.constant 1.000000e+00 : f32
    %445 = vector.broadcast %cst_87 : f32 to vector<8x128xf32>
    %446 = arith.addf %445, %444 : vector<8x128xf32>
    %447 = arith.divf %445, %446 : vector<8x128xf32>
    %448 = vector.extract_strided_slice %437 {offsets = [0, 128], sizes = [8, 128], strides = [1, 1]} : vector<8x384xf32> to vector<8x128xf32>
    %449 = vector.extract_strided_slice %439 {offsets = [0, 128], sizes = [8, 128], strides = [1, 1]} : vector<8x384xf32> to vector<8x128xf32>
    %450 = arith.addf %448, %449 : vector<8x128xf32>
    %451 = arith.negf %450 : vector<8x128xf32>
    %452 = math.exp %451 : vector<8x128xf32>
    %cst_88 = arith.constant 1.000000e+00 : f32
    %453 = vector.broadcast %cst_88 : f32 to vector<8x128xf32>
    %454 = arith.addf %453, %452 : vector<8x128xf32>
    %455 = arith.divf %453, %454 : vector<8x128xf32>
    %456 = vector.extract_strided_slice %437 {offsets = [0, 256], sizes = [8, 128], strides = [1, 1]} : vector<8x384xf32> to vector<8x128xf32>
    %457 = vector.extract_strided_slice %439 {offsets = [0, 256], sizes = [8, 128], strides = [1, 1]} : vector<8x384xf32> to vector<8x128xf32>
    %458 = arith.mulf %447, %457 : vector<8x128xf32>
    %459 = arith.addf %456, %458 : vector<8x128xf32>
    %460 = math.tanh %459 : vector<8x128xf32>
    %cst_89 = arith.constant 1.000000e+00 : f32
    %461 = vector.broadcast %cst_89 : f32 to vector<8x128xf32>
    %462 = arith.subf %461, %455 : vector<8x128xf32>
    %463 = arith.mulf %462, %460 : vector<8x128xf32>
    %464 = arith.mulf %455, %400 : vector<8x128xf32>
    %465 = arith.addf %463, %464 : vector<8x128xf32>
    %466 = tpu.concatenate %465, %465 in 1 : vector<8x128xf32>, vector<8x128xf32> -> vector<8x256xf32>
    %467 = arith.mulf %466, %5 : vector<8x256xf32>
    %468 = arith.truncf %467 : vector<8x256xf32> to vector<8x256xbf16>
    %c48 = arith.constant 48 : index
    %c0_90 = arith.constant 0 : index
    %469 = vector.load %arg9[%c48, %c0_90] : memref<64x256xf32, #tpu.memory_space<vmem>>, vector<8x256xf32>
    tpu.vector_store %arg9[%c48, %c0_90], %467 {strides = array<i32>} : memref<64x256xf32, #tpu.memory_space<vmem>>, vector<8x256xf32>,
    %470 = vector.extract_strided_slice %10 {offsets = [56, 0], sizes = [8, 512], strides = [1, 1]} : vector<64x512xf32> to vector<8x512xf32>
    %cst_91 = arith.constant dense<0.000000e+00> : vector<8x512xf32>
    %471 = tpu.matmul %435, %0, %cst_91 {dimension_numbers = #tpu.dot_dimension_numbers<[1], [0], [0], [1], [0, 0, 1, 1], [], []>} : vector<8x256xbf16>, vector<256x512xbf16>, vector<8x512xf32> -> vector<8x512xf32>
    %472 = arith.addf %470, %471 : vector<8x512xf32>
    %473 = vector.extract_strided_slice %472 {offsets = [0, 0], sizes = [8, 128], strides = [1, 1]} : vector<8x512xf32> to vector<8x128xf32>
    %474 = arith.negf %473 : vector<8x128xf32>
    %475 = math.exp %474 : vector<8x128xf32>
    %cst_92 = arith.constant 1.000000e+00 : f32
    %476 = vector.broadcast %cst_92 : f32 to vector<8x128xf32>
    %477 = arith.addf %476, %475 : vector<8x128xf32>
    %478 = arith.divf %476, %477 : vector<8x128xf32>
    %479 = vector.extract_strided_slice %472 {offsets = [0, 128], sizes = [8, 128], strides = [1, 1]} : vector<8x512xf32> to vector<8x128xf32>
    %480 = arith.negf %479 : vector<8x128xf32>
    %481 = math.exp %480 : vector<8x128xf32>
    %cst_93 = arith.constant 1.000000e+00 : f32
    %482 = vector.broadcast %cst_93 : f32 to vector<8x128xf32>
    %483 = arith.addf %482, %481 : vector<8x128xf32>
    %484 = arith.divf %482, %483 : vector<8x128xf32>
    %485 = vector.extract_strided_slice %472 {offsets = [0, 256], sizes = [8, 128], strides = [1, 1]} : vector<8x512xf32> to vector<8x128xf32>
    %486 = math.tanh %485 : vector<8x128xf32>
    %487 = vector.extract_strided_slice %472 {offsets = [0, 384], sizes = [8, 128], strides = [1, 1]} : vector<8x512xf32> to vector<8x128xf32>
    %488 = arith.negf %487 : vector<8x128xf32>
    %489 = math.exp %488 : vector<8x128xf32>
    %cst_94 = arith.constant 1.000000e+00 : f32
    %490 = vector.broadcast %cst_94 : f32 to vector<8x128xf32>
    %491 = arith.addf %490, %489 : vector<8x128xf32>
    %492 = arith.divf %490, %491 : vector<8x128xf32>
    %493 = arith.mulf %484, %430 : vector<8x128xf32>
    %494 = arith.mulf %478, %486 : vector<8x128xf32>
    %495 = arith.addf %493, %494 : vector<8x128xf32>
    %496 = math.tanh %495 : vector<8x128xf32>
    %497 = arith.mulf %492, %496 : vector<8x128xf32>
    %498 = tpu.concatenate %497, %497 in 1 : vector<8x128xf32>, vector<8x128xf32> -> vector<8x256xf32>
    %499 = arith.mulf %498, %5 : vector<8x256xf32>
    %500 = arith.truncf %499 : vector<8x256xf32> to vector<8x256xbf16>
    %cst_95 = arith.constant dense<0.000000e+00> : vector<8x384xf32>
    %501 = tpu.matmul %500, %1, %cst_95 {dimension_numbers = #tpu.dot_dimension_numbers<[1], [0], [0], [1], [0, 0, 1, 1], [], []>} : vector<8x256xbf16>, vector<256x384xbf16>, vector<8x384xf32> -> vector<8x384xf32>
    %502 = arith.addf %501, %3 : vector<8x384xf32>
    %cst_96 = arith.constant dense<0.000000e+00> : vector<8x384xf32>
    %503 = tpu.matmul %468, %2, %cst_96 {dimension_numbers = #tpu.dot_dimension_numbers<[1], [0], [0], [1], [0, 0, 1, 1], [], []>} : vector<8x256xbf16>, vector<256x384xbf16>, vector<8x384xf32> -> vector<8x384xf32>
    %504 = arith.addf %503, %4 : vector<8x384xf32>
    %505 = vector.extract_strided_slice %502 {offsets = [0, 0], sizes = [8, 128], strides = [1, 1]} : vector<8x384xf32> to vector<8x128xf32>
    %506 = vector.extract_strided_slice %504 {offsets = [0, 0], sizes = [8, 128], strides = [1, 1]} : vector<8x384xf32> to vector<8x128xf32>
    %507 = arith.addf %505, %506 : vector<8x128xf32>
    %508 = arith.negf %507 : vector<8x128xf32>
    %509 = math.exp %508 : vector<8x128xf32>
    %cst_97 = arith.constant 1.000000e+00 : f32
    %510 = vector.broadcast %cst_97 : f32 to vector<8x128xf32>
    %511 = arith.addf %510, %509 : vector<8x128xf32>
    %512 = arith.divf %510, %511 : vector<8x128xf32>
    %513 = vector.extract_strided_slice %502 {offsets = [0, 128], sizes = [8, 128], strides = [1, 1]} : vector<8x384xf32> to vector<8x128xf32>
    %514 = vector.extract_strided_slice %504 {offsets = [0, 128], sizes = [8, 128], strides = [1, 1]} : vector<8x384xf32> to vector<8x128xf32>
    %515 = arith.addf %513, %514 : vector<8x128xf32>
    %516 = arith.negf %515 : vector<8x128xf32>
    %517 = math.exp %516 : vector<8x128xf32>
    %cst_98 = arith.constant 1.000000e+00 : f32
    %518 = vector.broadcast %cst_98 : f32 to vector<8x128xf32>
    %519 = arith.addf %518, %517 : vector<8x128xf32>
    %520 = arith.divf %518, %519 : vector<8x128xf32>
    %521 = vector.extract_strided_slice %502 {offsets = [0, 256], sizes = [8, 128], strides = [1, 1]} : vector<8x384xf32> to vector<8x128xf32>
    %522 = vector.extract_strided_slice %504 {offsets = [0, 256], sizes = [8, 128], strides = [1, 1]} : vector<8x384xf32> to vector<8x128xf32>
    %523 = arith.mulf %512, %522 : vector<8x128xf32>
    %524 = arith.addf %521, %523 : vector<8x128xf32>
    %525 = math.tanh %524 : vector<8x128xf32>
    %cst_99 = arith.constant 1.000000e+00 : f32
    %526 = vector.broadcast %cst_99 : f32 to vector<8x128xf32>
    %527 = arith.subf %526, %520 : vector<8x128xf32>
    %528 = arith.mulf %527, %525 : vector<8x128xf32>
    %529 = arith.mulf %520, %465 : vector<8x128xf32>
    %530 = arith.addf %528, %529 : vector<8x128xf32>
    %531 = tpu.concatenate %530, %530 in 1 : vector<8x128xf32>, vector<8x128xf32> -> vector<8x256xf32>
    %532 = arith.mulf %531, %5 : vector<8x256xf32>
    %c56 = arith.constant 56 : index
    %c0_100 = arith.constant 0 : index
    %533 = vector.load %arg9[%c56, %c0_100] : memref<64x256xf32, #tpu.memory_space<vmem>>, vector<8x256xf32>
    tpu.vector_store %arg9[%c56, %c0_100], %532 {strides = array<i32>} : memref<64x256xf32, #tpu.memory_space<vmem>>, vector<8x256xf32>,
    %c0_101 = arith.constant 0 : index
    %c0_102 = arith.constant 0 : index
    %534 = vector.load %arg9[%c0_101, %c0_102] : memref<64x256xf32, #tpu.memory_space<vmem>>, vector<64x256xf32>
    %cst_103 = arith.constant dense<0.000000e+00> : vector<64x1xf32>
    %535 = tpu.matmul %534, %6, %cst_103 {dimension_numbers = #tpu.dot_dimension_numbers<[1], [0], [0], [1], [0, 0, 1, 1], [], []>} : vector<64x256xf32>, vector<256x1xf32>, vector<64x1xf32> -> vector<64x1xf32>
    %c0_104 = arith.constant 0 : index
    %c0_105 = arith.constant 0 : index
    %536 = vector.load %arg1[%c0_104, %c0_105] : memref<64x640xf32, #tpu.memory_space<vmem>>, vector<64x640xf32>
    %cst_106 = arith.constant dense<0.000000e+00> : vector<64x1xf32>
    %537 = tpu.matmul %536, %7, %cst_106 {dimension_numbers = #tpu.dot_dimension_numbers<[1], [0], [0], [1], [0, 0, 1, 1], [], []>} : vector<64x640xf32>, vector<640x1xf32>, vector<64x1xf32> -> vector<64x1xf32>
    %538 = arith.addf %535, %537 : vector<64x1xf32>
    %c0_107 = arith.constant 0 : index
    %c0_108 = arith.constant 0 : index
    %539 = vector.load %arg8[%c0_107, %c0_108] : memref<64x1xf32, #tpu.memory_space<vmem>>, vector<64x1xf32>
    tpu.vector_store %arg8[%c0_107, %c0_108], %538 {strides = array<i32>} : memref<64x1xf32, #tpu.memory_space<vmem>>, vector<64x1xf32>,
    return
  }
}

</mosaic_0001>

<llo_original>
// kernel: tpu_custom_call.1
$region0: #{tpu_custom_call.1}
  #allocation0 [shape = 'u32[]', space=smem, size = 0x4, offset = 0x4, fixed_abs, tag = 'smem constant byte address 0x4 - core index']
  #allocation1 [shape = 'u32[144,128]{1,0:T(1,128)}', space=vmem, size = 0x12000, scoped, tag = 'internal scratch']
  #allocation2 [shape = 'f32[64,256]{1,0:T(8,128)}', space=vmem, size = 0x10000, scoped, tag = 'scratch operand']
  %s0 = inlined_call_operand.vmem [shape: f32[64,16], index: 0, kind: input, shape index: {}]
  %s1 = inlined_call_operand.hbm [shape: f32[64,640], index: 1, kind: input, shape index: {}]
  %s2 = inlined_call_operand.vmem [shape: f32[16,512], index: 2, kind: input, shape index: {}]
  %s3 = inlined_call_operand.vmem [shape: bf16[256,512], index: 3, kind: input, shape index: {}]
  %s4 = inlined_call_operand.vmem [shape: bf16[256,384], index: 4, kind: input, shape index: {}]
  %s5 = inlined_call_operand.hbm [shape: bf16[256,384], index: 5, kind: input, shape index: {}]
  %s6 = inlined_call_operand.hbm [shape: f32[8,1024], index: 6, kind: input, shape index: {}]
  %s7 = inlined_call_operand.vmem [shape: f32[896,1], index: 7, kind: input, shape index: {}]
  %s8 = inlined_call_operand.vmem [shape: f32[64,1], index: 8, kind: output, shape index: {}]
  %s9 = sld [smem:[#allocation0]]
  $region54: #{tpu_custom_call.1} parent=0
    _
  %s11 = ssub.s32 1, %s9
  %s12 = scalar_select 0, %s11, %s9
  $region1: #{tpu_custom_call.1} parent=0
    #allocation3 [shape = 'u8[163840]{0}', space=vmem, size = 0x28000, scoped, tag = 'input window, operand 1, single buffered']
    #allocation4 [shape = 's32[1]{0}', space=sflag, size = 0x4, scoped, tag = 'scoped memory for tpu_custom_call.1']
    #allocation5 [shape = 'u8[196608]{0}', space=vmem, size = 0x30000, scoped, tag = 'input window, operand 5, single buffered']
    #allocation6 [shape = 's32[1]{0}', space=sflag, size = 0x4, scoped, tag = 'scoped memory for tpu_custom_call.1']
    #allocation7 [shape = 'u8[32768]{0}', space=vmem, size = 0x8000, scoped, tag = 'input window, operand 6, single buffered']
    %13 = vsyncpa [#allocation4], 0
    %14 = vsyncpa [#allocation6], 0
    // Predicated region
    $region2: #{tpu_custom_call.1} parent=1 // pred_check
      _
    $region3: #{tpu_custom_call.1} parent=1 // pred_check_branch
      %16 = sbr.rel (0) target = $region5
    $region4: #{tpu_custom_call.1} parent=1 // pred_region
      _
    $region5: #{tpu_custom_call.1} parent=1 // pred_fallthru
      _
    // Predicated region
    $region6: #{tpu_custom_call.1} parent=1 // pred_check
      _
    $region7: #{tpu_custom_call.1} parent=1 // pred_check_branch
      %18 = sbr.rel (0) target = $region9
    $region8: #{tpu_custom_call.1} parent=1 // pred_region
      %s20 = ssub.s32 5120, 5120
      %21 = vsyncadd [#allocation4], %s20
      %s22 = sshll.u32 [#allocation3], 4
      %s23 = int_to_ptr.vmem [resolvable:$true] %s22
      %28 = dma.hbm_to_vmem [thread:$0]  %s1, 5120, %s23, [#allocation4], 640, 640, 40
    $region9: #{tpu_custom_call.1} parent=1 // pred_fallthru
      _
    // Predicated region
    $region10: #{tpu_custom_call.1} parent=1 // pred_check
      _
    $region11: #{tpu_custom_call.1} parent=1 // pred_check_branch
      %30 = sbr.rel (0) target = $region13
    $region12: #{tpu_custom_call.1} parent=1 // pred_region
      _
    $region13: #{tpu_custom_call.1} parent=1 // pred_fallthru
      _
    // Predicated region
    $region14: #{tpu_custom_call.1} parent=1 // pred_check
      _
    $region15: #{tpu_custom_call.1} parent=1 // pred_check_branch
      %32 = sbr.rel (0) target = $region17
    $region16: #{tpu_custom_call.1} parent=1 // pred_region
      _
    $region17: #{tpu_custom_call.1} parent=1 // pred_fallthru
      _
    // Predicated region
    $region18: #{tpu_custom_call.1} parent=1 // pred_check
      _
    $region19: #{tpu_custom_call.1} parent=1 // pred_check_branch
      %34 = sbr.rel (0) target = $region21
    $region20: #{tpu_custom_call.1} parent=1 // pred_region
      _
    $region21: #{tpu_custom_call.1} parent=1 // pred_fallthru
      _
    // Predicated region
    $region22: #{tpu_custom_call.1} parent=1 // pred_check
      _
    $region23: #{tpu_custom_call.1} parent=1 // pred_check_branch
      %36 = sbr.rel (0) target = $region25
    $region24: #{tpu_custom_call.1} parent=1 // pred_region
      %s38 = ssub.s32 6144, 6144
      %39 = vsyncadd [#allocation6], %s38
      %s40 = sshll.u32 [#allocation5], 4
      %s41 = int_to_ptr.vmem [resolvable:$true] %s40
      %46 = dma.hbm_to_vmem [thread:$0]  %s5, 6144, %s41, [#allocation6], 192, 192, 12
    $region25: #{tpu_custom_call.1} parent=1 // pred_fallthru
      _
    // Predicated region
    $region26: #{tpu_custom_call.1} parent=1 // pred_check
      _
    $region27: #{tpu_custom_call.1} parent=1 // pred_check_branch
      %48 = sbr.rel (0) target = $region29
    $region28: #{tpu_custom_call.1} parent=1 // pred_region
      %s50 = ssub.s32 1024, 1024
      %51 = vsyncadd [#allocation6], %s50
      %s53 = sshll.u32 [#allocation7], 4
      %s54 = int_to_ptr.vmem [resolvable:$true] %s53
      %56 = dma.hbm_to_vmem [thread:$0]  %s6, 1024, %s54, [#allocation6]
    $region29: #{tpu_custom_call.1} parent=1 // pred_fallthru
      _
    // Predicated region
    $region30: #{tpu_custom_call.1} parent=1 // pred_check
      _
    $region31: #{tpu_custom_call.1} parent=1 // pred_check_branch
      %58 = sbr.rel (0) target = $region33
    $region32: #{tpu_custom_call.1} parent=1 // pred_region
      _
    $region33: #{tpu_custom_call.1} parent=1 // pred_fallthru
      _
    // Predicated region
    $region34: #{tpu_custom_call.1} parent=1 // pred_check
      _
    $region35: #{tpu_custom_call.1} parent=1 // pred_check_branch
      %60 = sbr.rel (0) target = $region37
    $region36: #{tpu_custom_call.1} parent=1 // pred_region
      %61 = dma.done [#allocation4], 5120
    $region37: #{tpu_custom_call.1} parent=1 // pred_fallthru
      _
    // Predicated region
    $region38: #{tpu_custom_call.1} parent=1 // pred_check
      _
    $region39: #{tpu_custom_call.1} parent=1 // pred_check_branch
      %63 = sbr.rel (0) target = $region41
    $region40: #{tpu_custom_call.1} parent=1 // pred_region
      %64 = dma.done [#allocation6], 6144
    $region41: #{tpu_custom_call.1} parent=1 // pred_fallthru
      _
    // Predicated region
    $region42: #{tpu_custom_call.1} parent=1 // pred_check
      _
    $region43: #{tpu_custom_call.1} parent=1 // pred_check_branch
      %66 = sbr.rel (0) target = $region45
    $region44: #{tpu_custom_call.1} parent=1 // pred_region
      %67 = dma.done [#allocation6], 1024
    $region45: #{tpu_custom_call.1} parent=1 // pred_fallthru
      _
    %v69 = vld [vmem:[%s3] sm:$0xff]
    %v70 = vld [vmem:[%s3 + $0x8] sm:$0xff]
    %v71 = vld [vmem:[%s3 + $0x10] sm:$0xff]
    %v72 = vld [vmem:[%s3 + $0x18] sm:$0xff]
    %v73 = vld [vmem:[%s3 + $0x20] sm:$0xff]
    %v74 = vld [vmem:[%s3 + $0x28] sm:$0xff]
    %v75 = vld [vmem:[%s3 + $0x30] sm:$0xff]
    %v76 = vld [vmem:[%s3 + $0x38] sm:$0xff]
    %v77 = vld [vmem:[%s3 + $0x40] sm:$0xff]
    %v78 = vld [vmem:[%s3 + $0x48] sm:$0xff]
    %v79 = vld [vmem:[%s3 + $0x50] sm:$0xff]
    %v80 = vld [vmem:[%s3 + $0x58] sm:$0xff]
    %v81 = vld [vmem:[%s3 + $0x60] sm:$0xff]
    %v82 = vld [vmem:[%s3 + $0x68] sm:$0xff]
    %v83 = vld [vmem:[%s3 + $0x70] sm:$0xff]
    %v84 = vld [vmem:[%s3 + $0x78] sm:$0xff]
    %v85 = vld [vmem:[%s3 + $0x80] sm:$0xff]
    %v86 = vld [vmem:[%s3 + $0x88] sm:$0xff]
    %v87 = vld [vmem:[%s3 + $0x90] sm:$0xff]
    %v88 = vld [vmem:[%s3 + $0x98] sm:$0xff]
    %v89 = vld [vmem:[%s3 + $0xa0] sm:$0xff]
    %v90 = vld [vmem:[%s3 + $0xa8] sm:$0xff]
    %v91 = vld [vmem:[%s3 + $0xb0] sm:$0xff]
    %v92 = vld [vmem:[%s3 + $0xb8] sm:$0xff]
    %v93 = vld [vmem:[%s3 + $0xc0] sm:$0xff]
    %v94 = vld [vmem:[%s3 + $0xc8] sm:$0xff]
    %v95 = vld [vmem:[%s3 + $0xd0] sm:$0xff]
    %v96 = vld [vmem:[%s3 + $0xd8] sm:$0xff]
    %v97 = vld [vmem:[%s3 + $0xe0] sm:$0xff]
    %v98 = vld [vmem:[%s3 + $0xe8] sm:$0xff]
    %v99 = vld [vmem:[%s3 + $0xf0] sm:$0xff]
    %v100 = vld [vmem:[%s3 + $0xf8] sm:$0xff]
    %v101 = vld [vmem:[%s3 + $0x100] sm:$0xff]
    %v102 = vld [vmem:[%s3 + $0x108] sm:$0xff]
    %v103 = vld [vmem:[%s3 + $0x110] sm:$0xff]
    %v104 = vld [vmem:[%s3 + $0x118] sm:$0xff]
    %v105 = vld [vmem:[%s3 + $0x120] sm:$0xff]
    %v106 = vld [vmem:[%s3 + $0x128] sm:$0xff]
    %v107 = vld [vmem:[%s3 + $0x130] sm:$0xff]
    %v108 = vld [vmem:[%s3 + $0x138] sm:$0xff]
    %v109 = vld [vmem:[%s3 + $0x140] sm:$0xff]
    %v110 = vld [vmem:[%s3 + $0x148] sm:$0xff]
    %v111 = vld [vmem:[%s3 + $0x150] sm:$0xff]
    %v112 = vld [vmem:[%s3 + $0x158] sm:$0xff]
    %v113 = vld [vmem:[%s3 + $0x160] sm:$0xff]
    %v114 = vld [vmem:[%s3 + $0x168] sm:$0xff]
    %v115 = vld [vmem:[%s3 + $0x170] sm:$0xff]
    %v116 = vld [vmem:[%s3 + $0x178] sm:$0xff]
    %v117 = vld [vmem:[%s3 + $0x180] sm:$0xff]
    %v118 = vld [vmem:[%s3 + $0x188] sm:$0xff]
    %v119 = vld [vmem:[%s3 + $0x190] sm:$0xff]
    %v120 = vld [vmem:[%s3 + $0x198] sm:$0xff]
    %v121 = vld [vmem:[%s3 + $0x1a0] sm:$0xff]
    %v122 = vld [vmem:[%s3 + $0x1a8] sm:$0xff]
    %v123 = vld [vmem:[%s3 + $0x1b0] sm:$0xff]
    %v124 = vld [vmem:[%s3 + $0x1b8] sm:$0xff]
    %v125 = vld [vmem:[%s3 + $0x1c0] sm:$0xff]
    %v126 = vld [vmem:[%s3 + $0x1c8] sm:$0xff]
    %v127 = vld [vmem:[%s3 + $0x1d0] sm:$0xff]
    %v128 = vld [vmem:[%s3 + $0x1d8] sm:$0xff]
    %v129 = vld [vmem:[%s3 + $0x1e0] sm:$0xff]
    %v130 = vld [vmem:[%s3 + $0x1e8] sm:$0xff]
    %v131 = vld [vmem:[%s3 + $0x1f0] sm:$0xff]
    %v132 = vld [vmem:[%s3 + $0x1f8] sm:$0xff]
    %v133 = vld [vmem:[%s4] sm:$0xff]
    %v134 = vld [vmem:[%s4 + $0x8] sm:$0xf]
    %v135 = vld [vmem:[%s4 + $0xc] sm:$0xff]
    %v136 = vld [vmem:[%s4 + $0x14] sm:$0xf]
    %v137 = vld [vmem:[%s4 + $0x18] sm:$0xff]
    %v138 = vld [vmem:[%s4 + $0x20] sm:$0xf]
    %v139 = vld [vmem:[%s4 + $0x24] sm:$0xff]
    %v140 = vld [vmem:[%s4 + $0x2c] sm:$0xf]
    %v141 = vld [vmem:[%s4 + $0x30] sm:$0xff]
    %v142 = vld [vmem:[%s4 + $0x38] sm:$0xf]
    %v143 = vld [vmem:[%s4 + $0x3c] sm:$0xff]
    %v144 = vld [vmem:[%s4 + $0x44] sm:$0xf]
    %v145 = vld [vmem:[%s4 + $0x48] sm:$0xff]
    %v146 = vld [vmem:[%s4 + $0x50] sm:$0xf]
    %v147 = vld [vmem:[%s4 + $0x54] sm:$0xff]
    %v148 = vld [vmem:[%s4 + $0x5c] sm:$0xf]
    %v149 = vld [vmem:[%s4 + $0x60] sm:$0xff]
    %v150 = vld [vmem:[%s4 + $0x68] sm:$0xf]
    %v151 = vld [vmem:[%s4 + $0x6c] sm:$0xff]
    %v152 = vld [vmem:[%s4 + $0x74] sm:$0xf]
    %v153 = vld [vmem:[%s4 + $0x78] sm:$0xff]
    %v154 = vld [vmem:[%s4 + $0x80] sm:$0xf]
    %v155 = vld [vmem:[%s4 + $0x84] sm:$0xff]
    %v156 = vld [vmem:[%s4 + $0x8c] sm:$0xf]
    %v157 = vld [vmem:[%s4 + $0x90] sm:$0xff]
    %v158 = vld [vmem:[%s4 + $0x98] sm:$0xf]
    %v159 = vld [vmem:[%s4 + $0x9c] sm:$0xff]
    %v160 = vld [vmem:[%s4 + $0xa4] sm:$0xf]
    %v161 = vld [vmem:[%s4 + $0xa8] sm:$0xff]
    %v162 = vld [vmem:[%s4 + $0xb0] sm:$0xf]
    %v163 = vld [vmem:[%s4 + $0xb4] sm:$0xff]
    %v164 = vld [vmem:[%s4 + $0xbc] sm:$0xf]
    %v165 = vld [vmem:[%s4 + $0xc0] sm:$0xff]
    %v166 = vld [vmem:[%s4 + $0xc8] sm:$0xf]
    %v167 = vld [vmem:[%s4 + $0xcc] sm:$0xff]
    %v168 = vld [vmem:[%s4 + $0xd4] sm:$0xf]
    %v169 = vld [vmem:[%s4 + $0xd8] sm:$0xff]
    %v170 = vld [vmem:[%s4 + $0xe0] sm:$0xf]
    %v171 = vld [vmem:[%s4 + $0xe4] sm:$0xff]
    %v172 = vld [vmem:[%s4 + $0xec] sm:$0xf]
    %v173 = vld [vmem:[%s4 + $0xf0] sm:$0xff]
    %v174 = vld [vmem:[%s4 + $0xf8] sm:$0xf]
    %v175 = vld [vmem:[%s4 + $0xfc] sm:$0xff]
    %v176 = vld [vmem:[%s4 + $0x104] sm:$0xf]
    %v177 = vld [vmem:[%s4 + $0x108] sm:$0xff]
    %v178 = vld [vmem:[%s4 + $0x110] sm:$0xf]
    %v179 = vld [vmem:[%s4 + $0x114] sm:$0xff]
    %v180 = vld [vmem:[%s4 + $0x11c] sm:$0xf]
    %v181 = vld [vmem:[%s4 + $0x120] sm:$0xff]
    %v182 = vld [vmem:[%s4 + $0x128] sm:$0xf]
    %v183 = vld [vmem:[%s4 + $0x12c] sm:$0xff]
    %v184 = vld [vmem:[%s4 + $0x134] sm:$0xf]
    %v185 = vld [vmem:[%s4 + $0x138] sm:$0xff]
    %v186 = vld [vmem:[%s4 + $0x140] sm:$0xf]
    %v187 = vld [vmem:[%s4 + $0x144] sm:$0xff]
    %v188 = vld [vmem:[%s4 + $0x14c] sm:$0xf]
    %v189 = vld [vmem:[%s4 + $0x150] sm:$0xff]
    %v190 = vld [vmem:[%s4 + $0x158] sm:$0xf]
    %v191 = vld [vmem:[%s4 + $0x15c] sm:$0xff]
    %v192 = vld [vmem:[%s4 + $0x164] sm:$0xf]
    %v193 = vld [vmem:[%s4 + $0x168] sm:$0xff]
    %v194 = vld [vmem:[%s4 + $0x170] sm:$0xf]
    %v195 = vld [vmem:[%s4 + $0x174] sm:$0xff]
    %v196 = vld [vmem:[%s4 + $0x17c] sm:$0xf]
    %v197 = vld [vmem:[#allocation5] sm:$0xff]
    %v198 = vld [vmem:[#allocation5 + $0x8] sm:$0xf]
    %v199 = vld [vmem:[#allocation5 + $0xc] sm:$0xff]
    %v200 = vld [vmem:[#allocation5 + $0x14] sm:$0xf]
    %v201 = vld [vmem:[#allocation5 + $0x18] sm:$0xff]
    %v202 = vld [vmem:[#allocation5 + $0x20] sm:$0xf]
    %v203 = vld [vmem:[#allocation5 + $0x24] sm:$0xff]
    %v204 = vld [vmem:[#allocation5 + $0x2c] sm:$0xf]
    %v205 = vld [vmem:[#allocation5 + $0x30] sm:$0xff]
    %v206 = vld [vmem:[#allocation5 + $0x38] sm:$0xf]
    %v207 = vld [vmem:[#allocation5 + $0x3c] sm:$0xff]
    %v208 = vld [vmem:[#allocation5 + $0x44] sm:$0xf]
    %v209 = vld [vmem:[#allocation5 + $0x48] sm:$0xff]
    %v210 = vld [vmem:[#allocation5 + $0x50] sm:$0xf]
    %v211 = vld [vmem:[#allocation5 + $0x54] sm:$0xff]
    %v212 = vld [vmem:[#allocation5 + $0x5c] sm:$0xf]
    %v213 = vld [vmem:[#allocation5 + $0x60] sm:$0xff]
    %v214 = vld [vmem:[#allocation5 + $0x68] sm:$0xf]
    %v215 = vld [vmem:[#allocation5 + $0x6c] sm:$0xff]
    %v216 = vld [vmem:[#allocation5 + $0x74] sm:$0xf]
    %v217 = vld [vmem:[#allocation5 + $0x78] sm:$0xff]
    %v218 = vld [vmem:[#allocation5 + $0x80] sm:$0xf]
    %v219 = vld [vmem:[#allocation5 + $0x84] sm:$0xff]
    %v220 = vld [vmem:[#allocation5 + $0x8c] sm:$0xf]
    %v221 = vld [vmem:[#allocation5 + $0x90] sm:$0xff]
    %v222 = vld [vmem:[#allocation5 + $0x98] sm:$0xf]
    %v223 = vld [vmem:[#allocation5 + $0x9c] sm:$0xff]
    %v224 = vld [vmem:[#allocation5 + $0xa4] sm:$0xf]
    %v225 = vld [vmem:[#allocation5 + $0xa8] sm:$0xff]
    %v226 = vld [vmem:[#allocation5 + $0xb0] sm:$0xf]
    %v227 = vld [vmem:[#allocation5 + $0xb4] sm:$0xff]
    %v228 = vld [vmem:[#allocation5 + $0xbc] sm:$0xf]
    %v229 = vld [vmem:[#allocation5 + $0xc0] sm:$0xff]
    %v230 = vld [vmem:[#allocation5 + $0xc8] sm:$0xf]
    %v231 = vld [vmem:[#allocation5 + $0xcc] sm:$0xff]
    %v232 = vld [vmem:[#allocation5 + $0xd4] sm:$0xf]
    %v233 = vld [vmem:[#allocation5 + $0xd8] sm:$0xff]
    %v234 = vld [vmem:[#allocation5 + $0xe0] sm:$0xf]
    %v235 = vld [vmem:[#allocation5 + $0xe4] sm:$0xff]
    %v236 = vld [vmem:[#allocation5 + $0xec] sm:$0xf]
    %v237 = vld [vmem:[#allocation5 + $0xf0] sm:$0xff]
    %v238 = vld [vmem:[#allocation5 + $0xf8] sm:$0xf]
    %v239 = vld [vmem:[#allocation5 + $0xfc] sm:$0xff]
    %v240 = vld [vmem:[#allocation5 + $0x104] sm:$0xf]
    %v241 = vld [vmem:[#allocation5 + $0x108] sm:$0xff]
    %v242 = vld [vmem:[#allocation5 + $0x110] sm:$0xf]
    %v243 = vld [vmem:[#allocation5 + $0x114] sm:$0xff]
    %v244 = vld [vmem:[#allocation5 + $0x11c] sm:$0xf]
    %v245 = vld [vmem:[#allocation5 + $0x120] sm:$0xff]
    %v246 = vld [vmem:[#allocation5 + $0x128] sm:$0xf]
    %v247 = vld [vmem:[#allocation5 + $0x12c] sm:$0xff]
    %v248 = vld [vmem:[#allocation5 + $0x134] sm:$0xf]
    %v249 = vld [vmem:[#allocation5 + $0x138] sm:$0xff]
    %v250 = vld [vmem:[#allocation5 + $0x140] sm:$0xf]
    %v251 = vld [vmem:[#allocation5 + $0x144] sm:$0xff]
    %v252 = vld [vmem:[#allocation5 + $0x14c] sm:$0xf]
    %v253 = vld [vmem:[#allocation5 + $0x150] sm:$0xff]
    %v254 = vld [vmem:[#allocation5 + $0x158] sm:$0xf]
    %v255 = vld [vmem:[#allocation5 + $0x15c] sm:$0xff]
    %v256 = vld [vmem:[#allocation5 + $0x164] sm:$0xf]
    %v257 = vld [vmem:[#allocation5 + $0x168] sm:$0xff]
    %v258 = vld [vmem:[#allocation5 + $0x170] sm:$0xf]
    %v259 = vld [vmem:[#allocation5 + $0x174] sm:$0xff]
    %v260 = vld [vmem:[#allocation5 + $0x17c] sm:$0xf]
    %v261 = vld [vmem:[#allocation7] sm:$0xff]
    %v262 = vld [vmem:[#allocation7 + $0x8] sm:$0xff]
    %v263 = vld [vmem:[#allocation7 + $0x10] sm:$0xff]
    %v264 = vld [vmem:[#allocation7 + $0x18] sm:$0xff]
    %v265 = vld [vmem:[#allocation7 + $0x20] sm:$0xff]
    %v266 = vld [vmem:[#allocation7 + $0x28] sm:$0xff]
    %v267 = vld [vmem:[#allocation7 + $0x30] sm:$0xff]
    %v268 = vld [vmem:[#allocation7 + $0x38] sm:$0xff]
    %v269 = vld [vmem:[%s7] sm:$0xff]
    %v270 = vld [vmem:[%s7 + $0x8] sm:$0xff]
    %v271 = vld [vmem:[%s7 + $0x10] sm:$0xff]
    %v272 = vld [vmem:[%s7 + $0x18] sm:$0xff]
    %v273 = vld [vmem:[%s7 + $0x20] sm:$0xff]
    %v274 = vld [vmem:[%s7 + $0x28] sm:$0xff]
    %v275 = vld [vmem:[%s7 + $0x30] sm:$0xff]
    %v276 = vld [vmem:[%s7 + $0x38] sm:$0xff]
    %v277 = vld [vmem:[%s7 + $0x40] sm:$0xff]
    %v278 = vld [vmem:[%s7 + $0x48] sm:$0xff]
    %v279 = vld [vmem:[%s7 + $0x50] sm:$0xff]
    %v280 = vld [vmem:[%s7 + $0x58] sm:$0xff]
    %v281 = vld [vmem:[%s7 + $0x60] sm:$0xff]
    %v282 = vld [vmem:[%s7 + $0x68] sm:$0xff]
    %v283 = vld [vmem:[%s7 + $0x70] sm:$0xff]
    %v284 = vld [vmem:[%s7 + $0x78] sm:$0xff]
    %v285 = vld [vmem:[%s7 + $0x80] sm:$0xff]
    %v286 = vld [vmem:[%s7 + $0x88] sm:$0xff]
    %v287 = vld [vmem:[%s7 + $0x90] sm:$0xff]
    %v288 = vld [vmem:[%s7 + $0x98] sm:$0xff]
    %v289 = vld [vmem:[%s7 + $0xa0] sm:$0xff]
    %v290 = vld [vmem:[%s7 + $0xa8] sm:$0xff]
    %v291 = vld [vmem:[%s7 + $0xb0] sm:$0xff]
    %v292 = vld [vmem:[%s7 + $0xb8] sm:$0xff]
    %v293 = vld [vmem:[%s7 + $0xc0] sm:$0xff]
    %v294 = vld [vmem:[%s7 + $0xc8] sm:$0xff]
    %v295 = vld [vmem:[%s7 + $0xd0] sm:$0xff]
    %v296 = vld [vmem:[%s7 + $0xd8] sm:$0xff]
    %v297 = vld [vmem:[%s7 + $0xe0] sm:$0xff]
    %v298 = vld [vmem:[%s7 + $0xe8] sm:$0xff]
    %v299 = vld [vmem:[%s7 + $0xf0] sm:$0xff]
    %v300 = vld [vmem:[%s7 + $0xf8] sm:$0xff]
    %v301 = vld [vmem:[%s7 + $0x100] sm:$0xff]
    %v302 = vld [vmem:[%s7 + $0x108] sm:$0xff]
    %v303 = vld [vmem:[%s7 + $0x110] sm:$0xff]
    %v304 = vld [vmem:[%s7 + $0x118] sm:$0xff]
    %v305 = vld [vmem:[%s7 + $0x120] sm:$0xff]
    %v306 = vld [vmem:[%s7 + $0x128] sm:$0xff]
    %v307 = vld [vmem:[%s7 + $0x130] sm:$0xff]
    %v308 = vld [vmem:[%s7 + $0x138] sm:$0xff]
    %v309 = vld [vmem:[%s7 + $0x140] sm:$0xff]
    %v310 = vld [vmem:[%s7 + $0x148] sm:$0xff]
    %v311 = vld [vmem:[%s7 + $0x150] sm:$0xff]
    %v312 = vld [vmem:[%s7 + $0x158] sm:$0xff]
    %v313 = vld [vmem:[%s7 + $0x160] sm:$0xff]
    %v314 = vld [vmem:[%s7 + $0x168] sm:$0xff]
    %v315 = vld [vmem:[%s7 + $0x170] sm:$0xff]
    %v316 = vld [vmem:[%s7 + $0x178] sm:$0xff]
    %v317 = vld [vmem:[%s7 + $0x180] sm:$0xff]
    %v318 = vld [vmem:[%s7 + $0x188] sm:$0xff]
    %v319 = vld [vmem:[%s7 + $0x190] sm:$0xff]
    %v320 = vld [vmem:[%s7 + $0x198] sm:$0xff]
    %v321 = vld [vmem:[%s7 + $0x1a0] sm:$0xff]
    %v322 = vld [vmem:[%s7 + $0x1a8] sm:$0xff]
    %v323 = vld [vmem:[%s7 + $0x1b0] sm:$0xff]
    %v324 = vld [vmem:[%s7 + $0x1b8] sm:$0xff]
    %v325 = vld [vmem:[%s7 + $0x1c0] sm:$0xff]
    %v326 = vld [vmem:[%s7 + $0x1c8] sm:$0xff]
    %v327 = vld [vmem:[%s7 + $0x1d0] sm:$0xff]
    %v328 = vld [vmem:[%s7 + $0x1d8] sm:$0xff]
    %v329 = vld [vmem:[%s7 + $0x1e0] sm:$0xff]
    %v330 = vld [vmem:[%s7 + $0x1e8] sm:$0xff]
    %v331 = vld [vmem:[%s7 + $0x1f0] sm:$0xff]
    %v332 = vld [vmem:[%s7 + $0x1f8] sm:$0xff]
    %v333 = vld [vmem:[%s7 + $0x200] sm:$0xff]
    %v334 = vld [vmem:[%s7 + $0x208] sm:$0xff]
    %v335 = vld [vmem:[%s7 + $0x210] sm:$0xff]
    %v336 = vld [vmem:[%s7 + $0x218] sm:$0xff]
    %v337 = vld [vmem:[%s7 + $0x220] sm:$0xff]
    %v338 = vld [vmem:[%s7 + $0x228] sm:$0xff]
    %v339 = vld [vmem:[%s7 + $0x230] sm:$0xff]
    %v340 = vld [vmem:[%s7 + $0x238] sm:$0xff]
    %v341 = vld [vmem:[%s7 + $0x240] sm:$0xff]
    %v342 = vld [vmem:[%s7 + $0x248] sm:$0xff]
    %v343 = vld [vmem:[%s7 + $0x250] sm:$0xff]
    %v344 = vld [vmem:[%s7 + $0x258] sm:$0xff]
    %v345 = vld [vmem:[%s7 + $0x260] sm:$0xff]
    %v346 = vld [vmem:[%s7 + $0x268] sm:$0xff]
    %v347 = vld [vmem:[%s7 + $0x270] sm:$0xff]
    %v348 = vld [vmem:[%s7 + $0x278] sm:$0xff]
    %v349 = vld [vmem:[%s7 + $0x280] sm:$0xff]
    %v350 = vld [vmem:[%s7 + $0x288] sm:$0xff]
    %v351 = vld [vmem:[%s7 + $0x290] sm:$0xff]
    %v352 = vld [vmem:[%s7 + $0x298] sm:$0xff]
    %v353 = vld [vmem:[%s7 + $0x2a0] sm:$0xff]
    %v354 = vld [vmem:[%s7 + $0x2a8] sm:$0xff]
    %v355 = vld [vmem:[%s7 + $0x2b0] sm:$0xff]
    %v356 = vld [vmem:[%s7 + $0x2b8] sm:$0xff]
    %v357 = vld [vmem:[%s7 + $0x2c0] sm:$0xff]
    %v358 = vld [vmem:[%s7 + $0x2c8] sm:$0xff]
    %v359 = vld [vmem:[%s7 + $0x2d0] sm:$0xff]
    %v360 = vld [vmem:[%s7 + $0x2d8] sm:$0xff]
    %v361 = vld [vmem:[%s7 + $0x2e0] sm:$0xff]
    %v362 = vld [vmem:[%s7 + $0x2e8] sm:$0xff]
    %v363 = vld [vmem:[%s7 + $0x2f0] sm:$0xff]
    %v364 = vld [vmem:[%s7 + $0x2f8] sm:$0xff]
    %v365 = vld [vmem:[%s7 + $0x300] sm:$0xff]
    %v366 = vld [vmem:[%s7 + $0x308] sm:$0xff]
    %v367 = vld [vmem:[%s7 + $0x310] sm:$0xff]
    %v368 = vld [vmem:[%s7 + $0x318] sm:$0xff]
    %v369 = vld [vmem:[%s7 + $0x320] sm:$0xff]
    %v370 = vld [vmem:[%s7 + $0x328] sm:$0xff]
    %v371 = vld [vmem:[%s7 + $0x330] sm:$0xff]
    %v372 = vld [vmem:[%s7 + $0x338] sm:$0xff]
    %v373 = vld [vmem:[%s7 + $0x340] sm:$0xff]
    %v374 = vld [vmem:[%s7 + $0x348] sm:$0xff]
    %v375 = vld [vmem:[%s7 + $0x350] sm:$0xff]
    %v376 = vld [vmem:[%s7 + $0x358] sm:$0xff]
    %v377 = vld [vmem:[%s7 + $0x360] sm:$0xff]
    %v378 = vld [vmem:[%s7 + $0x368] sm:$0xff]
    %v379 = vld [vmem:[%s7 + $0x370] sm:$0xff]
    %v380 = vld [vmem:[%s7 + $0x378] sm:$0xff]
    %v381 = vld [vmem:[%s0] sm:$0xff]
    %v382 = vld [vmem:[%s0 + $0x8] sm:$0xff]
    %v383 = vld [vmem:[%s0 + $0x10] sm:$0xff]
    %v384 = vld [vmem:[%s0 + $0x18] sm:$0xff]
    %v385 = vld [vmem:[%s0 + $0x20] sm:$0xff]
    %v386 = vld [vmem:[%s0 + $0x28] sm:$0xff]
    %v387 = vld [vmem:[%s0 + $0x30] sm:$0xff]
    %v388 = vld [vmem:[%s0 + $0x38] sm:$0xff]
    %v389 = vld [vmem:[%s2] sm:$0xff]
    %v390 = vld [vmem:[%s2 + $0x8] sm:$0xff]
    %v391 = vld [vmem:[%s2 + $0x10] sm:$0xff]
    %v392 = vld [vmem:[%s2 + $0x18] sm:$0xff]
    %v393 = vld [vmem:[%s2 + $0x20] sm:$0xff]
    %v394 = vld [vmem:[%s2 + $0x28] sm:$0xff]
    %v395 = vld [vmem:[%s2 + $0x30] sm:$0xff]
    %v396 = vld [vmem:[%s2 + $0x38] sm:$0xff]
    %vm397 = vcmask 130048
    %v399 = vsel %vm397, %v381, 0
    %v402 = vsel %vm397, %v382, 0
    %v405 = vsel %vm397, %v383, 0
    %v408 = vsel %vm397, %v384, 0
    %v411 = vsel %vm397, %v385, 0
    %v414 = vsel %vm397, %v386, 0
    %v417 = vsel %vm397, %v387, 0
    %v420 = vsel %vm397, %v388, 0
    %422 = vmatprep.subr.mxu0 %v390
    %423 = vmatpush1.msra.mxu0 %v389
    %424 = vmatprep.subr.mxu0 %v394
    %425 = vmatpush1.msra.mxu0 %v393
    %426 = vmatprep.subr.mxu0 0.0
    %427 = vmatpush1.msra.mxu0 0.0
    %428 = vmatprep.subr.mxu0 0.0
    %429 = vmatpush1.msra.mxu0 0.0
    %430 = vmatprep.subr.mxu0 0.0
    %431 = vmatpush1.msra.mxu0 0.0
    %432 = vmatprep.subr.mxu0 0.0
    %433 = vmatpush1.msra.mxu0 0.0
    %434 = vmatprep.subr.mxu0 0.0
    %435 = vmatpush1.msra.mxu0 0.0
    %436 = vmatprep.subr.mxu0 0.0
    %437 = vmatpush1.msra.mxu0 0.0
    %438 = vmatprep.subr.mxu0 0.0
    %439 = vmatpush1.msra.mxu0 0.0
    %440 = vmatprep.subr.mxu0 0.0
    %441 = vmatpush1.msra.mxu0 0.0
    %442 = vmatprep.subr.mxu0 0.0
    %443 = vmatpush1.msra.mxu0 0.0
    %444 = vmatprep.subr.mxu0 0.0
    %445 = vmatpush1.msra.mxu0 0.0
    %446 = vmatprep.subr.mxu0 0.0
    %447 = vmatpush1.msra.mxu0 0.0
    %448 = vmatprep.subr.mxu0 0.0
    %449 = vmatpush1.msra.mxu0 0.0
    %450 = vmatprep.subr.mxu0 0.0
    %451 = vmatpush1.msra.mxu0 0.0
    %452 = vmatprep.subr.mxu0 0.0
    %453 = vmatpush1.msra.mxu0 0.0
    %454 = vmatprep.subr.mxu0 0.0
    %455 = vmatpush1.msra.mxu0 0.0
    %456 = vmatprep.subr.mxu0 0.0
    %457 = vmatpush1.msra.mxu0 0.0
    %458 = vmatprep.subr.mxu0 0.0
    %459 = vmatpush1.msra.mxu0 0.0
    %460 = vmatprep.subr.mxu0 0.0
    %461 = vmatpush1.msra.mxu0 0.0
    %462 = vmatprep.subr.mxu0 0.0
    %463 = vmatpush1.msra.mxu0 0.0
    %464 = vmatprep.subr.mxu0 0.0
    %465 = vmatpush1.msra.mxu0 0.0
    %466 = vmatprep.subr.mxu0 0.0
    %467 = vmatpush1.msra.mxu0 0.0
    %468 = vmatprep.subr.mxu0 0.0
    %469 = vmatpush1.msra.mxu0 0.0
    %470 = vmatprep.subr.mxu0 0.0
    %471 = vmatpush1.msra.mxu0 0.0
    %472 = vmatprep.subr.mxu0 0.0
    %473 = vmatpush1.msra.mxu0 0.0
    %474 = vmatprep.subr.mxu0 0.0
    %475 = vmatpush1.msra.mxu0 0.0
    %476 = vmatprep.subr.mxu0 0.0
    %477 = vmatpush1.msra.mxu0 0.0
    %478 = vmatprep.subr.mxu0 0.0
    %479 = vmatpush1.msra.mxu0 0.0
    %480 = vmatprep.subr.mxu0 0.0
    %481 = vmatpush1.msra.mxu0 0.0
    %482 = vmatprep.subr.mxu0 0.0
    %483 = vmatpush1.msra.mxu0 0.0
    %484 = vmatprep.subr.mxu0 0.0
    %485 = vmatpush1.msra.mxu0 0.0
    %486 = vmatprep.mubr.f32.mxu0 0.0
    %487 = vmatmul.mubr.f32.gmra.mrb[0].mxu0 %v399
    %v488 = vpop.f32.mrb[0].mxu0
    %v489 = vadd.f32 0.0, %v488
    %v490 = vpop.f32.mrb[0].mxu0
    %v491 = vadd.f32 0.0, %v490
    %492 = vmatprep.mubr.f32.mxu0 0.0
    %493 = vmatmul.mubr.f32.gmra.mrb[0].mxu0 %v402
    %v494 = vpop.f32.mrb[0].mxu0
    %v495 = vadd.f32 0.0, %v494
    %v496 = vpop.f32.mrb[0].mxu0
    %v497 = vadd.f32 0.0, %v496
    %498 = vmatprep.mubr.f32.mxu0 0.0
    %499 = vmatmul.mubr.f32.gmra.mrb[0].mxu0 %v405
    %v500 = vpop.f32.mrb[0].mxu0
    %v501 = vadd.f32 0.0, %v500
    %v502 = vpop.f32.mrb[0].mxu0
    %v503 = vadd.f32 0.0, %v502
    %504 = vmatprep.mubr.f32.mxu0 0.0
    %505 = vmatmul.mubr.f32.gmra.mrb[0].mxu0 %v408
    %v506 = vpop.f32.mrb[0].mxu0
    %v507 = vadd.f32 0.0, %v506
    %v508 = vpop.f32.mrb[0].mxu0
    %v509 = vadd.f32 0.0, %v508
    %510 = vmatprep.mubr.f32.mxu0 0.0
    %511 = vmatmul.mubr.f32.gmra.mrb[0].mxu0 %v411
    %v512 = vpop.f32.mrb[0].mxu0
    %v513 = vadd.f32 0.0, %v512
    %v514 = vpop.f32.mrb[0].mxu0
    %v515 = vadd.f32 0.0, %v514
    %516 = vmatprep.mubr.f32.mxu0 0.0
    %517 = vmatmul.mubr.f32.gmra.mrb[0].mxu0 %v414
    %v518 = vpop.f32.mrb[0].mxu0
    %v519 = vadd.f32 0.0, %v518
    %v520 = vpop.f32.mrb[0].mxu0
    %v521 = vadd.f32 0.0, %v520
    %522 = vmatprep.mubr.f32.mxu0 0.0
    %523 = vmatmul.mubr.f32.gmra.mrb[0].mxu0 %v417
    %v524 = vpop.f32.mrb[0].mxu0
    %v525 = vadd.f32 0.0, %v524
    %v526 = vpop.f32.mrb[0].mxu0
    %v527 = vadd.f32 0.0, %v526
    %528 = vmatprep.mubr.f32.mxu0 0.0
    %529 = vmatmul.mubr.f32.gmra.mrb[0].mxu0 %v420
    %v530 = vpop.f32.mrb[0].mxu0
    %v531 = vadd.f32 0.0, %v530
    %v532 = vpop.f32.mrb[0].mxu0
    %v533 = vadd.f32 0.0, %v532
    %534 = vdwg.mxu0
    %535 = vmatprep.subr.mxu0 %v392
    %536 = vmatpush1.msra.mxu0 %v391
    %537 = vmatprep.subr.mxu0 %v396
    %538 = vmatpush1.msra.mxu0 %v395
    %539 = vmatprep.subr.mxu0 0.0
    %540 = vmatpush1.msra.mxu0 0.0
    %541 = vmatprep.subr.mxu0 0.0
    %542 = vmatpush1.msra.mxu0 0.0
    %543 = vmatprep.subr.mxu0 0.0
    %544 = vmatpush1.msra.mxu0 0.0
    %545 = vmatprep.subr.mxu0 0.0
    %546 = vmatpush1.msra.mxu0 0.0
    %547 = vmatprep.subr.mxu0 0.0
    %548 = vmatpush1.msra.mxu0 0.0
    %549 = vmatprep.subr.mxu0 0.0
    %550 = vmatpush1.msra.mxu0 0.0
    %551 = vmatprep.subr.mxu0 0.0
    %552 = vmatpush1.msra.mxu0 0.0
    %553 = vmatprep.subr.mxu0 0.0
    %554 = vmatpush1.msra.mxu0 0.0
    %555 = vmatprep.subr.mxu0 0.0
    %556 = vmatpush1.msra.mxu0 0.0
    %557 = vmatprep.subr.mxu0 0.0
    %558 = vmatpush1.msra.mxu0 0.0
    %559 = vmatprep.subr.mxu0 0.0
    %560 = vmatpush1.msra.mxu0 0.0
    %561 = vmatprep.subr.mxu0 0.0
    %562 = vmatpush1.msra.mxu0 0.0
    %563 = vmatprep.subr.mxu0 0.0
    %564 = vmatpush1.msra.mxu0 0.0
    %565 = vmatprep.subr.mxu0 0.0
    %566 = vmatpush1.msra.mxu0 0.0
    %567 = vmatprep.subr.mxu0 0.0
    %568 = vmatpush1.msra.mxu0 0.0
    %569 = vmatprep.subr.mxu0 0.0
    %570 = vmatpush1.msra.mxu0 0.0
    %571 = vmatprep.subr.mxu0 0.0
    %572 = vmatpush1.msra.mxu0 0.0
    %573 = vmatprep.subr.mxu0 0.0
    %574 = vmatpush1.msra.mxu0 0.0
    %575 = vmatprep.subr.mxu0 0.0
    %576 = vmatpush1.msra.mxu0 0.0
    %577 = vmatprep.subr.mxu0 0.0
    %578 = vmatpush1.msra.mxu0 0.0
    %579 = vmatprep.subr.mxu0 0.0
    %580 = vmatpush1.msra.mxu0 0.0
    %581 = vmatprep.subr.mxu0 0.0
    %582 = vmatpush1.msra.mxu0 0.0
    %583 = vmatprep.subr.mxu0 0.0
    %584 = vmatpush1.msra.mxu0 0.0
    %585 = vmatprep.subr.mxu0 0.0
    %586 = vmatpush1.msra.mxu0 0.0
    %587 = vmatprep.subr.mxu0 0.0
    %588 = vmatpush1.msra.mxu0 0.0
    %589 = vmatprep.subr.mxu0 0.0
    %590 = vmatpush1.msra.mxu0 0.0
    %591 = vmatprep.subr.mxu0 0.0
    %592 = vmatpush1.msra.mxu0 0.0
    %593 = vmatprep.subr.mxu0 0.0
    %594 = vmatpush1.msra.mxu0 0.0
    %595 = vmatprep.subr.mxu0 0.0
    %596 = vmatpush1.msra.mxu0 0.0
    %597 = vmatprep.subr.mxu0 0.0
    %598 = vmatpush1.msra.mxu0 0.0
    %599 = vmatprep.mubr.f32.mxu0 0.0
    %600 = vmatmul.mubr.f32.gmra.mrb[0].mxu0 %v399
    %v601 = vpop.f32.mrb[0].mxu0
    %v602 = vadd.f32 0.0, %v601
    %v603 = vpop.f32.mrb[0].mxu0
    %v604 = vadd.f32 0.0, %v603
    %605 = vmatprep.mubr.f32.mxu0 0.0
    %606 = vmatmul.mubr.f32.gmra.mrb[0].mxu0 %v402
    %v607 = vpop.f32.mrb[0].mxu0
    %v608 = vadd.f32 0.0, %v607
    %v609 = vpop.f32.mrb[0].mxu0
    %v610 = vadd.f32 0.0, %v609
    %611 = vmatprep.mubr.f32.mxu0 0.0
    %612 = vmatmul.mubr.f32.gmra.mrb[0].mxu0 %v405
    %v613 = vpop.f32.mrb[0].mxu0
    %v614 = vadd.f32 0.0, %v613
    %v615 = vpop.f32.mrb[0].mxu0
    %v616 = vadd.f32 0.0, %v615
    %617 = vmatprep.mubr.f32.mxu0 0.0
    %618 = vmatmul.mubr.f32.gmra.mrb[0].mxu0 %v408
    %v619 = vpop.f32.mrb[0].mxu0
    %v620 = vadd.f32 0.0, %v619
    %v621 = vpop.f32.mrb[0].mxu0
    %v622 = vadd.f32 0.0, %v621
    %623 = vmatprep.mubr.f32.mxu0 0.0
    %624 = vmatmul.mubr.f32.gmra.mrb[0].mxu0 %v411
    %v625 = vpop.f32.mrb[0].mxu0
    %v626 = vadd.f32 0.0, %v625
    %v627 = vpop.f32.mrb[0].mxu0
    %v628 = vadd.f32 0.0, %v627
    %629 = vmatprep.mubr.f32.mxu0 0.0
    %630 = vmatmul.mubr.f32.gmra.mrb[0].mxu0 %v414
    %v631 = vpop.f32.mrb[0].mxu0
    %v632 = vadd.f32 0.0, %v631
    %v633 = vpop.f32.mrb[0].mxu0
    %v634 = vadd.f32 0.0, %v633
    %635 = vmatprep.mubr.f32.mxu0 0.0
    %636 = vmatmul.mubr.f32.gmra.mrb[0].mxu0 %v417
    %v637 = vpop.f32.mrb[0].mxu0
    %v638 = vadd.f32 0.0, %v637
    %v639 = vpop.f32.mrb[0].mxu0
    %v640 = vadd.f32 0.0, %v639
    %641 = vmatprep.mubr.f32.mxu0 0.0
    %642 = vmatmul.mubr.f32.gmra.mrb[0].mxu0 %v420
    %v643 = vpop.f32.mrb[0].mxu0
    %v644 = vadd.f32 0.0, %v643
    %v645 = vpop.f32.mrb[0].mxu0
    %v646 = vadd.f32 0.0, %v645
    %647 = vdwg.mxu0
    %v712 = vunpack.c.l.b16 %v69
    %v713 = vunpack.c.h.b16 %v69
    %v714 = vunpack.c.l.b16 %v70
    %v715 = vunpack.c.h.b16 %v70
    %v716 = vunpack.c.l.b16 %v71
    %v717 = vunpack.c.h.b16 %v71
    %v718 = vunpack.c.l.b16 %v72
    %v719 = vunpack.c.h.b16 %v72
    %v720 = vunpack.c.l.b16 %v73
    %v721 = vunpack.c.h.b16 %v73
    %v722 = vunpack.c.l.b16 %v74
    %v723 = vunpack.c.h.b16 %v74
    %v724 = vunpack.c.l.b16 %v75
    %v725 = vunpack.c.h.b16 %v75
    %v726 = vunpack.c.l.b16 %v76
    %v727 = vunpack.c.h.b16 %v76
    %v728 = vunpack.c.l.b16 %v77
    %v729 = vunpack.c.h.b16 %v77
    %v730 = vunpack.c.l.b16 %v78
    %v731 = vunpack.c.h.b16 %v78
    %v732 = vunpack.c.l.b16 %v79
    %v733 = vunpack.c.h.b16 %v79
    %v734 = vunpack.c.l.b16 %v80
    %v735 = vunpack.c.h.b16 %v80
    %v736 = vunpack.c.l.b16 %v81
    %v737 = vunpack.c.h.b16 %v81
    %v738 = vunpack.c.l.b16 %v82
    %v739 = vunpack.c.h.b16 %v82
    %v740 = vunpack.c.l.b16 %v83
    %v741 = vunpack.c.h.b16 %v83
    %v742 = vunpack.c.l.b16 %v84
    %v743 = vunpack.c.h.b16 %v84
    %v744 = vunpack.c.l.b16 %v85
    %v745 = vunpack.c.h.b16 %v85
    %v746 = vunpack.c.l.b16 %v86
    %v747 = vunpack.c.h.b16 %v86
    %v748 = vunpack.c.l.b16 %v87
    %v749 = vunpack.c.h.b16 %v87
    %v750 = vunpack.c.l.b16 %v88
    %v751 = vunpack.c.h.b16 %v88
    %v752 = vunpack.c.l.b16 %v89
    %v753 = vunpack.c.h.b16 %v89
    %v754 = vunpack.c.l.b16 %v90
    %v755 = vunpack.c.h.b16 %v90
    %v756 = vunpack.c.l.b16 %v91
    %v757 = vunpack.c.h.b16 %v91
    %v758 = vunpack.c.l.b16 %v92
    %v759 = vunpack.c.h.b16 %v92
    %v760 = vunpack.c.l.b16 %v93
    %v761 = vunpack.c.h.b16 %v93
    %v762 = vunpack.c.l.b16 %v94
    %v763 = vunpack.c.h.b16 %v94
    %v764 = vunpack.c.l.b16 %v95
    %v765 = vunpack.c.h.b16 %v95
    %v766 = vunpack.c.l.b16 %v96
    %v767 = vunpack.c.h.b16 %v96
    %v768 = vunpack.c.l.b16 %v97
    %v769 = vunpack.c.h.b16 %v97
    %v770 = vunpack.c.l.b16 %v98
    %v771 = vunpack.c.h.b16 %v98
    %v772 = vunpack.c.l.b16 %v99
    %v773 = vunpack.c.h.b16 %v99
    %v774 = vunpack.c.l.b16 %v100
    %v775 = vunpack.c.h.b16 %v100
    %v776 = vunpack.c.l.b16 %v101
    %v777 = vunpack.c.h.b16 %v101
    %v778 = vunpack.c.l.b16 %v102
    %v779 = vunpack.c.h.b16 %v102
    %v780 = vunpack.c.l.b16 %v103
    %v781 = vunpack.c.h.b16 %v103
    %v782 = vunpack.c.l.b16 %v104
    %v783 = vunpack.c.h.b16 %v104
    %v784 = vunpack.c.l.b16 %v105
    %v785 = vunpack.c.h.b16 %v105
    %v786 = vunpack.c.l.b16 %v106
    %v787 = vunpack.c.h.b16 %v106
    %v788 = vunpack.c.l.b16 %v107
    %v789 = vunpack.c.h.b16 %v107
    %v790 = vunpack.c.l.b16 %v108
    %v791 = vunpack.c.h.b16 %v108
    %v792 = vunpack.c.l.b16 %v109
    %v793 = vunpack.c.h.b16 %v109
    %v794 = vunpack.c.l.b16 %v110
    %v795 = vunpack.c.h.b16 %v110
    %v796 = vunpack.c.l.b16 %v111
    %v797 = vunpack.c.h.b16 %v111
    %v798 = vunpack.c.l.b16 %v112
    %v799 = vunpack.c.h.b16 %v112
    %v800 = vunpack.c.l.b16 %v113
    %v801 = vunpack.c.h.b16 %v113
    %v802 = vunpack.c.l.b16 %v114
    %v803 = vunpack.c.h.b16 %v114
    %v804 = vunpack.c.l.b16 %v115
    %v805 = vunpack.c.h.b16 %v115
    %v806 = vunpack.c.l.b16 %v116
    %v807 = vunpack.c.h.b16 %v116
    %v808 = vunpack.c.l.b16 %v117
    %v809 = vunpack.c.h.b16 %v117
    %v810 = vunpack.c.l.b16 %v118
    %v811 = vunpack.c.h.b16 %v118
    %v812 = vunpack.c.l.b16 %v119
    %v813 = vunpack.c.h.b16 %v119
    %v814 = vunpack.c.l.b16 %v120
    %v815 = vunpack.c.h.b16 %v120
    %v816 = vunpack.c.l.b16 %v121
    %v817 = vunpack.c.h.b16 %v121
    %v818 = vunpack.c.l.b16 %v122
    %v819 = vunpack.c.h.b16 %v122
    %v820 = vunpack.c.l.b16 %v123
    %v821 = vunpack.c.h.b16 %v123
    %v822 = vunpack.c.l.b16 %v124
    %v823 = vunpack.c.h.b16 %v124
    %v824 = vunpack.c.l.b16 %v125
    %v825 = vunpack.c.h.b16 %v125
    %v826 = vunpack.c.l.b16 %v126
    %v827 = vunpack.c.h.b16 %v126
    %v828 = vunpack.c.l.b16 %v127
    %v829 = vunpack.c.h.b16 %v127
    %v830 = vunpack.c.l.b16 %v128
    %v831 = vunpack.c.h.b16 %v128
    %v832 = vunpack.c.l.b16 %v129
    %v833 = vunpack.c.h.b16 %v129
    %v834 = vunpack.c.l.b16 %v130
    %v835 = vunpack.c.h.b16 %v130
    %v836 = vunpack.c.l.b16 %v131
    %v837 = vunpack.c.h.b16 %v131
    %v838 = vunpack.c.l.b16 %v132
    %v839 = vunpack.c.h.b16 %v132
    %v840 = vpack.c.b16 %v716, %v712
    %v841 = vpack.c.b16 %v717, %v713
    %v842 = vpack.c.b16 %v718, %v714
    %v843 = vpack.c.b16 %v719, %v715
    %v844 = vpack.c.b16 %v724, %v720
    %v845 = vpack.c.b16 %v725, %v721
    %v846 = vpack.c.b16 %v726, %v722
    %v847 = vpack.c.b16 %v727, %v723
    %v848 = vpack.c.b16 %v732, %v728
    %v849 = vpack.c.b16 %v733, %v729
    %v850 = vpack.c.b16 %v734, %v730
    %v851 = vpack.c.b16 %v735, %v731
    %v852 = vpack.c.b16 %v740, %v736
    %v853 = vpack.c.b16 %v741, %v737
    %v854 = vpack.c.b16 %v742, %v738
    %v855 = vpack.c.b16 %v743, %v739
    %v856 = vpack.c.b16 %v748, %v744
    %v857 = vpack.c.b16 %v749, %v745
    %v858 = vpack.c.b16 %v750, %v746
    %v859 = vpack.c.b16 %v751, %v747
    %v860 = vpack.c.b16 %v756, %v752
    %v861 = vpack.c.b16 %v757, %v753
    %v862 = vpack.c.b16 %v758, %v754
    %v863 = vpack.c.b16 %v759, %v755
    %v864 = vpack.c.b16 %v764, %v760
    %v865 = vpack.c.b16 %v765, %v761
    %v866 = vpack.c.b16 %v766, %v762
    %v867 = vpack.c.b16 %v767, %v763
    %v868 = vpack.c.b16 %v772, %v768
    %v869 = vpack.c.b16 %v773, %v769
    %v870 = vpack.c.b16 %v774, %v770
    %v871 = vpack.c.b16 %v775, %v771
    %v872 = vpack.c.b16 %v780, %v776
    %v873 = vpack.c.b16 %v781, %v777
    %v874 = vpack.c.b16 %v782, %v778
    %v875 = vpack.c.b16 %v783, %v779
    %v876 = vpack.c.b16 %v788, %v784
    %v877 = vpack.c.b16 %v789, %v785
    %v878 = vpack.c.b16 %v790, %v786
    %v879 = vpack.c.b16 %v791, %v787
    %v880 = vpack.c.b16 %v796, %v792
    %v881 = vpack.c.b16 %v797, %v793
    %v882 = vpack.c.b16 %v798, %v794
    %v883 = vpack.c.b16 %v799, %v795
    %v884 = vpack.c.b16 %v804, %v800
    %v885 = vpack.c.b16 %v805, %v801
    %v886 = vpack.c.b16 %v806, %v802
    %v887 = vpack.c.b16 %v807, %v803
    %v888 = vpack.c.b16 %v812, %v808
    %v889 = vpack.c.b16 %v813, %v809
    %v890 = vpack.c.b16 %v814, %v810
    %v891 = vpack.c.b16 %v815, %v811
    %v892 = vpack.c.b16 %v820, %v816
    %v893 = vpack.c.b16 %v821, %v817
    %v894 = vpack.c.b16 %v822, %v818
    %v895 = vpack.c.b16 %v823, %v819
    %v896 = vpack.c.b16 %v828, %v824
    %v897 = vpack.c.b16 %v829, %v825
    %v898 = vpack.c.b16 %v830, %v826
    %v899 = vpack.c.b16 %v831, %v827
    %v900 = vpack.c.b16 %v836, %v832
    %v901 = vpack.c.b16 %v837, %v833
    %v902 = vpack.c.b16 %v838, %v834
    %v903 = vpack.c.b16 %v839, %v835
    %968 = vmatprep.subr.bf16.mxu0 %v841
    %969 = vmatpush1.bf16.msra.mxu0 %v840
    %970 = vmatprep.subr.bf16.mxu0 %v845
    %971 = vmatpush1.bf16.msra.mxu0 %v844
    %972 = vmatprep.subr.bf16.mxu0 %v849
    %973 = vmatpush1.bf16.msra.mxu0 %v848
    %974 = vmatprep.subr.bf16.mxu0 %v853
    %975 = vmatpush1.bf16.msra.mxu0 %v852
    %976 = vmatprep.subr.bf16.mxu0 %v857
    %977 = vmatpush1.bf16.msra.mxu0 %v856
    %978 = vmatprep.subr.bf16.mxu0 %v861
    %979 = vmatpush1.bf16.msra.mxu0 %v860
    %980 = vmatprep.subr.bf16.mxu0 %v865
    %981 = vmatpush1.bf16.msra.mxu0 %v864
    %982 = vmatprep.subr.bf16.mxu0 %v869
    %983 = vmatpush1.bf16.msra.mxu0 %v868
    %984 = vmatprep.subr.bf16.mxu0 %v873
    %985 = vmatpush1.bf16.msra.mxu0 %v872
    %986 = vmatprep.subr.bf16.mxu0 %v877
    %987 = vmatpush1.bf16.msra.mxu0 %v876
    %988 = vmatprep.subr.bf16.mxu0 %v881
    %989 = vmatpush1.bf16.msra.mxu0 %v880
    %990 = vmatprep.subr.bf16.mxu0 %v885
    %991 = vmatpush1.bf16.msra.mxu0 %v884
    %992 = vmatprep.subr.bf16.mxu0 %v889
    %993 = vmatpush1.bf16.msra.mxu0 %v888
    %994 = vmatprep.subr.bf16.mxu0 %v893
    %995 = vmatpush1.bf16.msra.mxu0 %v892
    %996 = vmatprep.subr.bf16.mxu0 %v897
    %997 = vmatpush1.bf16.msra.mxu0 %v896
    %998 = vmatprep.subr.bf16.mxu0 %v901
    %999 = vmatpush1.bf16.msra.mxu0 %v900
    %1000 = vmatprep.mubr.bf16.mxu0 0
    %1001 = vmatmul.mubr.bf16.gmra.mrb[0].mxu0 0
    %v1002 = vpop.f32.mrb[0].mxu0
    %v1003 = vadd.f32 0.0, %v1002
    %v1004 = vpop.f32.mrb[0].mxu0
    %v1005 = vadd.f32 0.0, %v1004
    %v1006 = vpop.f32.mrb[0].mxu0
    %v1007 = vpop.f32.mrb[0].mxu0
    %1008 = vdwg.mxu0
    %1009 = vmatprep.subr.bf16.mxu0 %v843
    %1010 = vmatpush1.bf16.msra.mxu0 %v842
    %1011 = vmatprep.subr.bf16.mxu0 %v847
    %1012 = vmatpush1.bf16.msra.mxu0 %v846
    %1013 = vmatprep.subr.bf16.mxu0 %v851
    %1014 = vmatpush1.bf16.msra.mxu0 %v850
    %1015 = vmatprep.subr.bf16.mxu0 %v855
    %1016 = vmatpush1.bf16.msra.mxu0 %v854
    %1017 = vmatprep.subr.bf16.mxu0 %v859
    %1018 = vmatpush1.bf16.msra.mxu0 %v858
    %1019 = vmatprep.subr.bf16.mxu0 %v863
    %1020 = vmatpush1.bf16.msra.mxu0 %v862
    %1021 = vmatprep.subr.bf16.mxu0 %v867
    %1022 = vmatpush1.bf16.msra.mxu0 %v866
    %1023 = vmatprep.subr.bf16.mxu0 %v871
    %1024 = vmatpush1.bf16.msra.mxu0 %v870
    %1025 = vmatprep.subr.bf16.mxu0 %v875
    %1026 = vmatpush1.bf16.msra.mxu0 %v874
    %1027 = vmatprep.subr.bf16.mxu0 %v879
    %1028 = vmatpush1.bf16.msra.mxu0 %v878
    %1029 = vmatprep.subr.bf16.mxu0 %v883
    %1030 = vmatpush1.bf16.msra.mxu0 %v882
    %1031 = vmatprep.subr.bf16.mxu0 %v887
    %1032 = vmatpush1.bf16.msra.mxu0 %v886
    %1033 = vmatprep.subr.bf16.mxu0 %v891
    %1034 = vmatpush1.bf16.msra.mxu0 %v890
    %1035 = vmatprep.subr.bf16.mxu0 %v895
    %1036 = vmatpush1.bf16.msra.mxu0 %v894
    %1037 = vmatprep.subr.bf16.mxu0 %v899
    %1038 = vmatpush1.bf16.msra.mxu0 %v898
    %1039 = vmatprep.subr.bf16.mxu0 %v903
    %1040 = vmatpush1.bf16.msra.mxu0 %v902
    %1041 = vmatprep.mubr.bf16.mxu0 0
    %1042 = vmatmul.mubr.bf16.gmra.mrb[0].mxu0 0
    %v1043 = vpop.f32.mrb[0].mxu0
    %v1044 = vadd.f32 0.0, %v1043
    %v1045 = vpop.f32.mrb[0].mxu0
    %v1046 = vadd.f32 0.0, %v1045
    %v1047 = vpop.f32.mrb[0].mxu0
    %v1048 = vpop.f32.mrb[0].mxu0
    %1049 = vdwg.mxu0
    %v1050 = vadd.f32 %v489, %v1003
    %v1051 = vadd.f32 %v491, %v1005
    %v1052 = vadd.f32 %v602, %v1044
    %v1053 = vadd.f32 %v604, %v1046
    %v1054 = vxor.u32 %v1050, 2147483648
    %v1055 = vmul.f32 %v1054, 1.442695
    %v1056 = vpow.pop %v1055
    %v1057 = vadd.f32 %v1056, 1.0
    %v1058 = vrcp.pop %v1057
    %v1059 = vmul.f32 1.0, %v1058
    %v1060 = vxor.u32 %v1051, 2147483648
    %v1061 = vmul.f32 %v1060, 1.442695
    %v1062 = vpow.pop %v1061
    %v1063 = vadd.f32 %v1062, 1.0
    %v1064 = vrcp.pop %v1063
    %v1065 = vmul.f32 1.0, %v1064
    %v1066 = vtanh.pop %v1052
    %v1067 = vxor.u32 %v1053, 2147483648
    %v1068 = vmul.f32 %v1067, 1.442695
    %v1069 = vpow.pop %v1068
    %v1070 = vadd.f32 %v1069, 1.0
    %v1071 = vrcp.pop %v1070
    %v1072 = vmul.f32 1.0, %v1071
    %v1073 = vmul.f32 %v1065, 0.0
    %v1074 = vmul.f32 %v1059, %v1066
    %v1075 = vadd.f32 %v1073, %v1074
    %v1076 = vtanh.pop %v1075
    %v1077 = vmul.f32 %v1072, %v1076
    %v1078 = vmul.f32 %v1077, %v267
    %v1079 = vmul.f32 %v1077, %v268
    %v1080 = vpack.c.bf16 %v1078, %v1078
    %v1081 = vpack.c.bf16 %v1079, %v1079
    %v1146 = vunpack.c.l.b16 %v133
    %v1147 = vunpack.c.h.b16 %v133
    %v1148 = vunpack.c.l.b16 %v134
    %v1149 = vunpack.c.l.b16 %v135
    %v1150 = vunpack.c.h.b16 %v135
    %v1151 = vunpack.c.l.b16 %v136
    %v1152 = vunpack.c.l.b16 %v137
    %v1153 = vunpack.c.h.b16 %v137
    %v1154 = vunpack.c.l.b16 %v138
    %v1155 = vunpack.c.l.b16 %v139
    %v1156 = vunpack.c.h.b16 %v139
    %v1157 = vunpack.c.l.b16 %v140
    %v1158 = vunpack.c.l.b16 %v141
    %v1159 = vunpack.c.h.b16 %v141
    %v1160 = vunpack.c.l.b16 %v142
    %v1161 = vunpack.c.l.b16 %v143
    %v1162 = vunpack.c.h.b16 %v143
    %v1163 = vunpack.c.l.b16 %v144
    %v1164 = vunpack.c.l.b16 %v145
    %v1165 = vunpack.c.h.b16 %v145
    %v1166 = vunpack.c.l.b16 %v146
    %v1167 = vunpack.c.l.b16 %v147
    %v1168 = vunpack.c.h.b16 %v147
    %v1169 = vunpack.c.l.b16 %v148
    %v1170 = vunpack.c.l.b16 %v149
    %v1171 = vunpack.c.h.b16 %v149
    %v1172 = vunpack.c.l.b16 %v150
    %v1173 = vunpack.c.l.b16 %v151
    %v1174 = vunpack.c.h.b16 %v151
    %v1175 = vunpack.c.l.b16 %v152
    %v1176 = vunpack.c.l.b16 %v153
    %v1177 = vunpack.c.h.b16 %v153
    %v1178 = vunpack.c.l.b16 %v154
    %v1179 = vunpack.c.l.b16 %v155
    %v1180 = vunpack.c.h.b16 %v155
    %v1181 = vunpack.c.l.b16 %v156
    %v1182 = vunpack.c.l.b16 %v157
    %v1183 = vunpack.c.h.b16 %v157
    %v1184 = vunpack.c.l.b16 %v158
    %v1185 = vunpack.c.l.b16 %v159
    %v1186 = vunpack.c.h.b16 %v159
    %v1187 = vunpack.c.l.b16 %v160
    %v1188 = vunpack.c.l.b16 %v161
    %v1189 = vunpack.c.h.b16 %v161
    %v1190 = vunpack.c.l.b16 %v162
    %v1191 = vunpack.c.l.b16 %v163
    %v1192 = vunpack.c.h.b16 %v163
    %v1193 = vunpack.c.l.b16 %v164
    %v1194 = vunpack.c.l.b16 %v165
    %v1195 = vunpack.c.h.b16 %v165
    %v1196 = vunpack.c.l.b16 %v166
    %v1197 = vunpack.c.l.b16 %v167
    %v1198 = vunpack.c.h.b16 %v167
    %v1199 = vunpack.c.l.b16 %v168
    %v1200 = vunpack.c.l.b16 %v169
    %v1201 = vunpack.c.h.b16 %v169
    %v1202 = vunpack.c.l.b16 %v170
    %v1203 = vunpack.c.l.b16 %v171
    %v1204 = vunpack.c.h.b16 %v171
    %v1205 = vunpack.c.l.b16 %v172
    %v1206 = vunpack.c.l.b16 %v173
    %v1207 = vunpack.c.h.b16 %v173
    %v1208 = vunpack.c.l.b16 %v174
    %v1209 = vunpack.c.l.b16 %v175
    %v1210 = vunpack.c.h.b16 %v175
    %v1211 = vunpack.c.l.b16 %v176
    %v1212 = vunpack.c.l.b16 %v177
    %v1213 = vunpack.c.h.b16 %v177
    %v1214 = vunpack.c.l.b16 %v178
    %v1215 = vunpack.c.l.b16 %v179
    %v1216 = vunpack.c.h.b16 %v179
    %v1217 = vunpack.c.l.b16 %v180
    %v1218 = vunpack.c.l.b16 %v181
    %v1219 = vunpack.c.h.b16 %v181
    %v1220 = vunpack.c.l.b16 %v182
    %v1221 = vunpack.c.l.b16 %v183
    %v1222 = vunpack.c.h.b16 %v183
    %v1223 = vunpack.c.l.b16 %v184
    %v1224 = vunpack.c.l.b16 %v185
    %v1225 = vunpack.c.h.b16 %v185
    %v1226 = vunpack.c.l.b16 %v186
    %v1227 = vunpack.c.l.b16 %v187
    %v1228 = vunpack.c.h.b16 %v187
    %v1229 = vunpack.c.l.b16 %v188
    %v1230 = vunpack.c.l.b16 %v189
    %v1231 = vunpack.c.h.b16 %v189
    %v1232 = vunpack.c.l.b16 %v190
    %v1233 = vunpack.c.l.b16 %v191
    %v1234 = vunpack.c.h.b16 %v191
    %v1235 = vunpack.c.l.b16 %v192
    %v1236 = vunpack.c.l.b16 %v193
    %v1237 = vunpack.c.h.b16 %v193
    %v1238 = vunpack.c.l.b16 %v194
    %v1239 = vunpack.c.l.b16 %v195
    %v1240 = vunpack.c.h.b16 %v195
    %v1241 = vunpack.c.l.b16 %v196
    %v1242 = vpack.c.b16 %v1149, %v1146
    %v1243 = vpack.c.b16 %v1150, %v1147
    %v1244 = vpack.c.b16 %v1151, %v1148
    %v1245 = vpack.c.b16 %v1155, %v1152
    %v1246 = vpack.c.b16 %v1156, %v1153
    %v1247 = vpack.c.b16 %v1157, %v1154
    %v1248 = vpack.c.b16 %v1161, %v1158
    %v1249 = vpack.c.b16 %v1162, %v1159
    %v1250 = vpack.c.b16 %v1163, %v1160
    %v1251 = vpack.c.b16 %v1167, %v1164
    %v1252 = vpack.c.b16 %v1168, %v1165
    %v1253 = vpack.c.b16 %v1169, %v1166
    %v1254 = vpack.c.b16 %v1173, %v1170
    %v1255 = vpack.c.b16 %v1174, %v1171
    %v1256 = vpack.c.b16 %v1175, %v1172
    %v1257 = vpack.c.b16 %v1179, %v1176
    %v1258 = vpack.c.b16 %v1180, %v1177
    %v1259 = vpack.c.b16 %v1181, %v1178
    %v1260 = vpack.c.b16 %v1185, %v1182
    %v1261 = vpack.c.b16 %v1186, %v1183
    %v1262 = vpack.c.b16 %v1187, %v1184
    %v1263 = vpack.c.b16 %v1191, %v1188
    %v1264 = vpack.c.b16 %v1192, %v1189
    %v1265 = vpack.c.b16 %v1193, %v1190
    %v1266 = vpack.c.b16 %v1197, %v1194
    %v1267 = vpack.c.b16 %v1198, %v1195
    %v1268 = vpack.c.b16 %v1199, %v1196
    %v1269 = vpack.c.b16 %v1203, %v1200
    %v1270 = vpack.c.b16 %v1204, %v1201
    %v1271 = vpack.c.b16 %v1205, %v1202
    %v1272 = vpack.c.b16 %v1209, %v1206
    %v1273 = vpack.c.b16 %v1210, %v1207
    %v1274 = vpack.c.b16 %v1211, %v1208
    %v1275 = vpack.c.b16 %v1215, %v1212
    %v1276 = vpack.c.b16 %v1216, %v1213
    %v1277 = vpack.c.b16 %v1217, %v1214
    %v1278 = vpack.c.b16 %v1221, %v1218
    %v1279 = vpack.c.b16 %v1222, %v1219
    %v1280 = vpack.c.b16 %v1223, %v1220
    %v1281 = vpack.c.b16 %v1227, %v1224
    %v1282 = vpack.c.b16 %v1228, %v1225
    %v1283 = vpack.c.b16 %v1229, %v1226
    %v1284 = vpack.c.b16 %v1233, %v1230
    %v1285 = vpack.c.b16 %v1234, %v1231
    %v1286 = vpack.c.b16 %v1235, %v1232
    %v1287 = vpack.c.b16 %v1239, %v1236
    %v1288 = vpack.c.b16 %v1240, %v1237
    %v1289 = vpack.c.b16 %v1241, %v1238
    %1338 = vmatprep.subr.bf16.mxu0 %v1243
    %1339 = vmatpush1.bf16.msra.mxu0 %v1242
    %1340 = vmatprep.subr.bf16.mxu0 %v1246
    %1341 = vmatpush1.bf16.msra.mxu0 %v1245
    %1342 = vmatprep.subr.bf16.mxu0 %v1249
    %1343 = vmatpush1.bf16.msra.mxu0 %v1248
    %1344 = vmatprep.subr.bf16.mxu0 %v1252
    %1345 = vmatpush1.bf16.msra.mxu0 %v1251
    %1346 = vmatprep.subr.bf16.mxu0 %v1255
    %1347 = vmatpush1.bf16.msra.mxu0 %v1254
    %1348 = vmatprep.subr.bf16.mxu0 %v1258
    %1349 = vmatpush1.bf16.msra.mxu0 %v1257
    %1350 = vmatprep.subr.bf16.mxu0 %v1261
    %1351 = vmatpush1.bf16.msra.mxu0 %v1260
    %1352 = vmatprep.subr.bf16.mxu0 %v1264
    %1353 = vmatpush1.bf16.msra.mxu0 %v1263
    %1354 = vmatprep.subr.bf16.mxu0 %v1267
    %1355 = vmatpush1.bf16.msra.mxu0 %v1266
    %1356 = vmatprep.subr.bf16.mxu0 %v1270
    %1357 = vmatpush1.bf16.msra.mxu0 %v1269
    %1358 = vmatprep.subr.bf16.mxu0 %v1273
    %1359 = vmatpush1.bf16.msra.mxu0 %v1272
    %1360 = vmatprep.subr.bf16.mxu0 %v1276
    %1361 = vmatpush1.bf16.msra.mxu0 %v1275
    %1362 = vmatprep.subr.bf16.mxu0 %v1279
    %1363 = vmatpush1.bf16.msra.mxu0 %v1278
    %1364 = vmatprep.subr.bf16.mxu0 %v1282
    %1365 = vmatpush1.bf16.msra.mxu0 %v1281
    %1366 = vmatprep.subr.bf16.mxu0 %v1285
    %1367 = vmatpush1.bf16.msra.mxu0 %v1284
    %1368 = vmatprep.subr.bf16.mxu0 %v1288
    %1369 = vmatpush1.bf16.msra.mxu0 %v1287
    %1370 = vmatprep.mubr.bf16.mxu0 %v1081
    %1371 = vmatmul.mubr.bf16.gmra.mrb[0].mxu0 %v1080
    %v1372 = vpop.f32.mrb[0].mxu0
    %v1373 = vadd.f32 %v261, %v1372
    %v1374 = vpop.f32.mrb[0].mxu0
    %v1375 = vadd.f32 %v262, %v1374
    %v1376 = vpop.f32.mrb[0].mxu0
    %v1377 = vpop.f32.mrb[0].mxu0
    %1378 = vdwg.mxu0
    %1379 = vmatprep.subr.bf16.mxu0 0
    %1380 = vmatpush1.bf16.msra.mxu0 %v1244
    %1381 = vmatprep.subr.bf16.mxu0 0
    %1382 = vmatpush1.bf16.msra.mxu0 %v1247
    %1383 = vmatprep.subr.bf16.mxu0 0
    %1384 = vmatpush1.bf16.msra.mxu0 %v1250
    %1385 = vmatprep.subr.bf16.mxu0 0
    %1386 = vmatpush1.bf16.msra.mxu0 %v1253
    %1387 = vmatprep.subr.bf16.mxu0 0
    %1388 = vmatpush1.bf16.msra.mxu0 %v1256
    %1389 = vmatprep.subr.bf16.mxu0 0
    %1390 = vmatpush1.bf16.msra.mxu0 %v1259
    %1391 = vmatprep.subr.bf16.mxu0 0
    %1392 = vmatpush1.bf16.msra.mxu0 %v1262
    %1393 = vmatprep.subr.bf16.mxu0 0
    %1394 = vmatpush1.bf16.msra.mxu0 %v1265
    %1395 = vmatprep.subr.bf16.mxu0 0
    %1396 = vmatpush1.bf16.msra.mxu0 %v1268
    %1397 = vmatprep.subr.bf16.mxu0 0
    %1398 = vmatpush1.bf16.msra.mxu0 %v1271
    %1399 = vmatprep.subr.bf16.mxu0 0
    %1400 = vmatpush1.bf16.msra.mxu0 %v1274
    %1401 = vmatprep.subr.bf16.mxu0 0
    %1402 = vmatpush1.bf16.msra.mxu0 %v1277
    %1403 = vmatprep.subr.bf16.mxu0 0
    %1404 = vmatpush1.bf16.msra.mxu0 %v1280
    %1405 = vmatprep.subr.bf16.mxu0 0
    %1406 = vmatpush1.bf16.msra.mxu0 %v1283
    %1407 = vmatprep.subr.bf16.mxu0 0
    %1408 = vmatpush1.bf16.msra.mxu0 %v1286
    %1409 = vmatprep.subr.bf16.mxu0 0
    %1410 = vmatpush1.bf16.msra.mxu0 %v1289
    %1411 = vmatprep.mubr.bf16.mxu0 %v1081
    %1412 = vmatmul.mubr.bf16.gmra.mrb[0].mxu0 %v1080
    %v1413 = vpop.f32.mrb[0].mxu0
    %v1414 = vadd.f32 %v263, %v1413
    %v1415 = vpop.f32.mrb[0].mxu0
    %v1416 = vpop.f32.mrb[0].mxu0
    %v1417 = vpop.f32.mrb[0].mxu0
    %1418 = vdwg.mxu0
    %v1483 = vunpack.c.l.b16 %v197
    %v1484 = vunpack.c.h.b16 %v197
    %v1485 = vunpack.c.l.b16 %v198
    %v1486 = vunpack.c.l.b16 %v199
    %v1487 = vunpack.c.h.b16 %v199
    %v1488 = vunpack.c.l.b16 %v200
    %v1489 = vunpack.c.l.b16 %v201
    %v1490 = vunpack.c.h.b16 %v201
    %v1491 = vunpack.c.l.b16 %v202
    %v1492 = vunpack.c.l.b16 %v203
    %v1493 = vunpack.c.h.b16 %v203
    %v1494 = vunpack.c.l.b16 %v204
    %v1495 = vunpack.c.l.b16 %v205
    %v1496 = vunpack.c.h.b16 %v205
    %v1497 = vunpack.c.l.b16 %v206
    %v1498 = vunpack.c.l.b16 %v207
    %v1499 = vunpack.c.h.b16 %v207
    %v1500 = vunpack.c.l.b16 %v208
    %v1501 = vunpack.c.l.b16 %v209
    %v1502 = vunpack.c.h.b16 %v209
    %v1503 = vunpack.c.l.b16 %v210
    %v1504 = vunpack.c.l.b16 %v211
    %v1505 = vunpack.c.h.b16 %v211
    %v1506 = vunpack.c.l.b16 %v212
    %v1507 = vunpack.c.l.b16 %v213
    %v1508 = vunpack.c.h.b16 %v213
    %v1509 = vunpack.c.l.b16 %v214
    %v1510 = vunpack.c.l.b16 %v215
    %v1511 = vunpack.c.h.b16 %v215
    %v1512 = vunpack.c.l.b16 %v216
    %v1513 = vunpack.c.l.b16 %v217
    %v1514 = vunpack.c.h.b16 %v217
    %v1515 = vunpack.c.l.b16 %v218
    %v1516 = vunpack.c.l.b16 %v219
    %v1517 = vunpack.c.h.b16 %v219
    %v1518 = vunpack.c.l.b16 %v220
    %v1519 = vunpack.c.l.b16 %v221
    %v1520 = vunpack.c.h.b16 %v221
    %v1521 = vunpack.c.l.b16 %v222
    %v1522 = vunpack.c.l.b16 %v223
    %v1523 = vunpack.c.h.b16 %v223
    %v1524 = vunpack.c.l.b16 %v224
    %v1525 = vunpack.c.l.b16 %v225
    %v1526 = vunpack.c.h.b16 %v225
    %v1527 = vunpack.c.l.b16 %v226
    %v1528 = vunpack.c.l.b16 %v227
    %v1529 = vunpack.c.h.b16 %v227
    %v1530 = vunpack.c.l.b16 %v228
    %v1531 = vunpack.c.l.b16 %v229
    %v1532 = vunpack.c.h.b16 %v229
    %v1533 = vunpack.c.l.b16 %v230
    %v1534 = vunpack.c.l.b16 %v231
    %v1535 = vunpack.c.h.b16 %v231
    %v1536 = vunpack.c.l.b16 %v232
    %v1537 = vunpack.c.l.b16 %v233
    %v1538 = vunpack.c.h.b16 %v233
    %v1539 = vunpack.c.l.b16 %v234
    %v1540 = vunpack.c.l.b16 %v235
    %v1541 = vunpack.c.h.b16 %v235
    %v1542 = vunpack.c.l.b16 %v236
    %v1543 = vunpack.c.l.b16 %v237
    %v1544 = vunpack.c.h.b16 %v237
    %v1545 = vunpack.c.l.b16 %v238
    %v1546 = vunpack.c.l.b16 %v239
    %v1547 = vunpack.c.h.b16 %v239
    %v1548 = vunpack.c.l.b16 %v240
    %v1549 = vunpack.c.l.b16 %v241
    %v1550 = vunpack.c.h.b16 %v241
    %v1551 = vunpack.c.l.b16 %v242
    %v1552 = vunpack.c.l.b16 %v243
    %v1553 = vunpack.c.h.b16 %v243
    %v1554 = vunpack.c.l.b16 %v244
    %v1555 = vunpack.c.l.b16 %v245
    %v1556 = vunpack.c.h.b16 %v245
    %v1557 = vunpack.c.l.b16 %v246
    %v1558 = vunpack.c.l.b16 %v247
    %v1559 = vunpack.c.h.b16 %v247
    %v1560 = vunpack.c.l.b16 %v248
    %v1561 = vunpack.c.l.b16 %v249
    %v1562 = vunpack.c.h.b16 %v249
    %v1563 = vunpack.c.l.b16 %v250
    %v1564 = vunpack.c.l.b16 %v251
    %v1565 = vunpack.c.h.b16 %v251
    %v1566 = vunpack.c.l.b16 %v252
    %v1567 = vunpack.c.l.b16 %v253
    %v1568 = vunpack.c.h.b16 %v253
    %v1569 = vunpack.c.l.b16 %v254
    %v1570 = vunpack.c.l.b16 %v255
    %v1571 = vunpack.c.h.b16 %v255
    %v1572 = vunpack.c.l.b16 %v256
    %v1573 = vunpack.c.l.b16 %v257
    %v1574 = vunpack.c.h.b16 %v257
    %v1575 = vunpack.c.l.b16 %v258
    %v1576 = vunpack.c.l.b16 %v259
    %v1577 = vunpack.c.h.b16 %v259
    %v1578 = vunpack.c.l.b16 %v260
    %v1579 = vpack.c.b16 %v1486, %v1483
    %v1580 = vpack.c.b16 %v1487, %v1484
    %v1581 = vpack.c.b16 %v1488, %v1485
    %v1582 = vpack.c.b16 %v1492, %v1489
    %v1583 = vpack.c.b16 %v1493, %v1490
    %v1584 = vpack.c.b16 %v1494, %v1491
    %v1585 = vpack.c.b16 %v1498, %v1495
    %v1586 = vpack.c.b16 %v1499, %v1496
    %v1587 = vpack.c.b16 %v1500, %v1497
    %v1588 = vpack.c.b16 %v1504, %v1501
    %v1589 = vpack.c.b16 %v1505, %v1502
    %v1590 = vpack.c.b16 %v1506, %v1503
    %v1591 = vpack.c.b16 %v1510, %v1507
    %v1592 = vpack.c.b16 %v1511, %v1508
    %v1593 = vpack.c.b16 %v1512, %v1509
    %v1594 = vpack.c.b16 %v1516, %v1513
    %v1595 = vpack.c.b16 %v1517, %v1514
    %v1596 = vpack.c.b16 %v1518, %v1515
    %v1597 = vpack.c.b16 %v1522, %v1519
    %v1598 = vpack.c.b16 %v1523, %v1520
    %v1599 = vpack.c.b16 %v1524, %v1521
    %v1600 = vpack.c.b16 %v1528, %v1525
    %v1601 = vpack.c.b16 %v1529, %v1526
    %v1602 = vpack.c.b16 %v1530, %v1527
    %v1603 = vpack.c.b16 %v1534, %v1531
    %v1604 = vpack.c.b16 %v1535, %v1532
    %v1605 = vpack.c.b16 %v1536, %v1533
    %v1606 = vpack.c.b16 %v1540, %v1537
    %v1607 = vpack.c.b16 %v1541, %v1538
    %v1608 = vpack.c.b16 %v1542, %v1539
    %v1609 = vpack.c.b16 %v1546, %v1543
    %v1610 = vpack.c.b16 %v1547, %v1544
    %v1611 = vpack.c.b16 %v1548, %v1545
    %v1612 = vpack.c.b16 %v1552, %v1549
    %v1613 = vpack.c.b16 %v1553, %v1550
    %v1614 = vpack.c.b16 %v1554, %v1551
    %v1615 = vpack.c.b16 %v1558, %v1555
    %v1616 = vpack.c.b16 %v1559, %v1556
    %v1617 = vpack.c.b16 %v1560, %v1557
    %v1618 = vpack.c.b16 %v1564, %v1561
    %v1619 = vpack.c.b16 %v1565, %v1562
    %v1620 = vpack.c.b16 %v1566, %v1563
    %v1621 = vpack.c.b16 %v1570, %v1567
    %v1622 = vpack.c.b16 %v1571, %v1568
    %v1623 = vpack.c.b16 %v1572, %v1569
    %v1624 = vpack.c.b16 %v1576, %v1573
    %v1625 = vpack.c.b16 %v1577, %v1574
    %v1626 = vpack.c.b16 %v1578, %v1575
    %1675 = vmatprep.subr.bf16.mxu0 %v1580
    %1676 = vmatpush1.bf16.msra.mxu0 %v1579
    %1677 = vmatprep.subr.bf16.mxu0 %v1583
    %1678 = vmatpush1.bf16.msra.mxu0 %v1582
    %1679 = vmatprep.subr.bf16.mxu0 %v1586
    %1680 = vmatpush1.bf16.msra.mxu0 %v1585
    %1681 = vmatprep.subr.bf16.mxu0 %v1589
    %1682 = vmatpush1.bf16.msra.mxu0 %v1588
    %1683 = vmatprep.subr.bf16.mxu0 %v1592
    %1684 = vmatpush1.bf16.msra.mxu0 %v1591
    %1685 = vmatprep.subr.bf16.mxu0 %v1595
    %1686 = vmatpush1.bf16.msra.mxu0 %v1594
    %1687 = vmatprep.subr.bf16.mxu0 %v1598
    %1688 = vmatpush1.bf16.msra.mxu0 %v1597
    %1689 = vmatprep.subr.bf16.mxu0 %v1601
    %1690 = vmatpush1.bf16.msra.mxu0 %v1600
    %1691 = vmatprep.subr.bf16.mxu0 %v1604
    %1692 = vmatpush1.bf16.msra.mxu0 %v1603
    %1693 = vmatprep.subr.bf16.mxu0 %v1607
    %1694 = vmatpush1.bf16.msra.mxu0 %v1606
    %1695 = vmatprep.subr.bf16.mxu0 %v1610
    %1696 = vmatpush1.bf16.msra.mxu0 %v1609
    %1697 = vmatprep.subr.bf16.mxu0 %v1613
    %1698 = vmatpush1.bf16.msra.mxu0 %v1612
    %1699 = vmatprep.subr.bf16.mxu0 %v1616
    %1700 = vmatpush1.bf16.msra.mxu0 %v1615
    %1701 = vmatprep.subr.bf16.mxu0 %v1619
    %1702 = vmatpush1.bf16.msra.mxu0 %v1618
    %1703 = vmatprep.subr.bf16.mxu0 %v1622
    %1704 = vmatpush1.bf16.msra.mxu0 %v1621
    %1705 = vmatprep.subr.bf16.mxu0 %v1625
    %1706 = vmatpush1.bf16.msra.mxu0 %v1624
    %1707 = vmatprep.mubr.bf16.mxu0 0
    %1708 = vmatmul.mubr.bf16.gmra.mrb[0].mxu0 0
    %v1709 = vpop.f32.mrb[0].mxu0
    %v1710 = vadd.f32 %v264, %v1709
    %v1711 = vpop.f32.mrb[0].mxu0
    %v1712 = vadd.f32 %v265, %v1711
    %v1713 = vpop.f32.mrb[0].mxu0
    %v1714 = vpop.f32.mrb[0].mxu0
    %1715 = vdwg.mxu0
    %1716 = vmatprep.subr.bf16.mxu0 0
    %1717 = vmatpush1.bf16.msra.mxu0 %v1581
    %1718 = vmatprep.subr.bf16.mxu0 0
    %1719 = vmatpush1.bf16.msra.mxu0 %v1584
    %1720 = vmatprep.subr.bf16.mxu0 0
    %1721 = vmatpush1.bf16.msra.mxu0 %v1587
    %1722 = vmatprep.subr.bf16.mxu0 0
    %1723 = vmatpush1.bf16.msra.mxu0 %v1590
    %1724 = vmatprep.subr.bf16.mxu0 0
    %1725 = vmatpush1.bf16.msra.mxu0 %v1593
    %1726 = vmatprep.subr.bf16.mxu0 0
    %1727 = vmatpush1.bf16.msra.mxu0 %v1596
    %1728 = vmatprep.subr.bf16.mxu0 0
    %1729 = vmatpush1.bf16.msra.mxu0 %v1599
    %1730 = vmatprep.subr.bf16.mxu0 0
    %1731 = vmatpush1.bf16.msra.mxu0 %v1602
    %1732 = vmatprep.subr.bf16.mxu0 0
    %1733 = vmatpush1.bf16.msra.mxu0 %v1605
    %1734 = vmatprep.subr.bf16.mxu0 0
    %1735 = vmatpush1.bf16.msra.mxu0 %v1608
    %1736 = vmatprep.subr.bf16.mxu0 0
    %1737 = vmatpush1.bf16.msra.mxu0 %v1611
    %1738 = vmatprep.subr.bf16.mxu0 0
    %1739 = vmatpush1.bf16.msra.mxu0 %v1614
    %1740 = vmatprep.subr.bf16.mxu0 0
    %1741 = vmatpush1.bf16.msra.mxu0 %v1617
    %1742 = vmatprep.subr.bf16.mxu0 0
    %1743 = vmatpush1.bf16.msra.mxu0 %v1620
    %1744 = vmatprep.subr.bf16.mxu0 0
    %1745 = vmatpush1.bf16.msra.mxu0 %v1623
    %1746 = vmatprep.subr.bf16.mxu0 0
    %1747 = vmatpush1.bf16.msra.mxu0 %v1626
    %1748 = vmatprep.mubr.bf16.mxu0 0
    %1749 = vmatmul.mubr.bf16.gmra.mrb[0].mxu0 0
    %v1750 = vpop.f32.mrb[0].mxu0
    %v1751 = vadd.f32 %v266, %v1750
    %v1752 = vpop.f32.mrb[0].mxu0
    %v1753 = vpop.f32.mrb[0].mxu0
    %v1754 = vpop.f32.mrb[0].mxu0
    %1755 = vdwg.mxu0
    %v1756 = vadd.f32 %v1373, %v1710
    %v1757 = vxor.u32 %v1756, 2147483648
    %v1758 = vmul.f32 %v1757, 1.442695
    %v1759 = vpow.pop %v1758
    %v1760 = vadd.f32 %v1759, 1.0
    %v1761 = vrcp.pop %v1760
    %v1762 = vmul.f32 1.0, %v1761
    %v1763 = vadd.f32 %v1375, %v1712
    %v1764 = vxor.u32 %v1763, 2147483648
    %v1765 = vmul.f32 %v1764, 1.442695
    %v1766 = vpow.pop %v1765
    %v1767 = vadd.f32 %v1766, 1.0
    %v1768 = vrcp.pop %v1767
    %v1769 = vmul.f32 1.0, %v1768
    %v1770 = vmul.f32 %v1762, %v1751
    %v1771 = vadd.f32 %v1414, %v1770
    %v1772 = vtanh.pop %v1771
    %v1773 = vsub.f32 1.0, %v1769
    %v1774 = vmul.f32 %v1773, %v1772
    %v1775 = vmul.f32 %v1769, 0.0
    %v1776 = vadd.f32 %v1774, %v1775
    %v1777 = vmul.f32 %v1776, %v267
    %v1778 = vmul.f32 %v1776, %v268
    %v1779 = vpack.c.bf16 %v1777, %v1777
    %v1780 = vpack.c.bf16 %v1778, %v1778
    %1781 = vst [vmem:[#allocation2] sm:$0xff] %v1777
    %1782 = vst [vmem:[#allocation2 + $0x8] sm:$0xff] %v1778
    %1783 = vmatprep.subr.bf16.mxu0 %v841
    %1784 = vmatpush1.bf16.msra.mxu0 %v840
    %1785 = vmatprep.subr.bf16.mxu0 %v845
    %1786 = vmatpush1.bf16.msra.mxu0 %v844
    %1787 = vmatprep.subr.bf16.mxu0 %v849
    %1788 = vmatpush1.bf16.msra.mxu0 %v848
    %1789 = vmatprep.subr.bf16.mxu0 %v853
    %1790 = vmatpush1.bf16.msra.mxu0 %v852
    %1791 = vmatprep.subr.bf16.mxu0 %v857
    %1792 = vmatpush1.bf16.msra.mxu0 %v856
    %1793 = vmatprep.subr.bf16.mxu0 %v861
    %1794 = vmatpush1.bf16.msra.mxu0 %v860
    %1795 = vmatprep.subr.bf16.mxu0 %v865
    %1796 = vmatpush1.bf16.msra.mxu0 %v864
    %1797 = vmatprep.subr.bf16.mxu0 %v869
    %1798 = vmatpush1.bf16.msra.mxu0 %v868
    %1799 = vmatprep.subr.bf16.mxu0 %v873
    %1800 = vmatpush1.bf16.msra.mxu0 %v872
    %1801 = vmatprep.subr.bf16.mxu0 %v877
    %1802 = vmatpush1.bf16.msra.mxu0 %v876
    %1803 = vmatprep.subr.bf16.mxu0 %v881
    %1804 = vmatpush1.bf16.msra.mxu0 %v880
    %1805 = vmatprep.subr.bf16.mxu0 %v885
    %1806 = vmatpush1.bf16.msra.mxu0 %v884
    %1807 = vmatprep.subr.bf16.mxu0 %v889
    %1808 = vmatpush1.bf16.msra.mxu0 %v888
    %1809 = vmatprep.subr.bf16.mxu0 %v893
    %1810 = vmatpush1.bf16.msra.mxu0 %v892
    %1811 = vmatprep.subr.bf16.mxu0 %v897
    %1812 = vmatpush1.bf16.msra.mxu0 %v896
    %1813 = vmatprep.subr.bf16.mxu0 %v901
    %1814 = vmatpush1.bf16.msra.mxu0 %v900
    %1815 = vmatprep.mubr.bf16.mxu0 %v1081
    %1816 = vmatmul.mubr.bf16.gmra.mrb[0].mxu0 %v1080
    %v1817 = vpop.f32.mrb[0].mxu0
    %v1818 = vadd.f32 0.0, %v1817
    %v1819 = vpop.f32.mrb[0].mxu0
    %v1820 = vadd.f32 0.0, %v1819
    %v1821 = vpop.f32.mrb[0].mxu0
    %v1822 = vpop.f32.mrb[0].mxu0
    %1823 = vdwg.mxu0
    %1824 = vmatprep.subr.bf16.mxu0 %v843
    %1825 = vmatpush1.bf16.msra.mxu0 %v842
    %1826 = vmatprep.subr.bf16.mxu0 %v847
    %1827 = vmatpush1.bf16.msra.mxu0 %v846
    %1828 = vmatprep.subr.bf16.mxu0 %v851
    %1829 = vmatpush1.bf16.msra.mxu0 %v850
    %1830 = vmatprep.subr.bf16.mxu0 %v855
    %1831 = vmatpush1.bf16.msra.mxu0 %v854
    %1832 = vmatprep.subr.bf16.mxu0 %v859
    %1833 = vmatpush1.bf16.msra.mxu0 %v858
    %1834 = vmatprep.subr.bf16.mxu0 %v863
    %1835 = vmatpush1.bf16.msra.mxu0 %v862
    %1836 = vmatprep.subr.bf16.mxu0 %v867
    %1837 = vmatpush1.bf16.msra.mxu0 %v866
    %1838 = vmatprep.subr.bf16.mxu0 %v871
    %1839 = vmatpush1.bf16.msra.mxu0 %v870
    %1840 = vmatprep.subr.bf16.mxu0 %v875
    %1841 = vmatpush1.bf16.msra.mxu0 %v874
    %1842 = vmatprep.subr.bf16.mxu0 %v879
    %1843 = vmatpush1.bf16.msra.mxu0 %v878
    %1844 = vmatprep.subr.bf16.mxu0 %v883
    %1845 = vmatpush1.bf16.msra.mxu0 %v882
    %1846 = vmatprep.subr.bf16.mxu0 %v887
    %1847 = vmatpush1.bf16.msra.mxu0 %v886
    %1848 = vmatprep.subr.bf16.mxu0 %v891
    %1849 = vmatpush1.bf16.msra.mxu0 %v890
    %1850 = vmatprep.subr.bf16.mxu0 %v895
    %1851 = vmatpush1.bf16.msra.mxu0 %v894
    %1852 = vmatprep.subr.bf16.mxu0 %v899
    %1853 = vmatpush1.bf16.msra.mxu0 %v898
    %1854 = vmatprep.subr.bf16.mxu0 %v903
    %1855 = vmatpush1.bf16.msra.mxu0 %v902
    %1856 = vmatprep.mubr.bf16.mxu0 %v1081
    %1857 = vmatmul.mubr.bf16.gmra.mrb[0].mxu0 %v1080
    %v1858 = vpop.f32.mrb[0].mxu0
    %v1859 = vadd.f32 0.0, %v1858
    %v1860 = vpop.f32.mrb[0].mxu0
    %v1861 = vadd.f32 0.0, %v1860
    %v1862 = vpop.f32.mrb[0].mxu0
    %v1863 = vpop.f32.mrb[0].mxu0
    %1864 = vdwg.mxu0
    %v1865 = vadd.f32 %v495, %v1818
    %v1866 = vadd.f32 %v497, %v1820
    %v1867 = vadd.f32 %v608, %v1859
    %v1868 = vadd.f32 %v610, %v1861
    %v1869 = vxor.u32 %v1865, 2147483648
    %v1870 = vmul.f32 %v1869, 1.442695
    %v1871 = vpow.pop %v1870
    %v1872 = vadd.f32 %v1871, 1.0
    %v1873 = vrcp.pop %v1872
    %v1874 = vmul.f32 1.0, %v1873
    %v1875 = vxor.u32 %v1866, 2147483648
    %v1876 = vmul.f32 %v1875, 1.442695
    %v1877 = vpow.pop %v1876
    %v1878 = vadd.f32 %v1877, 1.0
    %v1879 = vrcp.pop %v1878
    %v1880 = vmul.f32 1.0, %v1879
    %v1881 = vtanh.pop %v1867
    %v1882 = vxor.u32 %v1868, 2147483648
    %v1883 = vmul.f32 %v1882, 1.442695
    %v1884 = vpow.pop %v1883
    %v1885 = vadd.f32 %v1884, 1.0
    %v1886 = vrcp.pop %v1885
    %v1887 = vmul.f32 1.0, %v1886
    %v1888 = vmul.f32 %v1880, %v1075
    %v1889 = vmul.f32 %v1874, %v1881
    %v1890 = vadd.f32 %v1888, %v1889
    %v1891 = vtanh.pop %v1890
    %v1892 = vmul.f32 %v1887, %v1891
    %v1893 = vmul.f32 %v1892, %v267
    %v1894 = vmul.f32 %v1892, %v268
    %v1895 = vpack.c.bf16 %v1893, %v1893
    %v1896 = vpack.c.bf16 %v1894, %v1894
    %1897 = vmatprep.subr.bf16.mxu0 %v1243
    %1898 = vmatpush1.bf16.msra.mxu0 %v1242
    %1899 = vmatprep.subr.bf16.mxu0 %v1246
    %1900 = vmatpush1.bf16.msra.mxu0 %v1245
    %1901 = vmatprep.subr.bf16.mxu0 %v1249
    %1902 = vmatpush1.bf16.msra.mxu0 %v1248
    %1903 = vmatprep.subr.bf16.mxu0 %v1252
    %1904 = vmatpush1.bf16.msra.mxu0 %v1251
    %1905 = vmatprep.subr.bf16.mxu0 %v1255
    %1906 = vmatpush1.bf16.msra.mxu0 %v1254
    %1907 = vmatprep.subr.bf16.mxu0 %v1258
    %1908 = vmatpush1.bf16.msra.mxu0 %v1257
    %1909 = vmatprep.subr.bf16.mxu0 %v1261
    %1910 = vmatpush1.bf16.msra.mxu0 %v1260
    %1911 = vmatprep.subr.bf16.mxu0 %v1264
    %1912 = vmatpush1.bf16.msra.mxu0 %v1263
    %1913 = vmatprep.subr.bf16.mxu0 %v1267
    %1914 = vmatpush1.bf16.msra.mxu0 %v1266
    %1915 = vmatprep.subr.bf16.mxu0 %v1270
    %1916 = vmatpush1.bf16.msra.mxu0 %v1269
    %1917 = vmatprep.subr.bf16.mxu0 %v1273
    %1918 = vmatpush1.bf16.msra.mxu0 %v1272
    %1919 = vmatprep.subr.bf16.mxu0 %v1276
    %1920 = vmatpush1.bf16.msra.mxu0 %v1275
    %1921 = vmatprep.subr.bf16.mxu0 %v1279
    %1922 = vmatpush1.bf16.msra.mxu0 %v1278
    %1923 = vmatprep.subr.bf16.mxu0 %v1282
    %1924 = vmatpush1.bf16.msra.mxu0 %v1281
    %1925 = vmatprep.subr.bf16.mxu0 %v1285
    %1926 = vmatpush1.bf16.msra.mxu0 %v1284
    %1927 = vmatprep.subr.bf16.mxu0 %v1288
    %1928 = vmatpush1.bf16.msra.mxu0 %v1287
    %1929 = vmatprep.mubr.bf16.mxu0 %v1896
    %1930 = vmatmul.mubr.bf16.gmra.mrb[0].mxu0 %v1895
    %v1931 = vpop.f32.mrb[0].mxu0
    %v1932 = vadd.f32 %v261, %v1931
    %v1933 = vpop.f32.mrb[0].mxu0
    %v1934 = vadd.f32 %v262, %v1933
    %v1935 = vpop.f32.mrb[0].mxu0
    %v1936 = vpop.f32.mrb[0].mxu0
    %1937 = vdwg.mxu0
    %1938 = vmatprep.subr.bf16.mxu0 0
    %1939 = vmatpush1.bf16.msra.mxu0 %v1244
    %1940 = vmatprep.subr.bf16.mxu0 0
    %1941 = vmatpush1.bf16.msra.mxu0 %v1247
    %1942 = vmatprep.subr.bf16.mxu0 0
    %1943 = vmatpush1.bf16.msra.mxu0 %v1250
    %1944 = vmatprep.subr.bf16.mxu0 0
    %1945 = vmatpush1.bf16.msra.mxu0 %v1253
    %1946 = vmatprep.subr.bf16.mxu0 0
    %1947 = vmatpush1.bf16.msra.mxu0 %v1256
    %1948 = vmatprep.subr.bf16.mxu0 0
    %1949 = vmatpush1.bf16.msra.mxu0 %v1259
    %1950 = vmatprep.subr.bf16.mxu0 0
    %1951 = vmatpush1.bf16.msra.mxu0 %v1262
    %1952 = vmatprep.subr.bf16.mxu0 0
    %1953 = vmatpush1.bf16.msra.mxu0 %v1265
    %1954 = vmatprep.subr.bf16.mxu0 0
    %1955 = vmatpush1.bf16.msra.mxu0 %v1268
    %1956 = vmatprep.subr.bf16.mxu0 0
    %1957 = vmatpush1.bf16.msra.mxu0 %v1271
    %1958 = vmatprep.subr.bf16.mxu0 0
    %1959 = vmatpush1.bf16.msra.mxu0 %v1274
    %1960 = vmatprep.subr.bf16.mxu0 0
    %1961 = vmatpush1.bf16.msra.mxu0 %v1277
    %1962 = vmatprep.subr.bf16.mxu0 0
    %1963 = vmatpush1.bf16.msra.mxu0 %v1280
    %1964 = vmatprep.subr.bf16.mxu0 0
    %1965 = vmatpush1.bf16.msra.mxu0 %v1283
    %1966 = vmatprep.subr.bf16.mxu0 0
    %1967 = vmatpush1.bf16.msra.mxu0 %v1286
    %1968 = vmatprep.subr.bf16.mxu0 0
    %1969 = vmatpush1.bf16.msra.mxu0 %v1289
    %1970 = vmatprep.mubr.bf16.mxu0 %v1896
    %1971 = vmatmul.mubr.bf16.gmra.mrb[0].mxu0 %v1895
    %v1972 = vpop.f32.mrb[0].mxu0
    %v1973 = vadd.f32 %v263, %v1972
    %v1974 = vpop.f32.mrb[0].mxu0
    %v1975 = vpop.f32.mrb[0].mxu0
    %v1976 = vpop.f32.mrb[0].mxu0
    %1977 = vdwg.mxu0
    %1978 = vmatprep.subr.bf16.mxu0 %v1580
    %1979 = vmatpush1.bf16.msra.mxu0 %v1579
    %1980 = vmatprep.subr.bf16.mxu0 %v1583
    %1981 = vmatpush1.bf16.msra.mxu0 %v1582
    %1982 = vmatprep.subr.bf16.mxu0 %v1586
    %1983 = vmatpush1.bf16.msra.mxu0 %v1585
    %1984 = vmatprep.subr.bf16.mxu0 %v1589
    %1985 = vmatpush1.bf16.msra.mxu0 %v1588
    %1986 = vmatprep.subr.bf16.mxu0 %v1592
    %1987 = vmatpush1.bf16.msra.mxu0 %v1591
    %1988 = vmatprep.subr.bf16.mxu0 %v1595
    %1989 = vmatpush1.bf16.msra.mxu0 %v1594
    %1990 = vmatprep.subr.bf16.mxu0 %v1598
    %1991 = vmatpush1.bf16.msra.mxu0 %v1597
    %1992 = vmatprep.subr.bf16.mxu0 %v1601
    %1993 = vmatpush1.bf16.msra.mxu0 %v1600
    %1994 = vmatprep.subr.bf16.mxu0 %v1604
    %1995 = vmatpush1.bf16.msra.mxu0 %v1603
    %1996 = vmatprep.subr.bf16.mxu0 %v1607
    %1997 = vmatpush1.bf16.msra.mxu0 %v1606
    %1998 = vmatprep.subr.bf16.mxu0 %v1610
    %1999 = vmatpush1.bf16.msra.mxu0 %v1609
    %2000 = vmatprep.subr.bf16.mxu0 %v1613
    %2001 = vmatpush1.bf16.msra.mxu0 %v1612
    %2002 = vmatprep.subr.bf16.mxu0 %v1616
    %2003 = vmatpush1.bf16.msra.mxu0 %v1615
    %2004 = vmatprep.subr.bf16.mxu0 %v1619
    %2005 = vmatpush1.bf16.msra.mxu0 %v1618
    %2006 = vmatprep.subr.bf16.mxu0 %v1622
    %2007 = vmatpush1.bf16.msra.mxu0 %v1621
    %2008 = vmatprep.subr.bf16.mxu0 %v1625
    %2009 = vmatpush1.bf16.msra.mxu0 %v1624
    %2010 = vmatprep.mubr.bf16.mxu0 %v1780
    %2011 = vmatmul.mubr.bf16.gmra.mrb[0].mxu0 %v1779
    %v2012 = vpop.f32.mrb[0].mxu0
    %v2013 = vadd.f32 %v264, %v2012
    %v2014 = vpop.f32.mrb[0].mxu0
    %v2015 = vadd.f32 %v265, %v2014
    %v2016 = vpop.f32.mrb[0].mxu0
    %v2017 = vpop.f32.mrb[0].mxu0
    %2018 = vdwg.mxu0
    %2019 = vmatprep.subr.bf16.mxu0 0
    %2020 = vmatpush1.bf16.msra.mxu0 %v1581
    %2021 = vmatprep.subr.bf16.mxu0 0
    %2022 = vmatpush1.bf16.msra.mxu0 %v1584
    %2023 = vmatprep.subr.bf16.mxu0 0
    %2024 = vmatpush1.bf16.msra.mxu0 %v1587
    %2025 = vmatprep.subr.bf16.mxu0 0
    %2026 = vmatpush1.bf16.msra.mxu0 %v1590
    %2027 = vmatprep.subr.bf16.mxu0 0
    %2028 = vmatpush1.bf16.msra.mxu0 %v1593
    %2029 = vmatprep.subr.bf16.mxu0 0
    %2030 = vmatpush1.bf16.msra.mxu0 %v1596
    %2031 = vmatprep.subr.bf16.mxu0 0
    %2032 = vmatpush1.bf16.msra.mxu0 %v1599
    %2033 = vmatprep.subr.bf16.mxu0 0
    %2034 = vmatpush1.bf16.msra.mxu0 %v1602
    %2035 = vmatprep.subr.bf16.mxu0 0
    %2036 = vmatpush1.bf16.msra.mxu0 %v1605
    %2037 = vmatprep.subr.bf16.mxu0 0
    %2038 = vmatpush1.bf16.msra.mxu0 %v1608
    %2039 = vmatprep.subr.bf16.mxu0 0
    %2040 = vmatpush1.bf16.msra.mxu0 %v1611
    %2041 = vmatprep.subr.bf16.mxu0 0
    %2042 = vmatpush1.bf16.msra.mxu0 %v1614
    %2043 = vmatprep.subr.bf16.mxu0 0
    %2044 = vmatpush1.bf16.msra.mxu0 %v1617
    %2045 = vmatprep.subr.bf16.mxu0 0
    %2046 = vmatpush1.bf16.msra.mxu0 %v1620
    %2047 = vmatprep.subr.bf16.mxu0 0
    %2048 = vmatpush1.bf16.msra.mxu0 %v1623
    %2049 = vmatprep.subr.bf16.mxu0 0
    %2050 = vmatpush1.bf16.msra.mxu0 %v1626
    %2051 = vmatprep.mubr.bf16.mxu0 %v1780
    %2052 = vmatmul.mubr.bf16.gmra.mrb[0].mxu0 %v1779
    %v2053 = vpop.f32.mrb[0].mxu0
    %v2054 = vadd.f32 %v266, %v2053
    %v2055 = vpop.f32.mrb[0].mxu0
    %v2056 = vpop.f32.mrb[0].mxu0
    %v2057 = vpop.f32.mrb[0].mxu0
    %2058 = vdwg.mxu0
    %v2059 = vadd.f32 %v1932, %v2013
    %v2060 = vxor.u32 %v2059, 2147483648
    %v2061 = vmul.f32 %v2060, 1.442695
    %v2062 = vpow.pop %v2061
    %v2063 = vadd.f32 %v2062, 1.0
    %v2064 = vrcp.pop %v2063
    %v2065 = vmul.f32 1.0, %v2064
    %v2066 = vadd.f32 %v1934, %v2015
    %v2067 = vxor.u32 %v2066, 2147483648
    %v2068 = vmul.f32 %v2067, 1.442695
    %v2069 = vpow.pop %v2068
    %v2070 = vadd.f32 %v2069, 1.0
    %v2071 = vrcp.pop %v2070
    %v2072 = vmul.f32 1.0, %v2071
    %v2073 = vmul.f32 %v2065, %v2054
    %v2074 = vadd.f32 %v1973, %v2073
    %v2075 = vtanh.pop %v2074
    %v2076 = vsub.f32 1.0, %v2072
    %v2077 = vmul.f32 %v2076, %v2075
    %v2078 = vmul.f32 %v2072, %v1776
    %v2079 = vadd.f32 %v2077, %v2078
    %v2080 = vmul.f32 %v2079, %v267
    %v2081 = vmul.f32 %v2079, %v268
    %v2082 = vpack.c.bf16 %v2080, %v2080
    %v2083 = vpack.c.bf16 %v2081, %v2081
    %2084 = vst [vmem:[#allocation2 + $0x10] sm:$0xff] %v2080
    %2085 = vst [vmem:[#allocation2 + $0x18] sm:$0xff] %v2081
    %2086 = vmatprep.subr.bf16.mxu0 %v841
    %2087 = vmatpush1.bf16.msra.mxu0 %v840
    %2088 = vmatprep.subr.bf16.mxu0 %v845
    %2089 = vmatpush1.bf16.msra.mxu0 %v844
    %2090 = vmatprep.subr.bf16.mxu0 %v849
    %2091 = vmatpush1.bf16.msra.mxu0 %v848
    %2092 = vmatprep.subr.bf16.mxu0 %v853
    %2093 = vmatpush1.bf16.msra.mxu0 %v852
    %2094 = vmatprep.subr.bf16.mxu0 %v857
    %2095 = vmatpush1.bf16.msra.mxu0 %v856
    %2096 = vmatprep.subr.bf16.mxu0 %v861
    %2097 = vmatpush1.bf16.msra.mxu0 %v860
    %2098 = vmatprep.subr.bf16.mxu0 %v865
    %2099 = vmatpush1.bf16.msra.mxu0 %v864
    %2100 = vmatprep.subr.bf16.mxu0 %v869
    %2101 = vmatpush1.bf16.msra.mxu0 %v868
    %2102 = vmatprep.subr.bf16.mxu0 %v873
    %2103 = vmatpush1.bf16.msra.mxu0 %v872
    %2104 = vmatprep.subr.bf16.mxu0 %v877
    %2105 = vmatpush1.bf16.msra.mxu0 %v876
    %2106 = vmatprep.subr.bf16.mxu0 %v881
    %2107 = vmatpush1.bf16.msra.mxu0 %v880
    %2108 = vmatprep.subr.bf16.mxu0 %v885
    %2109 = vmatpush1.bf16.msra.mxu0 %v884
    %2110 = vmatprep.subr.bf16.mxu0 %v889
    %2111 = vmatpush1.bf16.msra.mxu0 %v888
    %2112 = vmatprep.subr.bf16.mxu0 %v893
    %2113 = vmatpush1.bf16.msra.mxu0 %v892
    %2114 = vmatprep.subr.bf16.mxu0 %v897
    %2115 = vmatpush1.bf16.msra.mxu0 %v896
    %2116 = vmatprep.subr.bf16.mxu0 %v901
    %2117 = vmatpush1.bf16.msra.mxu0 %v900
    %2118 = vmatprep.mubr.bf16.mxu0 %v1896
    %2119 = vmatmul.mubr.bf16.gmra.mrb[0].mxu0 %v1895
    %v2120 = vpop.f32.mrb[0].mxu0
    %v2121 = vadd.f32 0.0, %v2120
    %v2122 = vpop.f32.mrb[0].mxu0
    %v2123 = vadd.f32 0.0, %v2122
    %v2124 = vpop.f32.mrb[0].mxu0
    %v2125 = vpop.f32.mrb[0].mxu0
    %2126 = vdwg.mxu0
    %2127 = vmatprep.subr.bf16.mxu0 %v843
    %2128 = vmatpush1.bf16.msra.mxu0 %v842
    %2129 = vmatprep.subr.bf16.mxu0 %v847
    %2130 = vmatpush1.bf16.msra.mxu0 %v846
    %2131 = vmatprep.subr.bf16.mxu0 %v851
    %2132 = vmatpush1.bf16.msra.mxu0 %v850
    %2133 = vmatprep.subr.bf16.mxu0 %v855
    %2134 = vmatpush1.bf16.msra.mxu0 %v854
    %2135 = vmatprep.subr.bf16.mxu0 %v859
    %2136 = vmatpush1.bf16.msra.mxu0 %v858
    %2137 = vmatprep.subr.bf16.mxu0 %v863
    %2138 = vmatpush1.bf16.msra.mxu0 %v862
    %2139 = vmatprep.subr.bf16.mxu0 %v867
    %2140 = vmatpush1.bf16.msra.mxu0 %v866
    %2141 = vmatprep.subr.bf16.mxu0 %v871
    %2142 = vmatpush1.bf16.msra.mxu0 %v870
    %2143 = vmatprep.subr.bf16.mxu0 %v875
    %2144 = vmatpush1.bf16.msra.mxu0 %v874
    %2145 = vmatprep.subr.bf16.mxu0 %v879
    %2146 = vmatpush1.bf16.msra.mxu0 %v878
    %2147 = vmatprep.subr.bf16.mxu0 %v883
    %2148 = vmatpush1.bf16.msra.mxu0 %v882
    %2149 = vmatprep.subr.bf16.mxu0 %v887
    %2150 = vmatpush1.bf16.msra.mxu0 %v886
    %2151 = vmatprep.subr.bf16.mxu0 %v891
    %2152 = vmatpush1.bf16.msra.mxu0 %v890
    %2153 = vmatprep.subr.bf16.mxu0 %v895
    %2154 = vmatpush1.bf16.msra.mxu0 %v894
    %2155 = vmatprep.subr.bf16.mxu0 %v899
    %2156 = vmatpush1.bf16.msra.mxu0 %v898
    %2157 = vmatprep.subr.bf16.mxu0 %v903
    %2158 = vmatpush1.bf16.msra.mxu0 %v902
    %2159 = vmatprep.mubr.bf16.mxu0 %v1896
    %2160 = vmatmul.mubr.bf16.gmra.mrb[0].mxu0 %v1895
    %v2161 = vpop.f32.mrb[0].mxu0
    %v2162 = vadd.f32 0.0, %v2161
    %v2163 = vpop.f32.mrb[0].mxu0
    %v2164 = vadd.f32 0.0, %v2163
    %v2165 = vpop.f32.mrb[0].mxu0
    %v2166 = vpop.f32.mrb[0].mxu0
    %2167 = vdwg.mxu0
    %v2168 = vadd.f32 %v501, %v2121
    %v2169 = vadd.f32 %v503, %v2123
    %v2170 = vadd.f32 %v614, %v2162
    %v2171 = vadd.f32 %v616, %v2164
    %v2172 = vxor.u32 %v2168, 2147483648
    %v2173 = vmul.f32 %v2172, 1.442695
    %v2174 = vpow.pop %v2173
    %v2175 = vadd.f32 %v2174, 1.0
    %v2176 = vrcp.pop %v2175
    %v2177 = vmul.f32 1.0, %v2176
    %v2178 = vxor.u32 %v2169, 2147483648
    %v2179 = vmul.f32 %v2178, 1.442695
    %v2180 = vpow.pop %v2179
    %v2181 = vadd.f32 %v2180, 1.0
    %v2182 = vrcp.pop %v2181
    %v2183 = vmul.f32 1.0, %v2182
    %v2184 = vtanh.pop %v2170
    %v2185 = vxor.u32 %v2171, 2147483648
    %v2186 = vmul.f32 %v2185, 1.442695
    %v2187 = vpow.pop %v2186
    %v2188 = vadd.f32 %v2187, 1.0
    %v2189 = vrcp.pop %v2188
    %v2190 = vmul.f32 1.0, %v2189
    %v2191 = vmul.f32 %v2183, %v1890
    %v2192 = vmul.f32 %v2177, %v2184
    %v2193 = vadd.f32 %v2191, %v2192
    %v2194 = vtanh.pop %v2193
    %v2195 = vmul.f32 %v2190, %v2194
    %v2196 = vmul.f32 %v2195, %v267
    %v2197 = vmul.f32 %v2195, %v268
    %v2198 = vpack.c.bf16 %v2196, %v2196
    %v2199 = vpack.c.bf16 %v2197, %v2197
    %2200 = vmatprep.subr.bf16.mxu0 %v1243
    %2201 = vmatpush1.bf16.msra.mxu0 %v1242
    %2202 = vmatprep.subr.bf16.mxu0 %v1246
    %2203 = vmatpush1.bf16.msra.mxu0 %v1245
    %2204 = vmatprep.subr.bf16.mxu0 %v1249
    %2205 = vmatpush1.bf16.msra.mxu0 %v1248
    %2206 = vmatprep.subr.bf16.mxu0 %v1252
    %2207 = vmatpush1.bf16.msra.mxu0 %v1251
    %2208 = vmatprep.subr.bf16.mxu0 %v1255
    %2209 = vmatpush1.bf16.msra.mxu0 %v1254
    %2210 = vmatprep.subr.bf16.mxu0 %v1258
    %2211 = vmatpush1.bf16.msra.mxu0 %v1257
    %2212 = vmatprep.subr.bf16.mxu0 %v1261
    %2213 = vmatpush1.bf16.msra.mxu0 %v1260
    %2214 = vmatprep.subr.bf16.mxu0 %v1264
    %2215 = vmatpush1.bf16.msra.mxu0 %v1263
    %2216 = vmatprep.subr.bf16.mxu0 %v1267
    %2217 = vmatpush1.bf16.msra.mxu0 %v1266
    %2218 = vmatprep.subr.bf16.mxu0 %v1270
    %2219 = vmatpush1.bf16.msra.mxu0 %v1269
    %2220 = vmatprep.subr.bf16.mxu0 %v1273
    %2221 = vmatpush1.bf16.msra.mxu0 %v1272
    %2222 = vmatprep.subr.bf16.mxu0 %v1276
    %2223 = vmatpush1.bf16.msra.mxu0 %v1275
    %2224 = vmatprep.subr.bf16.mxu0 %v1279
    %2225 = vmatpush1.bf16.msra.mxu0 %v1278
    %2226 = vmatprep.subr.bf16.mxu0 %v1282
    %2227 = vmatpush1.bf16.msra.mxu0 %v1281
    %2228 = vmatprep.subr.bf16.mxu0 %v1285
    %2229 = vmatpush1.bf16.msra.mxu0 %v1284
    %2230 = vmatprep.subr.bf16.mxu0 %v1288
    %2231 = vmatpush1.bf16.msra.mxu0 %v1287
    %2232 = vmatprep.mubr.bf16.mxu0 %v2199
    %2233 = vmatmul.mubr.bf16.gmra.mrb[0].mxu0 %v2198
    %v2234 = vpop.f32.mrb[0].mxu0
    %v2235 = vadd.f32 %v261, %v2234
    %v2236 = vpop.f32.mrb[0].mxu0
    %v2237 = vadd.f32 %v262, %v2236
    %v2238 = vpop.f32.mrb[0].mxu0
    %v2239 = vpop.f32.mrb[0].mxu0
    %2240 = vdwg.mxu0
    %2241 = vmatprep.subr.bf16.mxu0 0
    %2242 = vmatpush1.bf16.msra.mxu0 %v1244
    %2243 = vmatprep.subr.bf16.mxu0 0
    %2244 = vmatpush1.bf16.msra.mxu0 %v1247
    %2245 = vmatprep.subr.bf16.mxu0 0
    %2246 = vmatpush1.bf16.msra.mxu0 %v1250
    %2247 = vmatprep.subr.bf16.mxu0 0
    %2248 = vmatpush1.bf16.msra.mxu0 %v1253
    %2249 = vmatprep.subr.bf16.mxu0 0
    %2250 = vmatpush1.bf16.msra.mxu0 %v1256
    %2251 = vmatprep.subr.bf16.mxu0 0
    %2252 = vmatpush1.bf16.msra.mxu0 %v1259
    %2253 = vmatprep.subr.bf16.mxu0 0
    %2254 = vmatpush1.bf16.msra.mxu0 %v1262
    %2255 = vmatprep.subr.bf16.mxu0 0
    %2256 = vmatpush1.bf16.msra.mxu0 %v1265
    %2257 = vmatprep.subr.bf16.mxu0 0
    %2258 = vmatpush1.bf16.msra.mxu0 %v1268
    %2259 = vmatprep.subr.bf16.mxu0 0
    %2260 = vmatpush1.bf16.msra.mxu0 %v1271
    %2261 = vmatprep.subr.bf16.mxu0 0
    %2262 = vmatpush1.bf16.msra.mxu0 %v1274
    %2263 = vmatprep.subr.bf16.mxu0 0
    %2264 = vmatpush1.bf16.msra.mxu0 %v1277
    %2265 = vmatprep.subr.bf16.mxu0 0
    %2266 = vmatpush1.bf16.msra.mxu0 %v1280
    %2267 = vmatprep.subr.bf16.mxu0 0
    %2268 = vmatpush1.bf16.msra.mxu0 %v1283
    %2269 = vmatprep.subr.bf16.mxu0 0
    %2270 = vmatpush1.bf16.msra.mxu0 %v1286
    %2271 = vmatprep.subr.bf16.mxu0 0
    %2272 = vmatpush1.bf16.msra.mxu0 %v1289
    %2273 = vmatprep.mubr.bf16.mxu0 %v2199
    %2274 = vmatmul.mubr.bf16.gmra.mrb[0].mxu0 %v2198
    %v2275 = vpop.f32.mrb[0].mxu0
    %v2276 = vadd.f32 %v263, %v2275
    %v2277 = vpop.f32.mrb[0].mxu0
    %v2278 = vpop.f32.mrb[0].mxu0
    %v2279 = vpop.f32.mrb[0].mxu0
    %2280 = vdwg.mxu0
    %2281 = vmatprep.subr.bf16.mxu0 %v1580
    %2282 = vmatpush1.bf16.msra.mxu0 %v1579
    %2283 = vmatprep.subr.bf16.mxu0 %v1583
    %2284 = vmatpush1.bf16.msra.mxu0 %v1582
    %2285 = vmatprep.subr.bf16.mxu0 %v1586
    %2286 = vmatpush1.bf16.msra.mxu0 %v1585
    %2287 = vmatprep.subr.bf16.mxu0 %v1589
    %2288 = vmatpush1.bf16.msra.mxu0 %v1588
    %2289 = vmatprep.subr.bf16.mxu0 %v1592
    %2290 = vmatpush1.bf16.msra.mxu0 %v1591
    %2291 = vmatprep.subr.bf16.mxu0 %v1595
    %2292 = vmatpush1.bf16.msra.mxu0 %v1594
    %2293 = vmatprep.subr.bf16.mxu0 %v1598
    %2294 = vmatpush1.bf16.msra.mxu0 %v1597
    %2295 = vmatprep.subr.bf16.mxu0 %v1601
    %2296 = vmatpush1.bf16.msra.mxu0 %v1600
    %2297 = vmatprep.subr.bf16.mxu0 %v1604
    %2298 = vmatpush1.bf16.msra.mxu0 %v1603
    %2299 = vmatprep.subr.bf16.mxu0 %v1607
    %2300 = vmatpush1.bf16.msra.mxu0 %v1606
    %2301 = vmatprep.subr.bf16.mxu0 %v1610
    %2302 = vmatpush1.bf16.msra.mxu0 %v1609
    %2303 = vmatprep.subr.bf16.mxu0 %v1613
    %2304 = vmatpush1.bf16.msra.mxu0 %v1612
    %2305 = vmatprep.subr.bf16.mxu0 %v1616
    %2306 = vmatpush1.bf16.msra.mxu0 %v1615
    %2307 = vmatprep.subr.bf16.mxu0 %v1619
    %2308 = vmatpush1.bf16.msra.mxu0 %v1618
    %2309 = vmatprep.subr.bf16.mxu0 %v1622
    %2310 = vmatpush1.bf16.msra.mxu0 %v1621
    %2311 = vmatprep.subr.bf16.mxu0 %v1625
    %2312 = vmatpush1.bf16.msra.mxu0 %v1624
    %2313 = vmatprep.mubr.bf16.mxu0 %v2083
    %2314 = vmatmul.mubr.bf16.gmra.mrb[0].mxu0 %v2082
    %v2315 = vpop.f32.mrb[0].mxu0
    %v2316 = vadd.f32 %v264, %v2315
    %v2317 = vpop.f32.mrb[0].mxu0
    %v2318 = vadd.f32 %v265, %v2317
    %v2319 = vpop.f32.mrb[0].mxu0
    %v2320 = vpop.f32.mrb[0].mxu0
    %2321 = vdwg.mxu0
    %2322 = vmatprep.subr.bf16.mxu0 0
    %2323 = vmatpush1.bf16.msra.mxu0 %v1581
    %2324 = vmatprep.subr.bf16.mxu0 0
    %2325 = vmatpush1.bf16.msra.mxu0 %v1584
    %2326 = vmatprep.subr.bf16.mxu0 0
    %2327 = vmatpush1.bf16.msra.mxu0 %v1587
    %2328 = vmatprep.subr.bf16.mxu0 0
    %2329 = vmatpush1.bf16.msra.mxu0 %v1590
    %2330 = vmatprep.subr.bf16.mxu0 0
    %2331 = vmatpush1.bf16.msra.mxu0 %v1593
    %2332 = vmatprep.subr.bf16.mxu0 0
    %2333 = vmatpush1.bf16.msra.mxu0 %v1596
    %2334 = vmatprep.subr.bf16.mxu0 0
    %2335 = vmatpush1.bf16.msra.mxu0 %v1599
    %2336 = vmatprep.subr.bf16.mxu0 0
    %2337 = vmatpush1.bf16.msra.mxu0 %v1602
    %2338 = vmatprep.subr.bf16.mxu0 0
    %2339 = vmatpush1.bf16.msra.mxu0 %v1605
    %2340 = vmatprep.subr.bf16.mxu0 0
    %2341 = vmatpush1.bf16.msra.mxu0 %v1608
    %2342 = vmatprep.subr.bf16.mxu0 0
    %2343 = vmatpush1.bf16.msra.mxu0 %v1611
    %2344 = vmatprep.subr.bf16.mxu0 0
    %2345 = vmatpush1.bf16.msra.mxu0 %v1614
    %2346 = vmatprep.subr.bf16.mxu0 0
    %2347 = vmatpush1.bf16.msra.mxu0 %v1617
    %2348 = vmatprep.subr.bf16.mxu0 0
    %2349 = vmatpush1.bf16.msra.mxu0 %v1620
    %2350 = vmatprep.subr.bf16.mxu0 0
    %2351 = vmatpush1.bf16.msra.mxu0 %v1623
    %2352 = vmatprep.subr.bf16.mxu0 0
    %2353 = vmatpush1.bf16.msra.mxu0 %v1626
    %2354 = vmatprep.mubr.bf16.mxu0 %v2083
    %2355 = vmatmul.mubr.bf16.gmra.mrb[0].mxu0 %v2082
    %v2356 = vpop.f32.mrb[0].mxu0
    %v2357 = vadd.f32 %v266, %v2356
    %v2358 = vpop.f32.mrb[0].mxu0
    %v2359 = vpop.f32.mrb[0].mxu0
    %v2360 = vpop.f32.mrb[0].mxu0
    %2361 = vdwg.mxu0
    %v2362 = vadd.f32 %v2235, %v2316
    %v2363 = vxor.u32 %v2362, 2147483648
    %v2364 = vmul.f32 %v2363, 1.442695
    %v2365 = vpow.pop %v2364
    %v2366 = vadd.f32 %v2365, 1.0
    %v2367 = vrcp.pop %v2366
    %v2368 = vmul.f32 1.0, %v2367
    %v2369 = vadd.f32 %v2237, %v2318
    %v2370 = vxor.u32 %v2369, 2147483648
    %v2371 = vmul.f32 %v2370, 1.442695
    %v2372 = vpow.pop %v2371
    %v2373 = vadd.f32 %v2372, 1.0
    %v2374 = vrcp.pop %v2373
    %v2375 = vmul.f32 1.0, %v2374
    %v2376 = vmul.f32 %v2368, %v2357
    %v2377 = vadd.f32 %v2276, %v2376
    %v2378 = vtanh.pop %v2377
    %v2379 = vsub.f32 1.0, %v2375
    %v2380 = vmul.f32 %v2379, %v2378
    %v2381 = vmul.f32 %v2375, %v2079
    %v2382 = vadd.f32 %v2380, %v2381
    %v2383 = vmul.f32 %v2382, %v267
    %v2384 = vmul.f32 %v2382, %v268
    %v2385 = vpack.c.bf16 %v2383, %v2383
    %v2386 = vpack.c.bf16 %v2384, %v2384
    %2387 = vst [vmem:[#allocation2 + $0x20] sm:$0xff] %v2383
    %2388 = vst [vmem:[#allocation2 + $0x28] sm:$0xff] %v2384
    %2389 = vmatprep.subr.bf16.mxu0 %v841
    %2390 = vmatpush1.bf16.msra.mxu0 %v840
    %2391 = vmatprep.subr.bf16.mxu0 %v845
    %2392 = vmatpush1.bf16.msra.mxu0 %v844
    %2393 = vmatprep.subr.bf16.mxu0 %v849
    %2394 = vmatpush1.bf16.msra.mxu0 %v848
    %2395 = vmatprep.subr.bf16.mxu0 %v853
    %2396 = vmatpush1.bf16.msra.mxu0 %v852
    %2397 = vmatprep.subr.bf16.mxu0 %v857
    %2398 = vmatpush1.bf16.msra.mxu0 %v856
    %2399 = vmatprep.subr.bf16.mxu0 %v861
    %2400 = vmatpush1.bf16.msra.mxu0 %v860
    %2401 = vmatprep.subr.bf16.mxu0 %v865
    %2402 = vmatpush1.bf16.msra.mxu0 %v864
    %2403 = vmatprep.subr.bf16.mxu0 %v869
    %2404 = vmatpush1.bf16.msra.mxu0 %v868
    %2405 = vmatprep.subr.bf16.mxu0 %v873
    %2406 = vmatpush1.bf16.msra.mxu0 %v872
    %2407 = vmatprep.subr.bf16.mxu0 %v877
    %2408 = vmatpush1.bf16.msra.mxu0 %v876
    %2409 = vmatprep.subr.bf16.mxu0 %v881
    %2410 = vmatpush1.bf16.msra.mxu0 %v880
    %2411 = vmatprep.subr.bf16.mxu0 %v885
    %2412 = vmatpush1.bf16.msra.mxu0 %v884
    %2413 = vmatprep.subr.bf16.mxu0 %v889
    %2414 = vmatpush1.bf16.msra.mxu0 %v888
    %2415 = vmatprep.subr.bf16.mxu0 %v893
    %2416 = vmatpush1.bf16.msra.mxu0 %v892
    %2417 = vmatprep.subr.bf16.mxu0 %v897
    %2418 = vmatpush1.bf16.msra.mxu0 %v896
    %2419 = vmatprep.subr.bf16.mxu0 %v901
    %2420 = vmatpush1.bf16.msra.mxu0 %v900
    %2421 = vmatprep.mubr.bf16.mxu0 %v2199
    %2422 = vmatmul.mubr.bf16.gmra.mrb[0].mxu0 %v2198
    %v2423 = vpop.f32.mrb[0].mxu0
    %v2424 = vadd.f32 0.0, %v2423
    %v2425 = vpop.f32.mrb[0].mxu0
    %v2426 = vadd.f32 0.0, %v2425
    %v2427 = vpop.f32.mrb[0].mxu0
    %v2428 = vpop.f32.mrb[0].mxu0
    %2429 = vdwg.mxu0
    %2430 = vmatprep.subr.bf16.mxu0 %v843
    %2431 = vmatpush1.bf16.msra.mxu0 %v842
    %2432 = vmatprep.subr.bf16.mxu0 %v847
    %2433 = vmatpush1.bf16.msra.mxu0 %v846
    %2434 = vmatprep.subr.bf16.mxu0 %v851
    %2435 = vmatpush1.bf16.msra.mxu0 %v850
    %2436 = vmatprep.subr.bf16.mxu0 %v855
    %2437 = vmatpush1.bf16.msra.mxu0 %v854
    %2438 = vmatprep.subr.bf16.mxu0 %v859
    %2439 = vmatpush1.bf16.msra.mxu0 %v858
    %2440 = vmatprep.subr.bf16.mxu0 %v863
    %2441 = vmatpush1.bf16.msra.mxu0 %v862
    %2442 = vmatprep.subr.bf16.mxu0 %v867
    %2443 = vmatpush1.bf16.msra.mxu0 %v866
    %2444 = vmatprep.subr.bf16.mxu0 %v871
    %2445 = vmatpush1.bf16.msra.mxu0 %v870
    %2446 = vmatprep.subr.bf16.mxu0 %v875
    %2447 = vmatpush1.bf16.msra.mxu0 %v874
    %2448 = vmatprep.subr.bf16.mxu0 %v879
    %2449 = vmatpush1.bf16.msra.mxu0 %v878
    %2450 = vmatprep.subr.bf16.mxu0 %v883
    %2451 = vmatpush1.bf16.msra.mxu0 %v882
    %2452 = vmatprep.subr.bf16.mxu0 %v887
    %2453 = vmatpush1.bf16.msra.mxu0 %v886
    %2454 = vmatprep.subr.bf16.mxu0 %v891
    %2455 = vmatpush1.bf16.msra.mxu0 %v890
    %2456 = vmatprep.subr.bf16.mxu0 %v895
    %2457 = vmatpush1.bf16.msra.mxu0 %v894
    %2458 = vmatprep.subr.bf16.mxu0 %v899
    %2459 = vmatpush1.bf16.msra.mxu0 %v898
    %2460 = vmatprep.subr.bf16.mxu0 %v903
    %2461 = vmatpush1.bf16.msra.mxu0 %v902
    %2462 = vmatprep.mubr.bf16.mxu0 %v2199
    %2463 = vmatmul.mubr.bf16.gmra.mrb[0].mxu0 %v2198
    %v2464 = vpop.f32.mrb[0].mxu0
    %v2465 = vadd.f32 0.0, %v2464
    %v2466 = vpop.f32.mrb[0].mxu0
    %v2467 = vadd.f32 0.0, %v2466
    %v2468 = vpop.f32.mrb[0].mxu0
    %v2469 = vpop.f32.mrb[0].mxu0
    %2470 = vdwg.mxu0
    %v2471 = vadd.f32 %v507, %v2424
    %v2472 = vadd.f32 %v509, %v2426
    %v2473 = vadd.f32 %v620, %v2465
    %v2474 = vadd.f32 %v622, %v2467
    %v2475 = vxor.u32 %v2471, 2147483648
    %v2476 = vmul.f32 %v2475, 1.442695
    %v2477 = vpow.pop %v2476
    %v2478 = vadd.f32 %v2477, 1.0
    %v2479 = vrcp.pop %v2478
    %v2480 = vmul.f32 1.0, %v2479
    %v2481 = vxor.u32 %v2472, 2147483648
    %v2482 = vmul.f32 %v2481, 1.442695
    %v2483 = vpow.pop %v2482
    %v2484 = vadd.f32 %v2483, 1.0
    %v2485 = vrcp.pop %v2484
    %v2486 = vmul.f32 1.0, %v2485
    %v2487 = vtanh.pop %v2473
    %v2488 = vxor.u32 %v2474, 2147483648
    %v2489 = vmul.f32 %v2488, 1.442695
    %v2490 = vpow.pop %v2489
    %v2491 = vadd.f32 %v2490, 1.0
    %v2492 = vrcp.pop %v2491
    %v2493 = vmul.f32 1.0, %v2492
    %v2494 = vmul.f32 %v2486, %v2193
    %v2495 = vmul.f32 %v2480, %v2487
    %v2496 = vadd.f32 %v2494, %v2495
    %v2497 = vtanh.pop %v2496
    %v2498 = vmul.f32 %v2493, %v2497
    %v2499 = vmul.f32 %v2498, %v267
    %v2500 = vmul.f32 %v2498, %v268
    %v2501 = vpack.c.bf16 %v2499, %v2499
    %v2502 = vpack.c.bf16 %v2500, %v2500
    %2503 = vmatprep.subr.bf16.mxu0 %v1243
    %2504 = vmatpush1.bf16.msra.mxu0 %v1242
    %2505 = vmatprep.subr.bf16.mxu0 %v1246
    %2506 = vmatpush1.bf16.msra.mxu0 %v1245
    %2507 = vmatprep.subr.bf16.mxu0 %v1249
    %2508 = vmatpush1.bf16.msra.mxu0 %v1248
    %2509 = vmatprep.subr.bf16.mxu0 %v1252
    %2510 = vmatpush1.bf16.msra.mxu0 %v1251
    %2511 = vmatprep.subr.bf16.mxu0 %v1255
    %2512 = vmatpush1.bf16.msra.mxu0 %v1254
    %2513 = vmatprep.subr.bf16.mxu0 %v1258
    %2514 = vmatpush1.bf16.msra.mxu0 %v1257
    %2515 = vmatprep.subr.bf16.mxu0 %v1261
    %2516 = vmatpush1.bf16.msra.mxu0 %v1260
    %2517 = vmatprep.subr.bf16.mxu0 %v1264
    %2518 = vmatpush1.bf16.msra.mxu0 %v1263
    %2519 = vmatprep.subr.bf16.mxu0 %v1267
    %2520 = vmatpush1.bf16.msra.mxu0 %v1266
    %2521 = vmatprep.subr.bf16.mxu0 %v1270
    %2522 = vmatpush1.bf16.msra.mxu0 %v1269
    %2523 = vmatprep.subr.bf16.mxu0 %v1273
    %2524 = vmatpush1.bf16.msra.mxu0 %v1272
    %2525 = vmatprep.subr.bf16.mxu0 %v1276
    %2526 = vmatpush1.bf16.msra.mxu0 %v1275
    %2527 = vmatprep.subr.bf16.mxu0 %v1279
    %2528 = vmatpush1.bf16.msra.mxu0 %v1278
    %2529 = vmatprep.subr.bf16.mxu0 %v1282
    %2530 = vmatpush1.bf16.msra.mxu0 %v1281
    %2531 = vmatprep.subr.bf16.mxu0 %v1285
    %2532 = vmatpush1.bf16.msra.mxu0 %v1284
    %2533 = vmatprep.subr.bf16.mxu0 %v1288
    %2534 = vmatpush1.bf16.msra.mxu0 %v1287
    %2535 = vmatprep.mubr.bf16.mxu0 %v2502
    %2536 = vmatmul.mubr.bf16.gmra.mrb[0].mxu0 %v2501
    %v2537 = vpop.f32.mrb[0].mxu0
    %v2538 = vadd.f32 %v261, %v2537
    %v2539 = vpop.f32.mrb[0].mxu0
    %v2540 = vadd.f32 %v262, %v2539
    %v2541 = vpop.f32.mrb[0].mxu0
    %v2542 = vpop.f32.mrb[0].mxu0
    %2543 = vdwg.mxu0
    %2544 = vmatprep.subr.bf16.mxu0 0
    %2545 = vmatpush1.bf16.msra.mxu0 %v1244
    %2546 = vmatprep.subr.bf16.mxu0 0
    %2547 = vmatpush1.bf16.msra.mxu0 %v1247
    %2548 = vmatprep.subr.bf16.mxu0 0
    %2549 = vmatpush1.bf16.msra.mxu0 %v1250
    %2550 = vmatprep.subr.bf16.mxu0 0
    %2551 = vmatpush1.bf16.msra.mxu0 %v1253
    %2552 = vmatprep.subr.bf16.mxu0 0
    %2553 = vmatpush1.bf16.msra.mxu0 %v1256
    %2554 = vmatprep.subr.bf16.mxu0 0
    %2555 = vmatpush1.bf16.msra.mxu0 %v1259
    %2556 = vmatprep.subr.bf16.mxu0 0
    %2557 = vmatpush1.bf16.msra.mxu0 %v1262
    %2558 = vmatprep.subr.bf16.mxu0 0
    %2559 = vmatpush1.bf16.msra.mxu0 %v1265
    %2560 = vmatprep.subr.bf16.mxu0 0
    %2561 = vmatpush1.bf16.msra.mxu0 %v1268
    %2562 = vmatprep.subr.bf16.mxu0 0
    %2563 = vmatpush1.bf16.msra.mxu0 %v1271
    %2564 = vmatprep.subr.bf16.mxu0 0
    %2565 = vmatpush1.bf16.msra.mxu0 %v1274
    %2566 = vmatprep.subr.bf16.mxu0 0
    %2567 = vmatpush1.bf16.msra.mxu0 %v1277
    %2568 = vmatprep.subr.bf16.mxu0 0
    %2569 = vmatpush1.bf16.msra.mxu0 %v1280
    %2570 = vmatprep.subr.bf16.mxu0 0
    %2571 = vmatpush1.bf16.msra.mxu0 %v1283
    %2572 = vmatprep.subr.bf16.mxu0 0
    %2573 = vmatpush1.bf16.msra.mxu0 %v1286
    %2574 = vmatprep.subr.bf16.mxu0 0
    %2575 = vmatpush1.bf16.msra.mxu0 %v1289
    %2576 = vmatprep.mubr.bf16.mxu0 %v2502
    %2577 = vmatmul.mubr.bf16.gmra.mrb[0].mxu0 %v2501
    %v2578 = vpop.f32.mrb[0].mxu0
    %v2579 = vadd.f32 %v263, %v2578
    %v2580 = vpop.f32.mrb[0].mxu0
    %v2581 = vpop.f32.mrb[0].mxu0
    %v2582 = vpop.f32.mrb[0].mxu0
    %2583 = vdwg.mxu0
    %2584 = vmatprep.subr.bf16.mxu0 %v1580
    %2585 = vmatpush1.bf16.msra.mxu0 %v1579
    %2586 = vmatprep.subr.bf16.mxu0 %v1583
    %2587 = vmatpush1.bf16.msra.mxu0 %v1582
    %2588 = vmatprep.subr.bf16.mxu0 %v1586
    %2589 = vmatpush1.bf16.msra.mxu0 %v1585
    %2590 = vmatprep.subr.bf16.mxu0 %v1589
    %2591 = vmatpush1.bf16.msra.mxu0 %v1588
    %2592 = vmatprep.subr.bf16.mxu0 %v1592
    %2593 = vmatpush1.bf16.msra.mxu0 %v1591
    %2594 = vmatprep.subr.bf16.mxu0 %v1595
    %2595 = vmatpush1.bf16.msra.mxu0 %v1594
    %2596 = vmatprep.subr.bf16.mxu0 %v1598
    %2597 = vmatpush1.bf16.msra.mxu0 %v1597
    %2598 = vmatprep.subr.bf16.mxu0 %v1601
    %2599 = vmatpush1.bf16.msra.mxu0 %v1600
    %2600 = vmatprep.subr.bf16.mxu0 %v1604
    %2601 = vmatpush1.bf16.msra.mxu0 %v1603
    %2602 = vmatprep.subr.bf16.mxu0 %v1607
    %2603 = vmatpush1.bf16.msra.mxu0 %v1606
    %2604 = vmatprep.subr.bf16.mxu0 %v1610
    %2605 = vmatpush1.bf16.msra.mxu0 %v1609
    %2606 = vmatprep.subr.bf16.mxu0 %v1613
    %2607 = vmatpush1.bf16.msra.mxu0 %v1612
    %2608 = vmatprep.subr.bf16.mxu0 %v1616
    %2609 = vmatpush1.bf16.msra.mxu0 %v1615
    %2610 = vmatprep.subr.bf16.mxu0 %v1619
    %2611 = vmatpush1.bf16.msra.mxu0 %v1618
    %2612 = vmatprep.subr.bf16.mxu0 %v1622
    %2613 = vmatpush1.bf16.msra.mxu0 %v1621
    %2614 = vmatprep.subr.bf16.mxu0 %v1625
    %2615 = vmatpush1.bf16.msra.mxu0 %v1624
    %2616 = vmatprep.mubr.bf16.mxu0 %v2386
    %2617 = vmatmul.mubr.bf16.gmra.mrb[0].mxu0 %v2385
    %v2618 = vpop.f32.mrb[0].mxu0
    %v2619 = vadd.f32 %v264, %v2618
    %v2620 = vpop.f32.mrb[0].mxu0
    %v2621 = vadd.f32 %v265, %v2620
    %v2622 = vpop.f32.mrb[0].mxu0
    %v2623 = vpop.f32.mrb[0].mxu0
    %2624 = vdwg.mxu0
    %2625 = vmatprep.subr.bf16.mxu0 0
    %2626 = vmatpush1.bf16.msra.mxu0 %v1581
    %2627 = vmatprep.subr.bf16.mxu0 0
    %2628 = vmatpush1.bf16.msra.mxu0 %v1584
    %2629 = vmatprep.subr.bf16.mxu0 0
    %2630 = vmatpush1.bf16.msra.mxu0 %v1587
    %2631 = vmatprep.subr.bf16.mxu0 0
    %2632 = vmatpush1.bf16.msra.mxu0 %v1590
    %2633 = vmatprep.subr.bf16.mxu0 0
    %2634 = vmatpush1.bf16.msra.mxu0 %v1593
    %2635 = vmatprep.subr.bf16.mxu0 0
    %2636 = vmatpush1.bf16.msra.mxu0 %v1596
    %2637 = vmatprep.subr.bf16.mxu0 0
    %2638 = vmatpush1.bf16.msra.mxu0 %v1599
    %2639 = vmatprep.subr.bf16.mxu0 0
    %2640 = vmatpush1.bf16.msra.mxu0 %v1602
    %2641 = vmatprep.subr.bf16.mxu0 0
    %2642 = vmatpush1.bf16.msra.mxu0 %v1605
    %2643 = vmatprep.subr.bf16.mxu0 0
    %2644 = vmatpush1.bf16.msra.mxu0 %v1608
    %2645 = vmatprep.subr.bf16.mxu0 0
    %2646 = vmatpush1.bf16.msra.mxu0 %v1611
    %2647 = vmatprep.subr.bf16.mxu0 0
    %2648 = vmatpush1.bf16.msra.mxu0 %v1614
    %2649 = vmatprep.subr.bf16.mxu0 0
    %2650 = vmatpush1.bf16.msra.mxu0 %v1617
    %2651 = vmatprep.subr.bf16.mxu0 0
    %2652 = vmatpush1.bf16.msra.mxu0 %v1620
    %2653 = vmatprep.subr.bf16.mxu0 0
    %2654 = vmatpush1.bf16.msra.mxu0 %v1623
    %2655 = vmatprep.subr.bf16.mxu0 0
    %2656 = vmatpush1.bf16.msra.mxu0 %v1626
    %2657 = vmatprep.mubr.bf16.mxu0 %v2386
    %2658 = vmatmul.mubr.bf16.gmra.mrb[0].mxu0 %v2385
    %v2659 = vpop.f32.mrb[0].mxu0
    %v2660 = vadd.f32 %v266, %v2659
    %v2661 = vpop.f32.mrb[0].mxu0
    %v2662 = vpop.f32.mrb[0].mxu0
    %v2663 = vpop.f32.mrb[0].mxu0
    %2664 = vdwg.mxu0
    %v2665 = vadd.f32 %v2538, %v2619
    %v2666 = vxor.u32 %v2665, 2147483648
    %v2667 = vmul.f32 %v2666, 1.442695
    %v2668 = vpow.pop %v2667
    %v2669 = vadd.f32 %v2668, 1.0
    %v2670 = vrcp.pop %v2669
    %v2671 = vmul.f32 1.0, %v2670
    %v2672 = vadd.f32 %v2540, %v2621
    %v2673 = vxor.u32 %v2672, 2147483648
    %v2674 = vmul.f32 %v2673, 1.442695
    %v2675 = vpow.pop %v2674
    %v2676 = vadd.f32 %v2675, 1.0
    %v2677 = vrcp.pop %v2676
    %v2678 = vmul.f32 1.0, %v2677
    %v2679 = vmul.f32 %v2671, %v2660
    %v2680 = vadd.f32 %v2579, %v2679
    %v2681 = vtanh.pop %v2680
    %v2682 = vsub.f32 1.0, %v2678
    %v2683 = vmul.f32 %v2682, %v2681
    %v2684 = vmul.f32 %v2678, %v2382
    %v2685 = vadd.f32 %v2683, %v2684
    %v2686 = vmul.f32 %v2685, %v267
    %v2687 = vmul.f32 %v2685, %v268
    %v2688 = vpack.c.bf16 %v2686, %v2686
    %v2689 = vpack.c.bf16 %v2687, %v2687
    %2690 = vst [vmem:[#allocation2 + $0x30] sm:$0xff] %v2686
    %2691 = vst [vmem:[#allocation2 + $0x38] sm:$0xff] %v2687
    %2692 = vmatprep.subr.bf16.mxu0 %v841
    %2693 = vmatpush1.bf16.msra.mxu0 %v840
    %2694 = vmatprep.subr.bf16.mxu0 %v845
    %2695 = vmatpush1.bf16.msra.mxu0 %v844
    %2696 = vmatprep.subr.bf16.mxu0 %v849
    %2697 = vmatpush1.bf16.msra.mxu0 %v848
    %2698 = vmatprep.subr.bf16.mxu0 %v853
    %2699 = vmatpush1.bf16.msra.mxu0 %v852
    %2700 = vmatprep.subr.bf16.mxu0 %v857
    %2701 = vmatpush1.bf16.msra.mxu0 %v856
    %2702 = vmatprep.subr.bf16.mxu0 %v861
    %2703 = vmatpush1.bf16.msra.mxu0 %v860
    %2704 = vmatprep.subr.bf16.mxu0 %v865
    %2705 = vmatpush1.bf16.msra.mxu0 %v864
    %2706 = vmatprep.subr.bf16.mxu0 %v869
    %2707 = vmatpush1.bf16.msra.mxu0 %v868
    %2708 = vmatprep.subr.bf16.mxu0 %v873
    %2709 = vmatpush1.bf16.msra.mxu0 %v872
    %2710 = vmatprep.subr.bf16.mxu0 %v877
    %2711 = vmatpush1.bf16.msra.mxu0 %v876
    %2712 = vmatprep.subr.bf16.mxu0 %v881
    %2713 = vmatpush1.bf16.msra.mxu0 %v880
    %2714 = vmatprep.subr.bf16.mxu0 %v885
    %2715 = vmatpush1.bf16.msra.mxu0 %v884
    %2716 = vmatprep.subr.bf16.mxu0 %v889
    %2717 = vmatpush1.bf16.msra.mxu0 %v888
    %2718 = vmatprep.subr.bf16.mxu0 %v893
    %2719 = vmatpush1.bf16.msra.mxu0 %v892
    %2720 = vmatprep.subr.bf16.mxu0 %v897
    %2721 = vmatpush1.bf16.msra.mxu0 %v896
    %2722 = vmatprep.subr.bf16.mxu0 %v901
    %2723 = vmatpush1.bf16.msra.mxu0 %v900
    %2724 = vmatprep.mubr.bf16.mxu0 %v2502
    %2725 = vmatmul.mubr.bf16.gmra.mrb[0].mxu0 %v2501
    %v2726 = vpop.f32.mrb[0].mxu0
    %v2727 = vadd.f32 0.0, %v2726
    %v2728 = vpop.f32.mrb[0].mxu0
    %v2729 = vadd.f32 0.0, %v2728
    %v2730 = vpop.f32.mrb[0].mxu0
    %v2731 = vpop.f32.mrb[0].mxu0
    %2732 = vdwg.mxu0
    %2733 = vmatprep.subr.bf16.mxu0 %v843
    %2734 = vmatpush1.bf16.msra.mxu0 %v842
    %2735 = vmatprep.subr.bf16.mxu0 %v847
    %2736 = vmatpush1.bf16.msra.mxu0 %v846
    %2737 = vmatprep.subr.bf16.mxu0 %v851
    %2738 = vmatpush1.bf16.msra.mxu0 %v850
    %2739 = vmatprep.subr.bf16.mxu0 %v855
    %2740 = vmatpush1.bf16.msra.mxu0 %v854
    %2741 = vmatprep.subr.bf16.mxu0 %v859
    %2742 = vmatpush1.bf16.msra.mxu0 %v858
    %2743 = vmatprep.subr.bf16.mxu0 %v863
    %2744 = vmatpush1.bf16.msra.mxu0 %v862
    %2745 = vmatprep.subr.bf16.mxu0 %v867
    %2746 = vmatpush1.bf16.msra.mxu0 %v866
    %2747 = vmatprep.subr.bf16.mxu0 %v871
    %2748 = vmatpush1.bf16.msra.mxu0 %v870
    %2749 = vmatprep.subr.bf16.mxu0 %v875
    %2750 = vmatpush1.bf16.msra.mxu0 %v874
    %2751 = vmatprep.subr.bf16.mxu0 %v879
    %2752 = vmatpush1.bf16.msra.mxu0 %v878
    %2753 = vmatprep.subr.bf16.mxu0 %v883
    %2754 = vmatpush1.bf16.msra.mxu0 %v882
    %2755 = vmatprep.subr.bf16.mxu0 %v887
    %2756 = vmatpush1.bf16.msra.mxu0 %v886
    %2757 = vmatprep.subr.bf16.mxu0 %v891
    %2758 = vmatpush1.bf16.msra.mxu0 %v890
    %2759 = vmatprep.subr.bf16.mxu0 %v895
    %2760 = vmatpush1.bf16.msra.mxu0 %v894
    %2761 = vmatprep.subr.bf16.mxu0 %v899
    %2762 = vmatpush1.bf16.msra.mxu0 %v898
    %2763 = vmatprep.subr.bf16.mxu0 %v903
    %2764 = vmatpush1.bf16.msra.mxu0 %v902
    %2765 = vmatprep.mubr.bf16.mxu0 %v2502
    %2766 = vmatmul.mubr.bf16.gmra.mrb[0].mxu0 %v2501
    %v2767 = vpop.f32.mrb[0].mxu0
    %v2768 = vadd.f32 0.0, %v2767
    %v2769 = vpop.f32.mrb[0].mxu0
    %v2770 = vadd.f32 0.0, %v2769
    %v2771 = vpop.f32.mrb[0].mxu0
    %v2772 = vpop.f32.mrb[0].mxu0
    %2773 = vdwg.mxu0
    %v2774 = vadd.f32 %v513, %v2727
    %v2775 = vadd.f32 %v515, %v2729
    %v2776 = vadd.f32 %v626, %v2768
    %v2777 = vadd.f32 %v628, %v2770
    %v2778 = vxor.u32 %v2774, 2147483648
    %v2779 = vmul.f32 %v2778, 1.442695
    %v2780 = vpow.pop %v2779
    %v2781 = vadd.f32 %v2780, 1.0
    %v2782 = vrcp.pop %v2781
    %v2783 = vmul.f32 1.0, %v2782
    %v2784 = vxor.u32 %v2775, 2147483648
    %v2785 = vmul.f32 %v2784, 1.442695
    %v2786 = vpow.pop %v2785
    %v2787 = vadd.f32 %v2786, 1.0
    %v2788 = vrcp.pop %v2787
    %v2789 = vmul.f32 1.0, %v2788
    %v2790 = vtanh.pop %v2776
    %v2791 = vxor.u32 %v2777, 2147483648
    %v2792 = vmul.f32 %v2791, 1.442695
    %v2793 = vpow.pop %v2792
    %v2794 = vadd.f32 %v2793, 1.0
    %v2795 = vrcp.pop %v2794
    %v2796 = vmul.f32 1.0, %v2795
    %v2797 = vmul.f32 %v2789, %v2496
    %v2798 = vmul.f32 %v2783, %v2790
    %v2799 = vadd.f32 %v2797, %v2798
    %v2800 = vtanh.pop %v2799
    %v2801 = vmul.f32 %v2796, %v2800
    %v2802 = vmul.f32 %v2801, %v267
    %v2803 = vmul.f32 %v2801, %v268
    %v2804 = vpack.c.bf16 %v2802, %v2802
    %v2805 = vpack.c.bf16 %v2803, %v2803
    %2806 = vmatprep.subr.bf16.mxu0 %v1243
    %2807 = vmatpush1.bf16.msra.mxu0 %v1242
    %2808 = vmatprep.subr.bf16.mxu0 %v1246
    %2809 = vmatpush1.bf16.msra.mxu0 %v1245
    %2810 = vmatprep.subr.bf16.mxu0 %v1249
    %2811 = vmatpush1.bf16.msra.mxu0 %v1248
    %2812 = vmatprep.subr.bf16.mxu0 %v1252
    %2813 = vmatpush1.bf16.msra.mxu0 %v1251
    %2814 = vmatprep.subr.bf16.mxu0 %v1255
    %2815 = vmatpush1.bf16.msra.mxu0 %v1254
    %2816 = vmatprep.subr.bf16.mxu0 %v1258
    %2817 = vmatpush1.bf16.msra.mxu0 %v1257
    %2818 = vmatprep.subr.bf16.mxu0 %v1261
    %2819 = vmatpush1.bf16.msra.mxu0 %v1260
    %2820 = vmatprep.subr.bf16.mxu0 %v1264
    %2821 = vmatpush1.bf16.msra.mxu0 %v1263
    %2822 = vmatprep.subr.bf16.mxu0 %v1267
    %2823 = vmatpush1.bf16.msra.mxu0 %v1266
    %2824 = vmatprep.subr.bf16.mxu0 %v1270
    %2825 = vmatpush1.bf16.msra.mxu0 %v1269
    %2826 = vmatprep.subr.bf16.mxu0 %v1273
    %2827 = vmatpush1.bf16.msra.mxu0 %v1272
    %2828 = vmatprep.subr.bf16.mxu0 %v1276
    %2829 = vmatpush1.bf16.msra.mxu0 %v1275
    %2830 = vmatprep.subr.bf16.mxu0 %v1279
    %2831 = vmatpush1.bf16.msra.mxu0 %v1278
    %2832 = vmatprep.subr.bf16.mxu0 %v1282
    %2833 = vmatpush1.bf16.msra.mxu0 %v1281
    %2834 = vmatprep.subr.bf16.mxu0 %v1285
    %2835 = vmatpush1.bf16.msra.mxu0 %v1284
    %2836 = vmatprep.subr.bf16.mxu0 %v1288
    %2837 = vmatpush1.bf16.msra.mxu0 %v1287
    %2838 = vmatprep.mubr.bf16.mxu0 %v2805
    %2839 = vmatmul.mubr.bf16.gmra.mrb[0].mxu0 %v2804
    %v2840 = vpop.f32.mrb[0].mxu0
    %v2841 = vadd.f32 %v261, %v2840
    %v2842 = vpop.f32.mrb[0].mxu0
    %v2843 = vadd.f32 %v262, %v2842
    %v2844 = vpop.f32.mrb[0].mxu0
    %v2845 = vpop.f32.mrb[0].mxu0
    %2846 = vdwg.mxu0
    %2847 = vmatprep.subr.bf16.mxu0 0
    %2848 = vmatpush1.bf16.msra.mxu0 %v1244
    %2849 = vmatprep.subr.bf16.mxu0 0
    %2850 = vmatpush1.bf16.msra.mxu0 %v1247
    %2851 = vmatprep.subr.bf16.mxu0 0
    %2852 = vmatpush1.bf16.msra.mxu0 %v1250
    %2853 = vmatprep.subr.bf16.mxu0 0
    %2854 = vmatpush1.bf16.msra.mxu0 %v1253
    %2855 = vmatprep.subr.bf16.mxu0 0
    %2856 = vmatpush1.bf16.msra.mxu0 %v1256
    %2857 = vmatprep.subr.bf16.mxu0 0
    %2858 = vmatpush1.bf16.msra.mxu0 %v1259
    %2859 = vmatprep.subr.bf16.mxu0 0
    %2860 = vmatpush1.bf16.msra.mxu0 %v1262
    %2861 = vmatprep.subr.bf16.mxu0 0
    %2862 = vmatpush1.bf16.msra.mxu0 %v1265
    %2863 = vmatprep.subr.bf16.mxu0 0
    %2864 = vmatpush1.bf16.msra.mxu0 %v1268
    %2865 = vmatprep.subr.bf16.mxu0 0
    %2866 = vmatpush1.bf16.msra.mxu0 %v1271
    %2867 = vmatprep.subr.bf16.mxu0 0
    %2868 = vmatpush1.bf16.msra.mxu0 %v1274
    %2869 = vmatprep.subr.bf16.mxu0 0
    %2870 = vmatpush1.bf16.msra.mxu0 %v1277
    %2871 = vmatprep.subr.bf16.mxu0 0
    %2872 = vmatpush1.bf16.msra.mxu0 %v1280
    %2873 = vmatprep.subr.bf16.mxu0 0
    %2874 = vmatpush1.bf16.msra.mxu0 %v1283
    %2875 = vmatprep.subr.bf16.mxu0 0
    %2876 = vmatpush1.bf16.msra.mxu0 %v1286
    %2877 = vmatprep.subr.bf16.mxu0 0
    %2878 = vmatpush1.bf16.msra.mxu0 %v1289
    %2879 = vmatprep.mubr.bf16.mxu0 %v2805
    %2880 = vmatmul.mubr.bf16.gmra.mrb[0].mxu0 %v2804
    %v2881 = vpop.f32.mrb[0].mxu0
    %v2882 = vadd.f32 %v263, %v2881
    %v2883 = vpop.f32.mrb[0].mxu0
    %v2884 = vpop.f32.mrb[0].mxu0
    %v2885 = vpop.f32.mrb[0].mxu0
    %2886 = vdwg.mxu0
    %2887 = vmatprep.subr.bf16.mxu0 %v1580
    %2888 = vmatpush1.bf16.msra.mxu0 %v1579
    %2889 = vmatprep.subr.bf16.mxu0 %v1583
    %2890 = vmatpush1.bf16.msra.mxu0 %v1582
    %2891 = vmatprep.subr.bf16.mxu0 %v1586
    %2892 = vmatpush1.bf16.msra.mxu0 %v1585
    %2893 = vmatprep.subr.bf16.mxu0 %v1589
    %2894 = vmatpush1.bf16.msra.mxu0 %v1588
    %2895 = vmatprep.subr.bf16.mxu0 %v1592
    %2896 = vmatpush1.bf16.msra.mxu0 %v1591
    %2897 = vmatprep.subr.bf16.mxu0 %v1595
    %2898 = vmatpush1.bf16.msra.mxu0 %v1594
    %2899 = vmatprep.subr.bf16.mxu0 %v1598
    %2900 = vmatpush1.bf16.msra.mxu0 %v1597
    %2901 = vmatprep.subr.bf16.mxu0 %v1601
    %2902 = vmatpush1.bf16.msra.mxu0 %v1600
    %2903 = vmatprep.subr.bf16.mxu0 %v1604
    %2904 = vmatpush1.bf16.msra.mxu0 %v1603
    %2905 = vmatprep.subr.bf16.mxu0 %v1607
    %2906 = vmatpush1.bf16.msra.mxu0 %v1606
    %2907 = vmatprep.subr.bf16.mxu0 %v1610
    %2908 = vmatpush1.bf16.msra.mxu0 %v1609
    %2909 = vmatprep.subr.bf16.mxu0 %v1613
    %2910 = vmatpush1.bf16.msra.mxu0 %v1612
    %2911 = vmatprep.subr.bf16.mxu0 %v1616
    %2912 = vmatpush1.bf16.msra.mxu0 %v1615
    %2913 = vmatprep.subr.bf16.mxu0 %v1619
    %2914 = vmatpush1.bf16.msra.mxu0 %v1618
    %2915 = vmatprep.subr.bf16.mxu0 %v1622
    %2916 = vmatpush1.bf16.msra.mxu0 %v1621
    %2917 = vmatprep.subr.bf16.mxu0 %v1625
    %2918 = vmatpush1.bf16.msra.mxu0 %v1624
    %2919 = vmatprep.mubr.bf16.mxu0 %v2689
    %2920 = vmatmul.mubr.bf16.gmra.mrb[0].mxu0 %v2688
    %v2921 = vpop.f32.mrb[0].mxu0
    %v2922 = vadd.f32 %v264, %v2921
    %v2923 = vpop.f32.mrb[0].mxu0
    %v2924 = vadd.f32 %v265, %v2923
    %v2925 = vpop.f32.mrb[0].mxu0
    %v2926 = vpop.f32.mrb[0].mxu0
    %2927 = vdwg.mxu0
    %2928 = vmatprep.subr.bf16.mxu0 0
    %2929 = vmatpush1.bf16.msra.mxu0 %v1581
    %2930 = vmatprep.subr.bf16.mxu0 0
    %2931 = vmatpush1.bf16.msra.mxu0 %v1584
    %2932 = vmatprep.subr.bf16.mxu0 0
    %2933 = vmatpush1.bf16.msra.mxu0 %v1587
    %2934 = vmatprep.subr.bf16.mxu0 0
    %2935 = vmatpush1.bf16.msra.mxu0 %v1590
    %2936 = vmatprep.subr.bf16.mxu0 0
    %2937 = vmatpush1.bf16.msra.mxu0 %v1593
    %2938 = vmatprep.subr.bf16.mxu0 0
    %2939 = vmatpush1.bf16.msra.mxu0 %v1596
    %2940 = vmatprep.subr.bf16.mxu0 0
    %2941 = vmatpush1.bf16.msra.mxu0 %v1599
    %2942 = vmatprep.subr.bf16.mxu0 0
    %2943 = vmatpush1.bf16.msra.mxu0 %v1602
    %2944 = vmatprep.subr.bf16.mxu0 0
    %2945 = vmatpush1.bf16.msra.mxu0 %v1605
    %2946 = vmatprep.subr.bf16.mxu0 0
    %2947 = vmatpush1.bf16.msra.mxu0 %v1608
    %2948 = vmatprep.subr.bf16.mxu0 0
    %2949 = vmatpush1.bf16.msra.mxu0 %v1611
    %2950 = vmatprep.subr.bf16.mxu0 0
    %2951 = vmatpush1.bf16.msra.mxu0 %v1614
    %2952 = vmatprep.subr.bf16.mxu0 0
    %2953 = vmatpush1.bf16.msra.mxu0 %v1617
    %2954 = vmatprep.subr.bf16.mxu0 0
    %2955 = vmatpush1.bf16.msra.mxu0 %v1620
    %2956 = vmatprep.subr.bf16.mxu0 0
    %2957 = vmatpush1.bf16.msra.mxu0 %v1623
    %2958 = vmatprep.subr.bf16.mxu0 0
    %2959 = vmatpush1.bf16.msra.mxu0 %v1626
    %2960 = vmatprep.mubr.bf16.mxu0 %v2689
    %2961 = vmatmul.mubr.bf16.gmra.mrb[0].mxu0 %v2688
    %v2962 = vpop.f32.mrb[0].mxu0
    %v2963 = vadd.f32 %v266, %v2962
    %v2964 = vpop.f32.mrb[0].mxu0
    %v2965 = vpop.f32.mrb[0].mxu0
    %v2966 = vpop.f32.mrb[0].mxu0
    %2967 = vdwg.mxu0
    %v2968 = vadd.f32 %v2841, %v2922
    %v2969 = vxor.u32 %v2968, 2147483648
    %v2970 = vmul.f32 %v2969, 1.442695
    %v2971 = vpow.pop %v2970
    %v2972 = vadd.f32 %v2971, 1.0
    %v2973 = vrcp.pop %v2972
    %v2974 = vmul.f32 1.0, %v2973
    %v2975 = vadd.f32 %v2843, %v2924
    %v2976 = vxor.u32 %v2975, 2147483648
    %v2977 = vmul.f32 %v2976, 1.442695
    %v2978 = vpow.pop %v2977
    %v2979 = vadd.f32 %v2978, 1.0
    %v2980 = vrcp.pop %v2979
    %v2981 = vmul.f32 1.0, %v2980
    %v2982 = vmul.f32 %v2974, %v2963
    %v2983 = vadd.f32 %v2882, %v2982
    %v2984 = vtanh.pop %v2983
    %v2985 = vsub.f32 1.0, %v2981
    %v2986 = vmul.f32 %v2985, %v2984
    %v2987 = vmul.f32 %v2981, %v2685
    %v2988 = vadd.f32 %v2986, %v2987
    %v2989 = vmul.f32 %v2988, %v267
    %v2990 = vmul.f32 %v2988, %v268
    %v2991 = vpack.c.bf16 %v2989, %v2989
    %v2992 = vpack.c.bf16 %v2990, %v2990
    %2993 = vst [vmem:[#allocation2 + $0x40] sm:$0xff] %v2989
    %2994 = vst [vmem:[#allocation2 + $0x48] sm:$0xff] %v2990
    %2995 = vmatprep.subr.bf16.mxu0 %v841
    %2996 = vmatpush1.bf16.msra.mxu0 %v840
    %2997 = vmatprep.subr.bf16.mxu0 %v845
    %2998 = vmatpush1.bf16.msra.mxu0 %v844
    %2999 = vmatprep.subr.bf16.mxu0 %v849
    %3000 = vmatpush1.bf16.msra.mxu0 %v848
    %3001 = vmatprep.subr.bf16.mxu0 %v853
    %3002 = vmatpush1.bf16.msra.mxu0 %v852
    %3003 = vmatprep.subr.bf16.mxu0 %v857
    %3004 = vmatpush1.bf16.msra.mxu0 %v856
    %3005 = vmatprep.subr.bf16.mxu0 %v861
    %3006 = vmatpush1.bf16.msra.mxu0 %v860
    %3007 = vmatprep.subr.bf16.mxu0 %v865
    %3008 = vmatpush1.bf16.msra.mxu0 %v864
    %3009 = vmatprep.subr.bf16.mxu0 %v869
    %3010 = vmatpush1.bf16.msra.mxu0 %v868
    %3011 = vmatprep.subr.bf16.mxu0 %v873
    %3012 = vmatpush1.bf16.msra.mxu0 %v872
    %3013 = vmatprep.subr.bf16.mxu0 %v877
    %3014 = vmatpush1.bf16.msra.mxu0 %v876
    %3015 = vmatprep.subr.bf16.mxu0 %v881
    %3016 = vmatpush1.bf16.msra.mxu0 %v880
    %3017 = vmatprep.subr.bf16.mxu0 %v885
    %3018 = vmatpush1.bf16.msra.mxu0 %v884
    %3019 = vmatprep.subr.bf16.mxu0 %v889
    %3020 = vmatpush1.bf16.msra.mxu0 %v888
    %3021 = vmatprep.subr.bf16.mxu0 %v893
    %3022 = vmatpush1.bf16.msra.mxu0 %v892
    %3023 = vmatprep.subr.bf16.mxu0 %v897
    %3024 = vmatpush1.bf16.msra.mxu0 %v896
    %3025 = vmatprep.subr.bf16.mxu0 %v901
    %3026 = vmatpush1.bf16.msra.mxu0 %v900
    %3027 = vmatprep.mubr.bf16.mxu0 %v2805
    %3028 = vmatmul.mubr.bf16.gmra.mrb[0].mxu0 %v2804
    %v3029 = vpop.f32.mrb[0].mxu0
    %v3030 = vadd.f32 0.0, %v3029
    %v3031 = vpop.f32.mrb[0].mxu0
    %v3032 = vadd.f32 0.0, %v3031
    %v3033 = vpop.f32.mrb[0].mxu0
    %v3034 = vpop.f32.mrb[0].mxu0
    %3035 = vdwg.mxu0
    %3036 = vmatprep.subr.bf16.mxu0 %v843
    %3037 = vmatpush1.bf16.msra.mxu0 %v842
    %3038 = vmatprep.subr.bf16.mxu0 %v847
    %3039 = vmatpush1.bf16.msra.mxu0 %v846
    %3040 = vmatprep.subr.bf16.mxu0 %v851
    %3041 = vmatpush1.bf16.msra.mxu0 %v850
    %3042 = vmatprep.subr.bf16.mxu0 %v855
    %3043 = vmatpush1.bf16.msra.mxu0 %v854
    %3044 = vmatprep.subr.bf16.mxu0 %v859
    %3045 = vmatpush1.bf16.msra.mxu0 %v858
    %3046 = vmatprep.subr.bf16.mxu0 %v863
    %3047 = vmatpush1.bf16.msra.mxu0 %v862
    %3048 = vmatprep.subr.bf16.mxu0 %v867
    %3049 = vmatpush1.bf16.msra.mxu0 %v866
    %3050 = vmatprep.subr.bf16.mxu0 %v871
    %3051 = vmatpush1.bf16.msra.mxu0 %v870
    %3052 = vmatprep.subr.bf16.mxu0 %v875
    %3053 = vmatpush1.bf16.msra.mxu0 %v874
    %3054 = vmatprep.subr.bf16.mxu0 %v879
    %3055 = vmatpush1.bf16.msra.mxu0 %v878
    %3056 = vmatprep.subr.bf16.mxu0 %v883
    %3057 = vmatpush1.bf16.msra.mxu0 %v882
    %3058 = vmatprep.subr.bf16.mxu0 %v887
    %3059 = vmatpush1.bf16.msra.mxu0 %v886
    %3060 = vmatprep.subr.bf16.mxu0 %v891
    %3061 = vmatpush1.bf16.msra.mxu0 %v890
    %3062 = vmatprep.subr.bf16.mxu0 %v895
    %3063 = vmatpush1.bf16.msra.mxu0 %v894
    %3064 = vmatprep.subr.bf16.mxu0 %v899
    %3065 = vmatpush1.bf16.msra.mxu0 %v898
    %3066 = vmatprep.subr.bf16.mxu0 %v903
    %3067 = vmatpush1.bf16.msra.mxu0 %v902
    %3068 = vmatprep.mubr.bf16.mxu0 %v2805
    %3069 = vmatmul.mubr.bf16.gmra.mrb[0].mxu0 %v2804
    %v3070 = vpop.f32.mrb[0].mxu0
    %v3071 = vadd.f32 0.0, %v3070
    %v3072 = vpop.f32.mrb[0].mxu0
    %v3073 = vadd.f32 0.0, %v3072
    %v3074 = vpop.f32.mrb[0].mxu0
    %v3075 = vpop.f32.mrb[0].mxu0
    %3076 = vdwg.mxu0
    %v3077 = vadd.f32 %v519, %v3030
    %v3078 = vadd.f32 %v521, %v3032
    %v3079 = vadd.f32 %v632, %v3071
    %v3080 = vadd.f32 %v634, %v3073
    %v3081 = vxor.u32 %v3077, 2147483648
    %v3082 = vmul.f32 %v3081, 1.442695
    %v3083 = vpow.pop %v3082
    %v3084 = vadd.f32 %v3083, 1.0
    %v3085 = vrcp.pop %v3084
    %v3086 = vmul.f32 1.0, %v3085
    %v3087 = vxor.u32 %v3078, 2147483648
    %v3088 = vmul.f32 %v3087, 1.442695
    %v3089 = vpow.pop %v3088
    %v3090 = vadd.f32 %v3089, 1.0
    %v3091 = vrcp.pop %v3090
    %v3092 = vmul.f32 1.0, %v3091
    %v3093 = vtanh.pop %v3079
    %v3094 = vxor.u32 %v3080, 2147483648
    %v3095 = vmul.f32 %v3094, 1.442695
    %v3096 = vpow.pop %v3095
    %v3097 = vadd.f32 %v3096, 1.0
    %v3098 = vrcp.pop %v3097
    %v3099 = vmul.f32 1.0, %v3098
    %v3100 = vmul.f32 %v3092, %v2799
    %v3101 = vmul.f32 %v3086, %v3093
    %v3102 = vadd.f32 %v3100, %v3101
    %v3103 = vtanh.pop %v3102
    %v3104 = vmul.f32 %v3099, %v3103
    %v3105 = vmul.f32 %v3104, %v267
    %v3106 = vmul.f32 %v3104, %v268
    %v3107 = vpack.c.bf16 %v3105, %v3105
    %v3108 = vpack.c.bf16 %v3106, %v3106
    %3109 = vmatprep.subr.bf16.mxu0 %v1243
    %3110 = vmatpush1.bf16.msra.mxu0 %v1242
    %3111 = vmatprep.subr.bf16.mxu0 %v1246
    %3112 = vmatpush1.bf16.msra.mxu0 %v1245
    %3113 = vmatprep.subr.bf16.mxu0 %v1249
    %3114 = vmatpush1.bf16.msra.mxu0 %v1248
    %3115 = vmatprep.subr.bf16.mxu0 %v1252
    %3116 = vmatpush1.bf16.msra.mxu0 %v1251
    %3117 = vmatprep.subr.bf16.mxu0 %v1255
    %3118 = vmatpush1.bf16.msra.mxu0 %v1254
    %3119 = vmatprep.subr.bf16.mxu0 %v1258
    %3120 = vmatpush1.bf16.msra.mxu0 %v1257
    %3121 = vmatprep.subr.bf16.mxu0 %v1261
    %3122 = vmatpush1.bf16.msra.mxu0 %v1260
    %3123 = vmatprep.subr.bf16.mxu0 %v1264
    %3124 = vmatpush1.bf16.msra.mxu0 %v1263
    %3125 = vmatprep.subr.bf16.mxu0 %v1267
    %3126 = vmatpush1.bf16.msra.mxu0 %v1266
    %3127 = vmatprep.subr.bf16.mxu0 %v1270
    %3128 = vmatpush1.bf16.msra.mxu0 %v1269
    %3129 = vmatprep.subr.bf16.mxu0 %v1273
    %3130 = vmatpush1.bf16.msra.mxu0 %v1272
    %3131 = vmatprep.subr.bf16.mxu0 %v1276
    %3132 = vmatpush1.bf16.msra.mxu0 %v1275
    %3133 = vmatprep.subr.bf16.mxu0 %v1279
    %3134 = vmatpush1.bf16.msra.mxu0 %v1278
    %3135 = vmatprep.subr.bf16.mxu0 %v1282
    %3136 = vmatpush1.bf16.msra.mxu0 %v1281
    %3137 = vmatprep.subr.bf16.mxu0 %v1285
    %3138 = vmatpush1.bf16.msra.mxu0 %v1284
    %3139 = vmatprep.subr.bf16.mxu0 %v1288
    %3140 = vmatpush1.bf16.msra.mxu0 %v1287
    %3141 = vmatprep.mubr.bf16.mxu0 %v3108
    %3142 = vmatmul.mubr.bf16.gmra.mrb[0].mxu0 %v3107
    %v3143 = vpop.f32.mrb[0].mxu0
    %v3144 = vadd.f32 %v261, %v3143
    %v3145 = vpop.f32.mrb[0].mxu0
    %v3146 = vadd.f32 %v262, %v3145
    %v3147 = vpop.f32.mrb[0].mxu0
    %v3148 = vpop.f32.mrb[0].mxu0
    %3149 = vdwg.mxu0
    %3150 = vmatprep.subr.bf16.mxu0 0
    %3151 = vmatpush1.bf16.msra.mxu0 %v1244
    %3152 = vmatprep.subr.bf16.mxu0 0
    %3153 = vmatpush1.bf16.msra.mxu0 %v1247
    %3154 = vmatprep.subr.bf16.mxu0 0
    %3155 = vmatpush1.bf16.msra.mxu0 %v1250
    %3156 = vmatprep.subr.bf16.mxu0 0
    %3157 = vmatpush1.bf16.msra.mxu0 %v1253
    %3158 = vmatprep.subr.bf16.mxu0 0
    %3159 = vmatpush1.bf16.msra.mxu0 %v1256
    %3160 = vmatprep.subr.bf16.mxu0 0
    %3161 = vmatpush1.bf16.msra.mxu0 %v1259
    %3162 = vmatprep.subr.bf16.mxu0 0
    %3163 = vmatpush1.bf16.msra.mxu0 %v1262
    %3164 = vmatprep.subr.bf16.mxu0 0
    %3165 = vmatpush1.bf16.msra.mxu0 %v1265
    %3166 = vmatprep.subr.bf16.mxu0 0
    %3167 = vmatpush1.bf16.msra.mxu0 %v1268
    %3168 = vmatprep.subr.bf16.mxu0 0
    %3169 = vmatpush1.bf16.msra.mxu0 %v1271
    %3170 = vmatprep.subr.bf16.mxu0 0
    %3171 = vmatpush1.bf16.msra.mxu0 %v1274
    %3172 = vmatprep.subr.bf16.mxu0 0
    %3173 = vmatpush1.bf16.msra.mxu0 %v1277
    %3174 = vmatprep.subr.bf16.mxu0 0
    %3175 = vmatpush1.bf16.msra.mxu0 %v1280
    %3176 = vmatprep.subr.bf16.mxu0 0
    %3177 = vmatpush1.bf16.msra.mxu0 %v1283
    %3178 = vmatprep.subr.bf16.mxu0 0
    %3179 = vmatpush1.bf16.msra.mxu0 %v1286
    %3180 = vmatprep.subr.bf16.mxu0 0
    %3181 = vmatpush1.bf16.msra.mxu0 %v1289
    %3182 = vmatprep.mubr.bf16.mxu0 %v3108
    %3183 = vmatmul.mubr.bf16.gmra.mrb[0].mxu0 %v3107
    %v3184 = vpop.f32.mrb[0].mxu0
    %v3185 = vadd.f32 %v263, %v3184
    %v3186 = vpop.f32.mrb[0].mxu0
    %v3187 = vpop.f32.mrb[0].mxu0
    %v3188 = vpop.f32.mrb[0].mxu0
    %3189 = vdwg.mxu0
    %3190 = vmatprep.subr.bf16.mxu0 %v1580
    %3191 = vmatpush1.bf16.msra.mxu0 %v1579
    %3192 = vmatprep.subr.bf16.mxu0 %v1583
    %3193 = vmatpush1.bf16.msra.mxu0 %v1582
    %3194 = vmatprep.subr.bf16.mxu0 %v1586
    %3195 = vmatpush1.bf16.msra.mxu0 %v1585
    %3196 = vmatprep.subr.bf16.mxu0 %v1589
    %3197 = vmatpush1.bf16.msra.mxu0 %v1588
    %3198 = vmatprep.subr.bf16.mxu0 %v1592
    %3199 = vmatpush1.bf16.msra.mxu0 %v1591
    %3200 = vmatprep.subr.bf16.mxu0 %v1595
    %3201 = vmatpush1.bf16.msra.mxu0 %v1594
    %3202 = vmatprep.subr.bf16.mxu0 %v1598
    %3203 = vmatpush1.bf16.msra.mxu0 %v1597
    %3204 = vmatprep.subr.bf16.mxu0 %v1601
    %3205 = vmatpush1.bf16.msra.mxu0 %v1600
    %3206 = vmatprep.subr.bf16.mxu0 %v1604
    %3207 = vmatpush1.bf16.msra.mxu0 %v1603
    %3208 = vmatprep.subr.bf16.mxu0 %v1607
    %3209 = vmatpush1.bf16.msra.mxu0 %v1606
    %3210 = vmatprep.subr.bf16.mxu0 %v1610
    %3211 = vmatpush1.bf16.msra.mxu0 %v1609
    %3212 = vmatprep.subr.bf16.mxu0 %v1613
    %3213 = vmatpush1.bf16.msra.mxu0 %v1612
    %3214 = vmatprep.subr.bf16.mxu0 %v1616
    %3215 = vmatpush1.bf16.msra.mxu0 %v1615
    %3216 = vmatprep.subr.bf16.mxu0 %v1619
    %3217 = vmatpush1.bf16.msra.mxu0 %v1618
    %3218 = vmatprep.subr.bf16.mxu0 %v1622
    %3219 = vmatpush1.bf16.msra.mxu0 %v1621
    %3220 = vmatprep.subr.bf16.mxu0 %v1625
    %3221 = vmatpush1.bf16.msra.mxu0 %v1624
    %3222 = vmatprep.mubr.bf16.mxu0 %v2992
    %3223 = vmatmul.mubr.bf16.gmra.mrb[0].mxu0 %v2991
    %v3224 = vpop.f32.mrb[0].mxu0
    %v3225 = vadd.f32 %v264, %v3224
    %v3226 = vpop.f32.mrb[0].mxu0
    %v3227 = vadd.f32 %v265, %v3226
    %v3228 = vpop.f32.mrb[0].mxu0
    %v3229 = vpop.f32.mrb[0].mxu0
    %3230 = vdwg.mxu0
    %3231 = vmatprep.subr.bf16.mxu0 0
    %3232 = vmatpush1.bf16.msra.mxu0 %v1581
    %3233 = vmatprep.subr.bf16.mxu0 0
    %3234 = vmatpush1.bf16.msra.mxu0 %v1584
    %3235 = vmatprep.subr.bf16.mxu0 0
    %3236 = vmatpush1.bf16.msra.mxu0 %v1587
    %3237 = vmatprep.subr.bf16.mxu0 0
    %3238 = vmatpush1.bf16.msra.mxu0 %v1590
    %3239 = vmatprep.subr.bf16.mxu0 0
    %3240 = vmatpush1.bf16.msra.mxu0 %v1593
    %3241 = vmatprep.subr.bf16.mxu0 0
    %3242 = vmatpush1.bf16.msra.mxu0 %v1596
    %3243 = vmatprep.subr.bf16.mxu0 0
    %3244 = vmatpush1.bf16.msra.mxu0 %v1599
    %3245 = vmatprep.subr.bf16.mxu0 0
    %3246 = vmatpush1.bf16.msra.mxu0 %v1602
    %3247 = vmatprep.subr.bf16.mxu0 0
    %3248 = vmatpush1.bf16.msra.mxu0 %v1605
    %3249 = vmatprep.subr.bf16.mxu0 0
    %3250 = vmatpush1.bf16.msra.mxu0 %v1608
    %3251 = vmatprep.subr.bf16.mxu0 0
    %3252 = vmatpush1.bf16.msra.mxu0 %v1611
    %3253 = vmatprep.subr.bf16.mxu0 0
    %3254 = vmatpush1.bf16.msra.mxu0 %v1614
    %3255 = vmatprep.subr.bf16.mxu0 0
    %3256 = vmatpush1.bf16.msra.mxu0 %v1617
    %3257 = vmatprep.subr.bf16.mxu0 0
    %3258 = vmatpush1.bf16.msra.mxu0 %v1620
    %3259 = vmatprep.subr.bf16.mxu0 0
    %3260 = vmatpush1.bf16.msra.mxu0 %v1623
    %3261 = vmatprep.subr.bf16.mxu0 0
    %3262 = vmatpush1.bf16.msra.mxu0 %v1626
    %3263 = vmatprep.mubr.bf16.mxu0 %v2992
    %3264 = vmatmul.mubr.bf16.gmra.mrb[0].mxu0 %v2991
    %v3265 = vpop.f32.mrb[0].mxu0
    %v3266 = vadd.f32 %v266, %v3265
    %v3267 = vpop.f32.mrb[0].mxu0
    %v3268 = vpop.f32.mrb[0].mxu0
    %v3269 = vpop.f32.mrb[0].mxu0
    %3270 = vdwg.mxu0
    %v3271 = vadd.f32 %v3144, %v3225
    %v3272 = vxor.u32 %v3271, 2147483648
    %v3273 = vmul.f32 %v3272, 1.442695
    %v3274 = vpow.pop %v3273
    %v3275 = vadd.f32 %v3274, 1.0
    %v3276 = vrcp.pop %v3275
    %v3277 = vmul.f32 1.0, %v3276
    %v3278 = vadd.f32 %v3146, %v3227
    %v3279 = vxor.u32 %v3278, 2147483648
    %v3280 = vmul.f32 %v3279, 1.442695
    %v3281 = vpow.pop %v3280
    %v3282 = vadd.f32 %v3281, 1.0
    %v3283 = vrcp.pop %v3282
    %v3284 = vmul.f32 1.0, %v3283
    %v3285 = vmul.f32 %v3277, %v3266
    %v3286 = vadd.f32 %v3185, %v3285
    %v3287 = vtanh.pop %v3286
    %v3288 = vsub.f32 1.0, %v3284
    %v3289 = vmul.f32 %v3288, %v3287
    %v3290 = vmul.f32 %v3284, %v2988
    %v3291 = vadd.f32 %v3289, %v3290
    %v3292 = vmul.f32 %v3291, %v267
    %v3293 = vmul.f32 %v3291, %v268
    %v3294 = vpack.c.bf16 %v3292, %v3292
    %v3295 = vpack.c.bf16 %v3293, %v3293
    %3296 = vst [vmem:[#allocation2 + $0x50] sm:$0xff] %v3292
    %3297 = vst [vmem:[#allocation2 + $0x58] sm:$0xff] %v3293
    %3298 = vmatprep.subr.bf16.mxu0 %v841
    %3299 = vmatpush1.bf16.msra.mxu0 %v840
    %3300 = vmatprep.subr.bf16.mxu0 %v845
    %3301 = vmatpush1.bf16.msra.mxu0 %v844
    %3302 = vmatprep.subr.bf16.mxu0 %v849
    %3303 = vmatpush1.bf16.msra.mxu0 %v848
    %3304 = vmatprep.subr.bf16.mxu0 %v853
    %3305 = vmatpush1.bf16.msra.mxu0 %v852
    %3306 = vmatprep.subr.bf16.mxu0 %v857
    %3307 = vmatpush1.bf16.msra.mxu0 %v856
    %3308 = vmatprep.subr.bf16.mxu0 %v861
    %3309 = vmatpush1.bf16.msra.mxu0 %v860
    %3310 = vmatprep.subr.bf16.mxu0 %v865
    %3311 = vmatpush1.bf16.msra.mxu0 %v864
    %3312 = vmatprep.subr.bf16.mxu0 %v869
    %3313 = vmatpush1.bf16.msra.mxu0 %v868
    %3314 = vmatprep.subr.bf16.mxu0 %v873
    %3315 = vmatpush1.bf16.msra.mxu0 %v872
    %3316 = vmatprep.subr.bf16.mxu0 %v877
    %3317 = vmatpush1.bf16.msra.mxu0 %v876
    %3318 = vmatprep.subr.bf16.mxu0 %v881
    %3319 = vmatpush1.bf16.msra.mxu0 %v880
    %3320 = vmatprep.subr.bf16.mxu0 %v885
    %3321 = vmatpush1.bf16.msra.mxu0 %v884
    %3322 = vmatprep.subr.bf16.mxu0 %v889
    %3323 = vmatpush1.bf16.msra.mxu0 %v888
    %3324 = vmatprep.subr.bf16.mxu0 %v893
    %3325 = vmatpush1.bf16.msra.mxu0 %v892
    %3326 = vmatprep.subr.bf16.mxu0 %v897
    %3327 = vmatpush1.bf16.msra.mxu0 %v896
    %3328 = vmatprep.subr.bf16.mxu0 %v901
    %3329 = vmatpush1.bf16.msra.mxu0 %v900
    %3330 = vmatprep.mubr.bf16.mxu0 %v3108
    %3331 = vmatmul.mubr.bf16.gmra.mrb[0].mxu0 %v3107
    %v3332 = vpop.f32.mrb[0].mxu0
    %v3333 = vadd.f32 0.0, %v3332
    %v3334 = vpop.f32.mrb[0].mxu0
    %v3335 = vadd.f32 0.0, %v3334
    %v3336 = vpop.f32.mrb[0].mxu0
    %v3337 = vpop.f32.mrb[0].mxu0
    %3338 = vdwg.mxu0
    %3339 = vmatprep.subr.bf16.mxu0 %v843
    %3340 = vmatpush1.bf16.msra.mxu0 %v842
    %3341 = vmatprep.subr.bf16.mxu0 %v847
    %3342 = vmatpush1.bf16.msra.mxu0 %v846
    %3343 = vmatprep.subr.bf16.mxu0 %v851
    %3344 = vmatpush1.bf16.msra.mxu0 %v850
    %3345 = vmatprep.subr.bf16.mxu0 %v855
    %3346 = vmatpush1.bf16.msra.mxu0 %v854
    %3347 = vmatprep.subr.bf16.mxu0 %v859
    %3348 = vmatpush1.bf16.msra.mxu0 %v858
    %3349 = vmatprep.subr.bf16.mxu0 %v863
    %3350 = vmatpush1.bf16.msra.mxu0 %v862
    %3351 = vmatprep.subr.bf16.mxu0 %v867
    %3352 = vmatpush1.bf16.msra.mxu0 %v866
    %3353 = vmatprep.subr.bf16.mxu0 %v871
    %3354 = vmatpush1.bf16.msra.mxu0 %v870
    %3355 = vmatprep.subr.bf16.mxu0 %v875
    %3356 = vmatpush1.bf16.msra.mxu0 %v874
    %3357 = vmatprep.subr.bf16.mxu0 %v879
    %3358 = vmatpush1.bf16.msra.mxu0 %v878
    %3359 = vmatprep.subr.bf16.mxu0 %v883
    %3360 = vmatpush1.bf16.msra.mxu0 %v882
    %3361 = vmatprep.subr.bf16.mxu0 %v887
    %3362 = vmatpush1.bf16.msra.mxu0 %v886
    %3363 = vmatprep.subr.bf16.mxu0 %v891
    %3364 = vmatpush1.bf16.msra.mxu0 %v890
    %3365 = vmatprep.subr.bf16.mxu0 %v895
    %3366 = vmatpush1.bf16.msra.mxu0 %v894
    %3367 = vmatprep.subr.bf16.mxu0 %v899
    %3368 = vmatpush1.bf16.msra.mxu0 %v898
    %3369 = vmatprep.subr.bf16.mxu0 %v903
    %3370 = vmatpush1.bf16.msra.mxu0 %v902
    %3371 = vmatprep.mubr.bf16.mxu0 %v3108
    %3372 = vmatmul.mubr.bf16.gmra.mrb[0].mxu0 %v3107
    %v3373 = vpop.f32.mrb[0].mxu0
    %v3374 = vadd.f32 0.0, %v3373
    %v3375 = vpop.f32.mrb[0].mxu0
    %v3376 = vadd.f32 0.0, %v3375
    %v3377 = vpop.f32.mrb[0].mxu0
    %v3378 = vpop.f32.mrb[0].mxu0
    %3379 = vdwg.mxu0
    %v3380 = vadd.f32 %v525, %v3333
    %v3381 = vadd.f32 %v527, %v3335
    %v3382 = vadd.f32 %v638, %v3374
    %v3383 = vadd.f32 %v640, %v3376
    %v3384 = vxor.u32 %v3380, 2147483648
    %v3385 = vmul.f32 %v3384, 1.442695
    %v3386 = vpow.pop %v3385
    %v3387 = vadd.f32 %v3386, 1.0
    %v3388 = vrcp.pop %v3387
    %v3389 = vmul.f32 1.0, %v3388
    %v3390 = vxor.u32 %v3381, 2147483648
    %v3391 = vmul.f32 %v3390, 1.442695
    %v3392 = vpow.pop %v3391
    %v3393 = vadd.f32 %v3392, 1.0
    %v3394 = vrcp.pop %v3393
    %v3395 = vmul.f32 1.0, %v3394
    %v3396 = vtanh.pop %v3382
    %v3397 = vxor.u32 %v3383, 2147483648
    %v3398 = vmul.f32 %v3397, 1.442695
    %v3399 = vpow.pop %v3398
    %v3400 = vadd.f32 %v3399, 1.0
    %v3401 = vrcp.pop %v3400
    %v3402 = vmul.f32 1.0, %v3401
    %v3403 = vmul.f32 %v3395, %v3102
    %v3404 = vmul.f32 %v3389, %v3396
    %v3405 = vadd.f32 %v3403, %v3404
    %v3406 = vtanh.pop %v3405
    %v3407 = vmul.f32 %v3402, %v3406
    %v3408 = vmul.f32 %v3407, %v267
    %v3409 = vmul.f32 %v3407, %v268
    %v3410 = vpack.c.bf16 %v3408, %v3408
    %v3411 = vpack.c.bf16 %v3409, %v3409
    %3412 = vmatprep.subr.bf16.mxu0 %v1243
    %3413 = vmatpush1.bf16.msra.mxu0 %v1242
    %3414 = vmatprep.subr.bf16.mxu0 %v1246
    %3415 = vmatpush1.bf16.msra.mxu0 %v1245
    %3416 = vmatprep.subr.bf16.mxu0 %v1249
    %3417 = vmatpush1.bf16.msra.mxu0 %v1248
    %3418 = vmatprep.subr.bf16.mxu0 %v1252
    %3419 = vmatpush1.bf16.msra.mxu0 %v1251
    %3420 = vmatprep.subr.bf16.mxu0 %v1255
    %3421 = vmatpush1.bf16.msra.mxu0 %v1254
    %3422 = vmatprep.subr.bf16.mxu0 %v1258
    %3423 = vmatpush1.bf16.msra.mxu0 %v1257
    %3424 = vmatprep.subr.bf16.mxu0 %v1261
    %3425 = vmatpush1.bf16.msra.mxu0 %v1260
    %3426 = vmatprep.subr.bf16.mxu0 %v1264
    %3427 = vmatpush1.bf16.msra.mxu0 %v1263
    %3428 = vmatprep.subr.bf16.mxu0 %v1267
    %3429 = vmatpush1.bf16.msra.mxu0 %v1266
    %3430 = vmatprep.subr.bf16.mxu0 %v1270
    %3431 = vmatpush1.bf16.msra.mxu0 %v1269
    %3432 = vmatprep.subr.bf16.mxu0 %v1273
    %3433 = vmatpush1.bf16.msra.mxu0 %v1272
    %3434 = vmatprep.subr.bf16.mxu0 %v1276
    %3435 = vmatpush1.bf16.msra.mxu0 %v1275
    %3436 = vmatprep.subr.bf16.mxu0 %v1279
    %3437 = vmatpush1.bf16.msra.mxu0 %v1278
    %3438 = vmatprep.subr.bf16.mxu0 %v1282
    %3439 = vmatpush1.bf16.msra.mxu0 %v1281
    %3440 = vmatprep.subr.bf16.mxu0 %v1285
    %3441 = vmatpush1.bf16.msra.mxu0 %v1284
    %3442 = vmatprep.subr.bf16.mxu0 %v1288
    %3443 = vmatpush1.bf16.msra.mxu0 %v1287
    %3444 = vmatprep.mubr.bf16.mxu0 %v3411
    %3445 = vmatmul.mubr.bf16.gmra.mrb[0].mxu0 %v3410
    %v3446 = vpop.f32.mrb[0].mxu0
    %v3447 = vadd.f32 %v261, %v3446
    %v3448 = vpop.f32.mrb[0].mxu0
    %v3449 = vadd.f32 %v262, %v3448
    %v3450 = vpop.f32.mrb[0].mxu0
    %v3451 = vpop.f32.mrb[0].mxu0
    %3452 = vdwg.mxu0
    %3453 = vmatprep.subr.bf16.mxu0 0
    %3454 = vmatpush1.bf16.msra.mxu0 %v1244
    %3455 = vmatprep.subr.bf16.mxu0 0
    %3456 = vmatpush1.bf16.msra.mxu0 %v1247
    %3457 = vmatprep.subr.bf16.mxu0 0
    %3458 = vmatpush1.bf16.msra.mxu0 %v1250
    %3459 = vmatprep.subr.bf16.mxu0 0
    %3460 = vmatpush1.bf16.msra.mxu0 %v1253
    %3461 = vmatprep.subr.bf16.mxu0 0
    %3462 = vmatpush1.bf16.msra.mxu0 %v1256
    %3463 = vmatprep.subr.bf16.mxu0 0
    %3464 = vmatpush1.bf16.msra.mxu0 %v1259
    %3465 = vmatprep.subr.bf16.mxu0 0
    %3466 = vmatpush1.bf16.msra.mxu0 %v1262
    %3467 = vmatprep.subr.bf16.mxu0 0
    %3468 = vmatpush1.bf16.msra.mxu0 %v1265
    %3469 = vmatprep.subr.bf16.mxu0 0
    %3470 = vmatpush1.bf16.msra.mxu0 %v1268
    %3471 = vmatprep.subr.bf16.mxu0 0
    %3472 = vmatpush1.bf16.msra.mxu0 %v1271
    %3473 = vmatprep.subr.bf16.mxu0 0
    %3474 = vmatpush1.bf16.msra.mxu0 %v1274
    %3475 = vmatprep.subr.bf16.mxu0 0
    %3476 = vmatpush1.bf16.msra.mxu0 %v1277
    %3477 = vmatprep.subr.bf16.mxu0 0
    %3478 = vmatpush1.bf16.msra.mxu0 %v1280
    %3479 = vmatprep.subr.bf16.mxu0 0
    %3480 = vmatpush1.bf16.msra.mxu0 %v1283
    %3481 = vmatprep.subr.bf16.mxu0 0
    %3482 = vmatpush1.bf16.msra.mxu0 %v1286
    %3483 = vmatprep.subr.bf16.mxu0 0
    %3484 = vmatpush1.bf16.msra.mxu0 %v1289
    %3485 = vmatprep.mubr.bf16.mxu0 %v3411
    %3486 = vmatmul.mubr.bf16.gmra.mrb[0].mxu0 %v3410
    %v3487 = vpop.f32.mrb[0].mxu0
    %v3488 = vadd.f32 %v263, %v3487
    %v3489 = vpop.f32.mrb[0].mxu0
    %v3490 = vpop.f32.mrb[0].mxu0
    %v3491 = vpop.f32.mrb[0].mxu0
    %3492 = vdwg.mxu0
    %3493 = vmatprep.subr.bf16.mxu0 %v1580
    %3494 = vmatpush1.bf16.msra.mxu0 %v1579
    %3495 = vmatprep.subr.bf16.mxu0 %v1583
    %3496 = vmatpush1.bf16.msra.mxu0 %v1582
    %3497 = vmatprep.subr.bf16.mxu0 %v1586
    %3498 = vmatpush1.bf16.msra.mxu0 %v1585
    %3499 = vmatprep.subr.bf16.mxu0 %v1589
    %3500 = vmatpush1.bf16.msra.mxu0 %v1588
    %3501 = vmatprep.subr.bf16.mxu0 %v1592
    %3502 = vmatpush1.bf16.msra.mxu0 %v1591
    %3503 = vmatprep.subr.bf16.mxu0 %v1595
    %3504 = vmatpush1.bf16.msra.mxu0 %v1594
    %3505 = vmatprep.subr.bf16.mxu0 %v1598
    %3506 = vmatpush1.bf16.msra.mxu0 %v1597
    %3507 = vmatprep.subr.bf16.mxu0 %v1601
    %3508 = vmatpush1.bf16.msra.mxu0 %v1600
    %3509 = vmatprep.subr.bf16.mxu0 %v1604
    %3510 = vmatpush1.bf16.msra.mxu0 %v1603
    %3511 = vmatprep.subr.bf16.mxu0 %v1607
    %3512 = vmatpush1.bf16.msra.mxu0 %v1606
    %3513 = vmatprep.subr.bf16.mxu0 %v1610
    %3514 = vmatpush1.bf16.msra.mxu0 %v1609
    %3515 = vmatprep.subr.bf16.mxu0 %v1613
    %3516 = vmatpush1.bf16.msra.mxu0 %v1612
    %3517 = vmatprep.subr.bf16.mxu0 %v1616
    %3518 = vmatpush1.bf16.msra.mxu0 %v1615
    %3519 = vmatprep.subr.bf16.mxu0 %v1619
    %3520 = vmatpush1.bf16.msra.mxu0 %v1618
    %3521 = vmatprep.subr.bf16.mxu0 %v1622
    %3522 = vmatpush1.bf16.msra.mxu0 %v1621
    %3523 = vmatprep.subr.bf16.mxu0 %v1625
    %3524 = vmatpush1.bf16.msra.mxu0 %v1624
    %3525 = vmatprep.mubr.bf16.mxu0 %v3295
    %3526 = vmatmul.mubr.bf16.gmra.mrb[0].mxu0 %v3294
    %v3527 = vpop.f32.mrb[0].mxu0
    %v3528 = vadd.f32 %v264, %v3527
    %v3529 = vpop.f32.mrb[0].mxu0
    %v3530 = vadd.f32 %v265, %v3529
    %v3531 = vpop.f32.mrb[0].mxu0
    %v3532 = vpop.f32.mrb[0].mxu0
    %3533 = vdwg.mxu0
    %3534 = vmatprep.subr.bf16.mxu0 0
    %3535 = vmatpush1.bf16.msra.mxu0 %v1581
    %3536 = vmatprep.subr.bf16.mxu0 0
    %3537 = vmatpush1.bf16.msra.mxu0 %v1584
    %3538 = vmatprep.subr.bf16.mxu0 0
    %3539 = vmatpush1.bf16.msra.mxu0 %v1587
    %3540 = vmatprep.subr.bf16.mxu0 0
    %3541 = vmatpush1.bf16.msra.mxu0 %v1590
    %3542 = vmatprep.subr.bf16.mxu0 0
    %3543 = vmatpush1.bf16.msra.mxu0 %v1593
    %3544 = vmatprep.subr.bf16.mxu0 0
    %3545 = vmatpush1.bf16.msra.mxu0 %v1596
    %3546 = vmatprep.subr.bf16.mxu0 0
    %3547 = vmatpush1.bf16.msra.mxu0 %v1599
    %3548 = vmatprep.subr.bf16.mxu0 0
    %3549 = vmatpush1.bf16.msra.mxu0 %v1602
    %3550 = vmatprep.subr.bf16.mxu0 0
    %3551 = vmatpush1.bf16.msra.mxu0 %v1605
    %3552 = vmatprep.subr.bf16.mxu0 0
    %3553 = vmatpush1.bf16.msra.mxu0 %v1608
    %3554 = vmatprep.subr.bf16.mxu0 0
    %3555 = vmatpush1.bf16.msra.mxu0 %v1611
    %3556 = vmatprep.subr.bf16.mxu0 0
    %3557 = vmatpush1.bf16.msra.mxu0 %v1614
    %3558 = vmatprep.subr.bf16.mxu0 0
    %3559 = vmatpush1.bf16.msra.mxu0 %v1617
    %3560 = vmatprep.subr.bf16.mxu0 0
    %3561 = vmatpush1.bf16.msra.mxu0 %v1620
    %3562 = vmatprep.subr.bf16.mxu0 0
    %3563 = vmatpush1.bf16.msra.mxu0 %v1623
    %3564 = vmatprep.subr.bf16.mxu0 0
    %3565 = vmatpush1.bf16.msra.mxu0 %v1626
    %3566 = vmatprep.mubr.bf16.mxu0 %v3295
    %3567 = vmatmul.mubr.bf16.gmra.mrb[0].mxu0 %v3294
    %v3568 = vpop.f32.mrb[0].mxu0
    %v3569 = vadd.f32 %v266, %v3568
    %v3570 = vpop.f32.mrb[0].mxu0
    %v3571 = vpop.f32.mrb[0].mxu0
    %v3572 = vpop.f32.mrb[0].mxu0
    %3573 = vdwg.mxu0
    %v3574 = vadd.f32 %v3447, %v3528
    %v3575 = vxor.u32 %v3574, 2147483648
    %v3576 = vmul.f32 %v3575, 1.442695
    %v3577 = vpow.pop %v3576
    %v3578 = vadd.f32 %v3577, 1.0
    %v3579 = vrcp.pop %v3578
    %v3580 = vmul.f32 1.0, %v3579
    %v3581 = vadd.f32 %v3449, %v3530
    %v3582 = vxor.u32 %v3581, 2147483648
    %v3583 = vmul.f32 %v3582, 1.442695
    %v3584 = vpow.pop %v3583
    %v3585 = vadd.f32 %v3584, 1.0
    %v3586 = vrcp.pop %v3585
    %v3587 = vmul.f32 1.0, %v3586
    %v3588 = vmul.f32 %v3580, %v3569
    %v3589 = vadd.f32 %v3488, %v3588
    %v3590 = vtanh.pop %v3589
    %v3591 = vsub.f32 1.0, %v3587
    %v3592 = vmul.f32 %v3591, %v3590
    %v3593 = vmul.f32 %v3587, %v3291
    %v3594 = vadd.f32 %v3592, %v3593
    %v3595 = vmul.f32 %v3594, %v267
    %v3596 = vmul.f32 %v3594, %v268
    %v3597 = vpack.c.bf16 %v3595, %v3595
    %v3598 = vpack.c.bf16 %v3596, %v3596
    %3599 = vst [vmem:[#allocation2 + $0x60] sm:$0xff] %v3595
    %3600 = vst [vmem:[#allocation2 + $0x68] sm:$0xff] %v3596
    %3601 = vmatprep.subr.bf16.mxu0 %v841
    %3602 = vmatpush1.bf16.msra.mxu0 %v840
    %3603 = vmatprep.subr.bf16.mxu0 %v845
    %3604 = vmatpush1.bf16.msra.mxu0 %v844
    %3605 = vmatprep.subr.bf16.mxu0 %v849
    %3606 = vmatpush1.bf16.msra.mxu0 %v848
    %3607 = vmatprep.subr.bf16.mxu0 %v853
    %3608 = vmatpush1.bf16.msra.mxu0 %v852
    %3609 = vmatprep.subr.bf16.mxu0 %v857
    %3610 = vmatpush1.bf16.msra.mxu0 %v856
    %3611 = vmatprep.subr.bf16.mxu0 %v861
    %3612 = vmatpush1.bf16.msra.mxu0 %v860
    %3613 = vmatprep.subr.bf16.mxu0 %v865
    %3614 = vmatpush1.bf16.msra.mxu0 %v864
    %3615 = vmatprep.subr.bf16.mxu0 %v869
    %3616 = vmatpush1.bf16.msra.mxu0 %v868
    %3617 = vmatprep.subr.bf16.mxu0 %v873
    %3618 = vmatpush1.bf16.msra.mxu0 %v872
    %3619 = vmatprep.subr.bf16.mxu0 %v877
    %3620 = vmatpush1.bf16.msra.mxu0 %v876
    %3621 = vmatprep.subr.bf16.mxu0 %v881
    %3622 = vmatpush1.bf16.msra.mxu0 %v880
    %3623 = vmatprep.subr.bf16.mxu0 %v885
    %3624 = vmatpush1.bf16.msra.mxu0 %v884
    %3625 = vmatprep.subr.bf16.mxu0 %v889
    %3626 = vmatpush1.bf16.msra.mxu0 %v888
    %3627 = vmatprep.subr.bf16.mxu0 %v893
    %3628 = vmatpush1.bf16.msra.mxu0 %v892
    %3629 = vmatprep.subr.bf16.mxu0 %v897
    %3630 = vmatpush1.bf16.msra.mxu0 %v896
    %3631 = vmatprep.subr.bf16.mxu0 %v901
    %3632 = vmatpush1.bf16.msra.mxu0 %v900
    %3633 = vmatprep.mubr.bf16.mxu0 %v3411
    %3634 = vmatmul.mubr.bf16.gmra.mrb[0].mxu0 %v3410
    %v3635 = vpop.f32.mrb[0].mxu0
    %v3636 = vadd.f32 0.0, %v3635
    %v3637 = vpop.f32.mrb[0].mxu0
    %v3638 = vadd.f32 0.0, %v3637
    %v3639 = vpop.f32.mrb[0].mxu0
    %v3640 = vpop.f32.mrb[0].mxu0
    %3641 = vdwg.mxu0
    %3642 = vmatprep.subr.bf16.mxu0 %v843
    %3643 = vmatpush1.bf16.msra.mxu0 %v842
    %3644 = vmatprep.subr.bf16.mxu0 %v847
    %3645 = vmatpush1.bf16.msra.mxu0 %v846
    %3646 = vmatprep.subr.bf16.mxu0 %v851
    %3647 = vmatpush1.bf16.msra.mxu0 %v850
    %3648 = vmatprep.subr.bf16.mxu0 %v855
    %3649 = vmatpush1.bf16.msra.mxu0 %v854
    %3650 = vmatprep.subr.bf16.mxu0 %v859
    %3651 = vmatpush1.bf16.msra.mxu0 %v858
    %3652 = vmatprep.subr.bf16.mxu0 %v863
    %3653 = vmatpush1.bf16.msra.mxu0 %v862
    %3654 = vmatprep.subr.bf16.mxu0 %v867
    %3655 = vmatpush1.bf16.msra.mxu0 %v866
    %3656 = vmatprep.subr.bf16.mxu0 %v871
    %3657 = vmatpush1.bf16.msra.mxu0 %v870
    %3658 = vmatprep.subr.bf16.mxu0 %v875
    %3659 = vmatpush1.bf16.msra.mxu0 %v874
    %3660 = vmatprep.subr.bf16.mxu0 %v879
    %3661 = vmatpush1.bf16.msra.mxu0 %v878
    %3662 = vmatprep.subr.bf16.mxu0 %v883
    %3663 = vmatpush1.bf16.msra.mxu0 %v882
    %3664 = vmatprep.subr.bf16.mxu0 %v887
    %3665 = vmatpush1.bf16.msra.mxu0 %v886
    %3666 = vmatprep.subr.bf16.mxu0 %v891
    %3667 = vmatpush1.bf16.msra.mxu0 %v890
    %3668 = vmatprep.subr.bf16.mxu0 %v895
    %3669 = vmatpush1.bf16.msra.mxu0 %v894
    %3670 = vmatprep.subr.bf16.mxu0 %v899
    %3671 = vmatpush1.bf16.msra.mxu0 %v898
    %3672 = vmatprep.subr.bf16.mxu0 %v903
    %3673 = vmatpush1.bf16.msra.mxu0 %v902
    %3674 = vmatprep.mubr.bf16.mxu0 %v3411
    %3675 = vmatmul.mubr.bf16.gmra.mrb[0].mxu0 %v3410
    %v3676 = vpop.f32.mrb[0].mxu0
    %v3677 = vadd.f32 0.0, %v3676
    %v3678 = vpop.f32.mrb[0].mxu0
    %v3679 = vadd.f32 0.0, %v3678
    %v3680 = vpop.f32.mrb[0].mxu0
    %v3681 = vpop.f32.mrb[0].mxu0
    %3682 = vdwg.mxu0
    %v3683 = vadd.f32 %v531, %v3636
    %v3684 = vadd.f32 %v533, %v3638
    %v3685 = vadd.f32 %v644, %v3677
    %v3686 = vadd.f32 %v646, %v3679
    %v3687 = vxor.u32 %v3683, 2147483648
    %v3688 = vmul.f32 %v3687, 1.442695
    %v3689 = vpow.pop %v3688
    %v3690 = vadd.f32 %v3689, 1.0
    %v3691 = vrcp.pop %v3690
    %v3692 = vmul.f32 1.0, %v3691
    %v3693 = vxor.u32 %v3684, 2147483648
    %v3694 = vmul.f32 %v3693, 1.442695
    %v3695 = vpow.pop %v3694
    %v3696 = vadd.f32 %v3695, 1.0
    %v3697 = vrcp.pop %v3696
    %v3698 = vmul.f32 1.0, %v3697
    %v3699 = vtanh.pop %v3685
    %v3700 = vxor.u32 %v3686, 2147483648
    %v3701 = vmul.f32 %v3700, 1.442695
    %v3702 = vpow.pop %v3701
    %v3703 = vadd.f32 %v3702, 1.0
    %v3704 = vrcp.pop %v3703
    %v3705 = vmul.f32 1.0, %v3704
    %v3706 = vmul.f32 %v3698, %v3405
    %v3707 = vmul.f32 %v3692, %v3699
    %v3708 = vadd.f32 %v3706, %v3707
    %v3709 = vtanh.pop %v3708
    %v3710 = vmul.f32 %v3705, %v3709
    %v3711 = vmul.f32 %v3710, %v267
    %v3712 = vmul.f32 %v3710, %v268
    %v3713 = vpack.c.bf16 %v3711, %v3711
    %v3714 = vpack.c.bf16 %v3712, %v3712
    %3715 = vmatprep.subr.bf16.mxu0 %v1243
    %3716 = vmatpush1.bf16.msra.mxu0 %v1242
    %3717 = vmatprep.subr.bf16.mxu0 %v1246
    %3718 = vmatpush1.bf16.msra.mxu0 %v1245
    %3719 = vmatprep.subr.bf16.mxu0 %v1249
    %3720 = vmatpush1.bf16.msra.mxu0 %v1248
    %3721 = vmatprep.subr.bf16.mxu0 %v1252
    %3722 = vmatpush1.bf16.msra.mxu0 %v1251
    %3723 = vmatprep.subr.bf16.mxu0 %v1255
    %3724 = vmatpush1.bf16.msra.mxu0 %v1254
    %3725 = vmatprep.subr.bf16.mxu0 %v1258
    %3726 = vmatpush1.bf16.msra.mxu0 %v1257
    %3727 = vmatprep.subr.bf16.mxu0 %v1261
    %3728 = vmatpush1.bf16.msra.mxu0 %v1260
    %3729 = vmatprep.subr.bf16.mxu0 %v1264
    %3730 = vmatpush1.bf16.msra.mxu0 %v1263
    %3731 = vmatprep.subr.bf16.mxu0 %v1267
    %3732 = vmatpush1.bf16.msra.mxu0 %v1266
    %3733 = vmatprep.subr.bf16.mxu0 %v1270
    %3734 = vmatpush1.bf16.msra.mxu0 %v1269
    %3735 = vmatprep.subr.bf16.mxu0 %v1273
    %3736 = vmatpush1.bf16.msra.mxu0 %v1272
    %3737 = vmatprep.subr.bf16.mxu0 %v1276
    %3738 = vmatpush1.bf16.msra.mxu0 %v1275
    %3739 = vmatprep.subr.bf16.mxu0 %v1279
    %3740 = vmatpush1.bf16.msra.mxu0 %v1278
    %3741 = vmatprep.subr.bf16.mxu0 %v1282
    %3742 = vmatpush1.bf16.msra.mxu0 %v1281
    %3743 = vmatprep.subr.bf16.mxu0 %v1285
    %3744 = vmatpush1.bf16.msra.mxu0 %v1284
    %3745 = vmatprep.subr.bf16.mxu0 %v1288
    %3746 = vmatpush1.bf16.msra.mxu0 %v1287
    %3747 = vmatprep.mubr.bf16.mxu0 %v3714
    %3748 = vmatmul.mubr.bf16.gmra.mrb[0].mxu0 %v3713
    %v3749 = vpop.f32.mrb[0].mxu0
    %v3750 = vadd.f32 %v261, %v3749
    %v3751 = vpop.f32.mrb[0].mxu0
    %v3752 = vadd.f32 %v262, %v3751
    %v3753 = vpop.f32.mrb[0].mxu0
    %v3754 = vpop.f32.mrb[0].mxu0
    %3755 = vdwg.mxu0
    %3756 = vmatprep.subr.bf16.mxu0 0
    %3757 = vmatpush1.bf16.msra.mxu0 %v1244
    %3758 = vmatprep.subr.bf16.mxu0 0
    %3759 = vmatpush1.bf16.msra.mxu0 %v1247
    %3760 = vmatprep.subr.bf16.mxu0 0
    %3761 = vmatpush1.bf16.msra.mxu0 %v1250
    %3762 = vmatprep.subr.bf16.mxu0 0
    %3763 = vmatpush1.bf16.msra.mxu0 %v1253
    %3764 = vmatprep.subr.bf16.mxu0 0
    %3765 = vmatpush1.bf16.msra.mxu0 %v1256
    %3766 = vmatprep.subr.bf16.mxu0 0
    %3767 = vmatpush1.bf16.msra.mxu0 %v1259
    %3768 = vmatprep.subr.bf16.mxu0 0
    %3769 = vmatpush1.bf16.msra.mxu0 %v1262
    %3770 = vmatprep.subr.bf16.mxu0 0
    %3771 = vmatpush1.bf16.msra.mxu0 %v1265
    %3772 = vmatprep.subr.bf16.mxu0 0
    %3773 = vmatpush1.bf16.msra.mxu0 %v1268
    %3774 = vmatprep.subr.bf16.mxu0 0
    %3775 = vmatpush1.bf16.msra.mxu0 %v1271
    %3776 = vmatprep.subr.bf16.mxu0 0
    %3777 = vmatpush1.bf16.msra.mxu0 %v1274
    %3778 = vmatprep.subr.bf16.mxu0 0
    %3779 = vmatpush1.bf16.msra.mxu0 %v1277
    %3780 = vmatprep.subr.bf16.mxu0 0
    %3781 = vmatpush1.bf16.msra.mxu0 %v1280
    %3782 = vmatprep.subr.bf16.mxu0 0
    %3783 = vmatpush1.bf16.msra.mxu0 %v1283
    %3784 = vmatprep.subr.bf16.mxu0 0
    %3785 = vmatpush1.bf16.msra.mxu0 %v1286
    %3786 = vmatprep.subr.bf16.mxu0 0
    %3787 = vmatpush1.bf16.msra.mxu0 %v1289
    %3788 = vmatprep.mubr.bf16.mxu0 %v3714
    %3789 = vmatmul.mubr.bf16.gmra.mrb[0].mxu0 %v3713
    %v3790 = vpop.f32.mrb[0].mxu0
    %v3791 = vadd.f32 %v263, %v3790
    %v3792 = vpop.f32.mrb[0].mxu0
    %v3793 = vpop.f32.mrb[0].mxu0
    %v3794 = vpop.f32.mrb[0].mxu0
    %3795 = vdwg.mxu0
    %3796 = vmatprep.subr.bf16.mxu0 %v1580
    %3797 = vmatpush1.bf16.msra.mxu0 %v1579
    %3798 = vmatprep.subr.bf16.mxu0 %v1583
    %3799 = vmatpush1.bf16.msra.mxu0 %v1582
    %3800 = vmatprep.subr.bf16.mxu0 %v1586
    %3801 = vmatpush1.bf16.msra.mxu0 %v1585
    %3802 = vmatprep.subr.bf16.mxu0 %v1589
    %3803 = vmatpush1.bf16.msra.mxu0 %v1588
    %3804 = vmatprep.subr.bf16.mxu0 %v1592
    %3805 = vmatpush1.bf16.msra.mxu0 %v1591
    %3806 = vmatprep.subr.bf16.mxu0 %v1595
    %3807 = vmatpush1.bf16.msra.mxu0 %v1594
    %3808 = vmatprep.subr.bf16.mxu0 %v1598
    %3809 = vmatpush1.bf16.msra.mxu0 %v1597
    %3810 = vmatprep.subr.bf16.mxu0 %v1601
    %3811 = vmatpush1.bf16.msra.mxu0 %v1600
    %3812 = vmatprep.subr.bf16.mxu0 %v1604
    %3813 = vmatpush1.bf16.msra.mxu0 %v1603
    %3814 = vmatprep.subr.bf16.mxu0 %v1607
    %3815 = vmatpush1.bf16.msra.mxu0 %v1606
    %3816 = vmatprep.subr.bf16.mxu0 %v1610
    %3817 = vmatpush1.bf16.msra.mxu0 %v1609
    %3818 = vmatprep.subr.bf16.mxu0 %v1613
    %3819 = vmatpush1.bf16.msra.mxu0 %v1612
    %3820 = vmatprep.subr.bf16.mxu0 %v1616
    %3821 = vmatpush1.bf16.msra.mxu0 %v1615
    %3822 = vmatprep.subr.bf16.mxu0 %v1619
    %3823 = vmatpush1.bf16.msra.mxu0 %v1618
    %3824 = vmatprep.subr.bf16.mxu0 %v1622
    %3825 = vmatpush1.bf16.msra.mxu0 %v1621
    %3826 = vmatprep.subr.bf16.mxu0 %v1625
    %3827 = vmatpush1.bf16.msra.mxu0 %v1624
    %3828 = vmatprep.mubr.bf16.mxu0 %v3598
    %3829 = vmatmul.mubr.bf16.gmra.mrb[0].mxu0 %v3597
    %v3830 = vpop.f32.mrb[0].mxu0
    %v3831 = vadd.f32 %v264, %v3830
    %v3832 = vpop.f32.mrb[0].mxu0
    %v3833 = vadd.f32 %v265, %v3832
    %v3834 = vpop.f32.mrb[0].mxu0
    %v3835 = vpop.f32.mrb[0].mxu0
    %3836 = vdwg.mxu0
    %3837 = vmatprep.subr.bf16.mxu0 0
    %3838 = vmatpush1.bf16.msra.mxu0 %v1581
    %3839 = vmatprep.subr.bf16.mxu0 0
    %3840 = vmatpush1.bf16.msra.mxu0 %v1584
    %3841 = vmatprep.subr.bf16.mxu0 0
    %3842 = vmatpush1.bf16.msra.mxu0 %v1587
    %3843 = vmatprep.subr.bf16.mxu0 0
    %3844 = vmatpush1.bf16.msra.mxu0 %v1590
    %3845 = vmatprep.subr.bf16.mxu0 0
    %3846 = vmatpush1.bf16.msra.mxu0 %v1593
    %3847 = vmatprep.subr.bf16.mxu0 0
    %3848 = vmatpush1.bf16.msra.mxu0 %v1596
    %3849 = vmatprep.subr.bf16.mxu0 0
    %3850 = vmatpush1.bf16.msra.mxu0 %v1599
    %3851 = vmatprep.subr.bf16.mxu0 0
    %3852 = vmatpush1.bf16.msra.mxu0 %v1602
    %3853 = vmatprep.subr.bf16.mxu0 0
    %3854 = vmatpush1.bf16.msra.mxu0 %v1605
    %3855 = vmatprep.subr.bf16.mxu0 0
    %3856 = vmatpush1.bf16.msra.mxu0 %v1608
    %3857 = vmatprep.subr.bf16.mxu0 0
    %3858 = vmatpush1.bf16.msra.mxu0 %v1611
    %3859 = vmatprep.subr.bf16.mxu0 0
    %3860 = vmatpush1.bf16.msra.mxu0 %v1614
    %3861 = vmatprep.subr.bf16.mxu0 0
    %3862 = vmatpush1.bf16.msra.mxu0 %v1617
    %3863 = vmatprep.subr.bf16.mxu0 0
    %3864 = vmatpush1.bf16.msra.mxu0 %v1620
    %3865 = vmatprep.subr.bf16.mxu0 0
    %3866 = vmatpush1.bf16.msra.mxu0 %v1623
    %3867 = vmatprep.subr.bf16.mxu0 0
    %3868 = vmatpush1.bf16.msra.mxu0 %v1626
    %3869 = vmatprep.mubr.bf16.mxu0 %v3598
    %3870 = vmatmul.mubr.bf16.gmra.mrb[0].mxu0 %v3597
    %v3871 = vpop.f32.mrb[0].mxu0
    %v3872 = vadd.f32 %v266, %v3871
    %v3873 = vpop.f32.mrb[0].mxu0
    %v3874 = vpop.f32.mrb[0].mxu0
    %v3875 = vpop.f32.mrb[0].mxu0
    %3876 = vdwg.mxu0
    %v3877 = vadd.f32 %v3750, %v3831
    %v3878 = vxor.u32 %v3877, 2147483648
    %v3879 = vmul.f32 %v3878, 1.442695
    %v3880 = vpow.pop %v3879
    %v3881 = vadd.f32 %v3880, 1.0
    %v3882 = vrcp.pop %v3881
    %v3883 = vmul.f32 1.0, %v3882
    %v3884 = vadd.f32 %v3752, %v3833
    %v3885 = vxor.u32 %v3884, 2147483648
    %v3886 = vmul.f32 %v3885, 1.442695
    %v3887 = vpow.pop %v3886
    %v3888 = vadd.f32 %v3887, 1.0
    %v3889 = vrcp.pop %v3888
    %v3890 = vmul.f32 1.0, %v3889
    %v3891 = vmul.f32 %v3883, %v3872
    %v3892 = vadd.f32 %v3791, %v3891
    %v3893 = vtanh.pop %v3892
    %v3894 = vsub.f32 1.0, %v3890
    %v3895 = vmul.f32 %v3894, %v3893
    %v3896 = vmul.f32 %v3890, %v3594
    %v3897 = vadd.f32 %v3895, %v3896
    %v3898 = vmul.f32 %v3897, %v267
    %v3899 = vmul.f32 %v3897, %v268
    %3900 = vst [vmem:[#allocation2 + $0x70] sm:$0xff] %v3898
    %3901 = vst [vmem:[#allocation2 + $0x78] sm:$0xff] %v3899
    %v3902 = vld [vmem:[#allocation2] sm:$0xff]
    %v3903 = vld [vmem:[#allocation2 + $0x8] sm:$0xff]
    %v3904 = vld [vmem:[#allocation2 + $0x10] sm:$0xff]
    %v3905 = vld [vmem:[#allocation2 + $0x18] sm:$0xff]
    %v3906 = vld [vmem:[#allocation2 + $0x20] sm:$0xff]
    %v3907 = vld [vmem:[#allocation2 + $0x28] sm:$0xff]
    %v3908 = vld [vmem:[#allocation2 + $0x30] sm:$0xff]
    %v3909 = vld [vmem:[#allocation2 + $0x38] sm:$0xff]
    %v3910 = vld [vmem:[#allocation2 + $0x40] sm:$0xff]
    %v3911 = vld [vmem:[#allocation2 + $0x48] sm:$0xff]
    %v3912 = vld [vmem:[#allocation2 + $0x50] sm:$0xff]
    %v3913 = vld [vmem:[#allocation2 + $0x58] sm:$0xff]
    %v3914 = vld [vmem:[#allocation2 + $0x60] sm:$0xff]
    %v3915 = vld [vmem:[#allocation2 + $0x68] sm:$0xff]
    %v3916 = vld [vmem:[#allocation2 + $0x70] sm:$0xff]
    %v3917 = vld [vmem:[#allocation2 + $0x78] sm:$0xff]
    %v3918 = vld [vmem:[#allocation3] sm:$0xff]
    %v3919 = vld [vmem:[#allocation3 + $0x8] sm:$0xff]
    %v3920 = vld [vmem:[#allocation3 + $0x10] sm:$0xff]
    %v3921 = vld [vmem:[#allocation3 + $0x18] sm:$0xff]
    %v3922 = vld [vmem:[#allocation3 + $0x20] sm:$0xff]
    %v3923 = vld [vmem:[#allocation3 + $0x28] sm:$0xff]
    %v3924 = vld [vmem:[#allocation3 + $0x30] sm:$0xff]
    %v3925 = vld [vmem:[#allocation3 + $0x38] sm:$0xff]
    %v3926 = vld [vmem:[#allocation3 + $0x40] sm:$0xff]
    %v3927 = vld [vmem:[#allocation3 + $0x48] sm:$0xff]
    %v3928 = vld [vmem:[#allocation3 + $0x50] sm:$0xff]
    %v3929 = vld [vmem:[#allocation3 + $0x58] sm:$0xff]
    %v3930 = vld [vmem:[#allocation3 + $0x60] sm:$0xff]
    %v3931 = vld [vmem:[#allocation3 + $0x68] sm:$0xff]
    %v3932 = vld [vmem:[#allocation3 + $0x70] sm:$0xff]
    %v3933 = vld [vmem:[#allocation3 + $0x78] sm:$0xff]
    %v3934 = vld [vmem:[#allocation3 + $0x80] sm:$0xff]
    %v3935 = vld [vmem:[#allocation3 + $0x88] sm:$0xff]
    %v3936 = vld [vmem:[#allocation3 + $0x90] sm:$0xff]
    %v3937 = vld [vmem:[#allocation3 + $0x98] sm:$0xff]
    %v3938 = vld [vmem:[#allocation3 + $0xa0] sm:$0xff]
    %v3939 = vld [vmem:[#allocation3 + $0xa8] sm:$0xff]
    %v3940 = vld [vmem:[#allocation3 + $0xb0] sm:$0xff]
    %v3941 = vld [vmem:[#allocation3 + $0xb8] sm:$0xff]
    %v3942 = vld [vmem:[#allocation3 + $0xc0] sm:$0xff]
    %v3943 = vld [vmem:[#allocation3 + $0xc8] sm:$0xff]
    %v3944 = vld [vmem:[#allocation3 + $0xd0] sm:$0xff]
    %v3945 = vld [vmem:[#allocation3 + $0xd8] sm:$0xff]
    %v3946 = vld [vmem:[#allocation3 + $0xe0] sm:$0xff]
    %v3947 = vld [vmem:[#allocation3 + $0xe8] sm:$0xff]
    %v3948 = vld [vmem:[#allocation3 + $0xf0] sm:$0xff]
    %v3949 = vld [vmem:[#allocation3 + $0xf8] sm:$0xff]
    %v3950 = vld [vmem:[#allocation3 + $0x100] sm:$0xff]
    %v3951 = vld [vmem:[#allocation3 + $0x108] sm:$0xff]
    %v3952 = vld [vmem:[#allocation3 + $0x110] sm:$0xff]
    %v3953 = vld [vmem:[#allocation3 + $0x118] sm:$0xff]
    %v3954 = vld [vmem:[#allocation3 + $0x120] sm:$0xff]
    %v3955 = vld [vmem:[#allocation3 + $0x128] sm:$0xff]
    %v3956 = vld [vmem:[#allocation3 + $0x130] sm:$0xff]
    %v3957 = vld [vmem:[#allocation3 + $0x138] sm:$0xff]
    %3958 = vmatprep.subr.mxu0 0.0
    %3959 = vmatpush1.msra.mxu0 %v301
    %3960 = vmatprep.subr.mxu0 0.0
    %3961 = vmatpush1.msra.mxu0 %v302
    %3962 = vmatprep.subr.mxu0 0.0
    %3963 = vmatpush1.msra.mxu0 %v303
    %3964 = vmatprep.subr.mxu0 0.0
    %3965 = vmatpush1.msra.mxu0 %v304
    %3966 = vmatprep.subr.mxu0 0.0
    %3967 = vmatpush1.msra.mxu0 %v305
    %3968 = vmatprep.subr.mxu0 0.0
    %3969 = vmatpush1.msra.mxu0 %v306
    %3970 = vmatprep.subr.mxu0 0.0
    %3971 = vmatpush1.msra.mxu0 %v307
    %3972 = vmatprep.subr.mxu0 0.0
    %3973 = vmatpush1.msra.mxu0 %v308
    %3974 = vmatprep.subr.mxu0 0.0
    %3975 = vmatpush1.msra.mxu0 %v309
    %3976 = vmatprep.subr.mxu0 0.0
    %3977 = vmatpush1.msra.mxu0 %v310
    %3978 = vmatprep.subr.mxu0 0.0
    %3979 = vmatpush1.msra.mxu0 %v311
    %3980 = vmatprep.subr.mxu0 0.0
    %3981 = vmatpush1.msra.mxu0 %v312
    %3982 = vmatprep.subr.mxu0 0.0
    %3983 = vmatpush1.msra.mxu0 %v313
    %3984 = vmatprep.subr.mxu0 0.0
    %3985 = vmatpush1.msra.mxu0 %v314
    %3986 = vmatprep.subr.mxu0 0.0
    %3987 = vmatpush1.msra.mxu0 %v315
    %3988 = vmatprep.subr.mxu0 0.0
    %3989 = vmatpush1.msra.mxu0 %v316
    %3990 = vmatprep.subr.mxu0 0.0
    %3991 = vmatpush1.msra.mxu0 %v317
    %3992 = vmatprep.subr.mxu0 0.0
    %3993 = vmatpush1.msra.mxu0 %v318
    %3994 = vmatprep.subr.mxu0 0.0
    %3995 = vmatpush1.msra.mxu0 %v319
    %3996 = vmatprep.subr.mxu0 0.0
    %3997 = vmatpush1.msra.mxu0 %v320
    %3998 = vmatprep.subr.mxu0 0.0
    %3999 = vmatpush1.msra.mxu0 %v321
    %4000 = vmatprep.subr.mxu0 0.0
    %4001 = vmatpush1.msra.mxu0 %v322
    %4002 = vmatprep.subr.mxu0 0.0
    %4003 = vmatpush1.msra.mxu0 %v323
    %4004 = vmatprep.subr.mxu0 0.0
    %4005 = vmatpush1.msra.mxu0 %v324
    %4006 = vmatprep.subr.mxu0 0.0
    %4007 = vmatpush1.msra.mxu0 %v325
    %4008 = vmatprep.subr.mxu0 0.0
    %4009 = vmatpush1.msra.mxu0 %v326
    %4010 = vmatprep.subr.mxu0 0.0
    %4011 = vmatpush1.msra.mxu0 %v327
    %4012 = vmatprep.subr.mxu0 0.0
    %4013 = vmatpush1.msra.mxu0 %v328
    %4014 = vmatprep.subr.mxu0 0.0
    %4015 = vmatpush1.msra.mxu0 %v329
    %4016 = vmatprep.subr.mxu0 0.0
    %4017 = vmatpush1.msra.mxu0 %v330
    %4018 = vmatprep.subr.mxu0 0.0
    %4019 = vmatpush1.msra.mxu0 %v331
    %4020 = vmatprep.subr.mxu0 0.0
    %4021 = vmatpush1.msra.mxu0 %v332
    %4022 = vmatprep.mubr.f32.mxu0 %v3919
    %4023 = vmatmul.mubr.f32.gmra.mrb[0].mxu0 %v3918
    %v4024 = vpop.f32.mrb[0].mxu0
    %v4025 = vadd.f32 0.0, %v4024
    %v4026 = vpop.f32.mrb[0].mxu0
    %4027 = vmatprep.mubr.f32.mxu0 %v3924
    %4028 = vmatmul.mubr.f32.gmra.mrb[0].mxu0 %v3923
    %v4029 = vpop.f32.mrb[0].mxu0
    %v4030 = vadd.f32 0.0, %v4029
    %v4031 = vpop.f32.mrb[0].mxu0
    %4032 = vmatprep.mubr.f32.mxu0 %v3929
    %4033 = vmatmul.mubr.f32.gmra.mrb[0].mxu0 %v3928
    %v4034 = vpop.f32.mrb[0].mxu0
    %v4035 = vadd.f32 0.0, %v4034
    %v4036 = vpop.f32.mrb[0].mxu0
    %4037 = vmatprep.mubr.f32.mxu0 %v3934
    %4038 = vmatmul.mubr.f32.gmra.mrb[0].mxu0 %v3933
    %v4039 = vpop.f32.mrb[0].mxu0
    %v4040 = vadd.f32 0.0, %v4039
    %v4041 = vpop.f32.mrb[0].mxu0
    %4042 = vmatprep.mubr.f32.mxu0 %v3939
    %4043 = vmatmul.mubr.f32.gmra.mrb[0].mxu0 %v3938
    %v4044 = vpop.f32.mrb[0].mxu0
    %v4045 = vadd.f32 0.0, %v4044
    %v4046 = vpop.f32.mrb[0].mxu0
    %4047 = vmatprep.mubr.f32.mxu0 %v3944
    %4048 = vmatmul.mubr.f32.gmra.mrb[0].mxu0 %v3943
    %v4049 = vpop.f32.mrb[0].mxu0
    %v4050 = vadd.f32 0.0, %v4049
    %v4051 = vpop.f32.mrb[0].mxu0
    %4052 = vmatprep.mubr.f32.mxu0 %v3949
    %4053 = vmatmul.mubr.f32.gmra.mrb[0].mxu0 %v3948
    %v4054 = vpop.f32.mrb[0].mxu0
    %v4055 = vadd.f32 0.0, %v4054
    %v4056 = vpop.f32.mrb[0].mxu0
    %4057 = vmatprep.mubr.f32.mxu0 %v3954
    %4058 = vmatmul.mubr.f32.gmra.mrb[0].mxu0 %v3953
    %v4059 = vpop.f32.mrb[0].mxu0
    %v4060 = vadd.f32 0.0, %v4059
    %v4061 = vpop.f32.mrb[0].mxu0
    %4062 = vdwg.mxu0
    %4063 = vmatprep.subr.mxu0 0.0
    %4064 = vmatpush1.msra.mxu0 %v333
    %4065 = vmatprep.subr.mxu0 0.0
    %4066 = vmatpush1.msra.mxu0 %v334
    %4067 = vmatprep.subr.mxu0 0.0
    %4068 = vmatpush1.msra.mxu0 %v335
    %4069 = vmatprep.subr.mxu0 0.0
    %4070 = vmatpush1.msra.mxu0 %v336
    %4071 = vmatprep.subr.mxu0 0.0
    %4072 = vmatpush1.msra.mxu0 %v337
    %4073 = vmatprep.subr.mxu0 0.0
    %4074 = vmatpush1.msra.mxu0 %v338
    %4075 = vmatprep.subr.mxu0 0.0
    %4076 = vmatpush1.msra.mxu0 %v339
    %4077 = vmatprep.subr.mxu0 0.0
    %4078 = vmatpush1.msra.mxu0 %v340
    %4079 = vmatprep.subr.mxu0 0.0
    %4080 = vmatpush1.msra.mxu0 %v341
    %4081 = vmatprep.subr.mxu0 0.0
    %4082 = vmatpush1.msra.mxu0 %v342
    %4083 = vmatprep.subr.mxu0 0.0
    %4084 = vmatpush1.msra.mxu0 %v343
    %4085 = vmatprep.subr.mxu0 0.0
    %4086 = vmatpush1.msra.mxu0 %v344
    %4087 = vmatprep.subr.mxu0 0.0
    %4088 = vmatpush1.msra.mxu0 %v345
    %4089 = vmatprep.subr.mxu0 0.0
    %4090 = vmatpush1.msra.mxu0 %v346
    %4091 = vmatprep.subr.mxu0 0.0
    %4092 = vmatpush1.msra.mxu0 %v347
    %4093 = vmatprep.subr.mxu0 0.0
    %4094 = vmatpush1.msra.mxu0 %v348
    %4095 = vmatprep.subr.mxu0 0.0
    %4096 = vmatpush1.msra.mxu0 %v349
    %4097 = vmatprep.subr.mxu0 0.0
    %4098 = vmatpush1.msra.mxu0 %v350
    %4099 = vmatprep.subr.mxu0 0.0
    %4100 = vmatpush1.msra.mxu0 %v351
    %4101 = vmatprep.subr.mxu0 0.0
    %4102 = vmatpush1.msra.mxu0 %v352
    %4103 = vmatprep.subr.mxu0 0.0
    %4104 = vmatpush1.msra.mxu0 %v353
    %4105 = vmatprep.subr.mxu0 0.0
    %4106 = vmatpush1.msra.mxu0 %v354
    %4107 = vmatprep.subr.mxu0 0.0
    %4108 = vmatpush1.msra.mxu0 %v355
    %4109 = vmatprep.subr.mxu0 0.0
    %4110 = vmatpush1.msra.mxu0 %v356
    %4111 = vmatprep.subr.mxu0 0.0
    %4112 = vmatpush1.msra.mxu0 %v357
    %4113 = vmatprep.subr.mxu0 0.0
    %4114 = vmatpush1.msra.mxu0 %v358
    %4115 = vmatprep.subr.mxu0 0.0
    %4116 = vmatpush1.msra.mxu0 %v359
    %4117 = vmatprep.subr.mxu0 0.0
    %4118 = vmatpush1.msra.mxu0 %v360
    %4119 = vmatprep.subr.mxu0 0.0
    %4120 = vmatpush1.msra.mxu0 %v361
    %4121 = vmatprep.subr.mxu0 0.0
    %4122 = vmatpush1.msra.mxu0 %v362
    %4123 = vmatprep.subr.mxu0 0.0
    %4124 = vmatpush1.msra.mxu0 %v363
    %4125 = vmatprep.subr.mxu0 0.0
    %4126 = vmatpush1.msra.mxu0 %v364
    %4127 = vmatprep.mubr.f32.mxu0 %v3921
    %4128 = vmatmul.mubr.f32.gmra.mrb[0].mxu0 %v3920
    %v4129 = vpop.f32.mrb[0].mxu0
    %v4130 = vadd.f32 %v4025, %v4129
    %v4131 = vpop.f32.mrb[0].mxu0
    %4132 = vmatprep.mubr.f32.mxu0 %v3926
    %4133 = vmatmul.mubr.f32.gmra.mrb[0].mxu0 %v3925
    %v4134 = vpop.f32.mrb[0].mxu0
    %v4135 = vadd.f32 %v4030, %v4134
    %v4136 = vpop.f32.mrb[0].mxu0
    %4137 = vmatprep.mubr.f32.mxu0 %v3931
    %4138 = vmatmul.mubr.f32.gmra.mrb[0].mxu0 %v3930
    %v4139 = vpop.f32.mrb[0].mxu0
    %v4140 = vadd.f32 %v4035, %v4139
    %v4141 = vpop.f32.mrb[0].mxu0
    %4142 = vmatprep.mubr.f32.mxu0 %v3936
    %4143 = vmatmul.mubr.f32.gmra.mrb[0].mxu0 %v3935
    %v4144 = vpop.f32.mrb[0].mxu0
    %v4145 = vadd.f32 %v4040, %v4144
    %v4146 = vpop.f32.mrb[0].mxu0
    %4147 = vmatprep.mubr.f32.mxu0 %v3941
    %4148 = vmatmul.mubr.f32.gmra.mrb[0].mxu0 %v3940
    %v4149 = vpop.f32.mrb[0].mxu0
    %v4150 = vadd.f32 %v4045, %v4149
    %v4151 = vpop.f32.mrb[0].mxu0
    %4152 = vmatprep.mubr.f32.mxu0 %v3946
    %4153 = vmatmul.mubr.f32.gmra.mrb[0].mxu0 %v3945
    %v4154 = vpop.f32.mrb[0].mxu0
    %v4155 = vadd.f32 %v4050, %v4154
    %v4156 = vpop.f32.mrb[0].mxu0
    %4157 = vmatprep.mubr.f32.mxu0 %v3951
    %4158 = vmatmul.mubr.f32.gmra.mrb[0].mxu0 %v3950
    %v4159 = vpop.f32.mrb[0].mxu0
    %v4160 = vadd.f32 %v4055, %v4159
    %v4161 = vpop.f32.mrb[0].mxu0
    %4162 = vmatprep.mubr.f32.mxu0 %v3956
    %4163 = vmatmul.mubr.f32.gmra.mrb[0].mxu0 %v3955
    %v4164 = vpop.f32.mrb[0].mxu0
    %v4165 = vadd.f32 %v4060, %v4164
    %v4166 = vpop.f32.mrb[0].mxu0
    %4167 = vdwg.mxu0
    %4168 = vmatprep.subr.mxu0 0.0
    %4169 = vmatpush1.msra.mxu0 %v365
    %4170 = vmatprep.subr.mxu0 0.0
    %4171 = vmatpush1.msra.mxu0 %v366
    %4172 = vmatprep.subr.mxu0 0.0
    %4173 = vmatpush1.msra.mxu0 %v367
    %4174 = vmatprep.subr.mxu0 0.0
    %4175 = vmatpush1.msra.mxu0 %v368
    %4176 = vmatprep.subr.mxu0 0.0
    %4177 = vmatpush1.msra.mxu0 %v369
    %4178 = vmatprep.subr.mxu0 0.0
    %4179 = vmatpush1.msra.mxu0 %v370
    %4180 = vmatprep.subr.mxu0 0.0
    %4181 = vmatpush1.msra.mxu0 %v371
    %4182 = vmatprep.subr.mxu0 0.0
    %4183 = vmatpush1.msra.mxu0 %v372
    %4184 = vmatprep.subr.mxu0 0.0
    %4185 = vmatpush1.msra.mxu0 %v373
    %4186 = vmatprep.subr.mxu0 0.0
    %4187 = vmatpush1.msra.mxu0 %v374
    %4188 = vmatprep.subr.mxu0 0.0
    %4189 = vmatpush1.msra.mxu0 %v375
    %4190 = vmatprep.subr.mxu0 0.0
    %4191 = vmatpush1.msra.mxu0 %v376
    %4192 = vmatprep.subr.mxu0 0.0
    %4193 = vmatpush1.msra.mxu0 %v377
    %4194 = vmatprep.subr.mxu0 0.0
    %4195 = vmatpush1.msra.mxu0 %v378
    %4196 = vmatprep.subr.mxu0 0.0
    %4197 = vmatpush1.msra.mxu0 %v379
    %4198 = vmatprep.subr.mxu0 0.0
    %4199 = vmatpush1.msra.mxu0 %v380
    %4200 = vmatprep.subr.mxu0 0.0
    %4201 = vmatpush1.msra.mxu0 0.0
    %4202 = vmatprep.subr.mxu0 0.0
    %4203 = vmatpush1.msra.mxu0 0.0
    %4204 = vmatprep.subr.mxu0 0.0
    %4205 = vmatpush1.msra.mxu0 0.0
    %4206 = vmatprep.subr.mxu0 0.0
    %4207 = vmatpush1.msra.mxu0 0.0
    %4208 = vmatprep.subr.mxu0 0.0
    %4209 = vmatpush1.msra.mxu0 0.0
    %4210 = vmatprep.subr.mxu0 0.0
    %4211 = vmatpush1.msra.mxu0 0.0
    %4212 = vmatprep.subr.mxu0 0.0
    %4213 = vmatpush1.msra.mxu0 0.0
    %4214 = vmatprep.subr.mxu0 0.0
    %4215 = vmatpush1.msra.mxu0 0.0
    %4216 = vmatprep.subr.mxu0 0.0
    %4217 = vmatpush1.msra.mxu0 0.0
    %4218 = vmatprep.subr.mxu0 0.0
    %4219 = vmatpush1.msra.mxu0 0.0
    %4220 = vmatprep.subr.mxu0 0.0
    %4221 = vmatpush1.msra.mxu0 0.0
    %4222 = vmatprep.subr.mxu0 0.0
    %4223 = vmatpush1.msra.mxu0 0.0
    %4224 = vmatprep.subr.mxu0 0.0
    %4225 = vmatpush1.msra.mxu0 0.0
    %4226 = vmatprep.subr.mxu0 0.0
    %4227 = vmatpush1.msra.mxu0 0.0
    %4228 = vmatprep.subr.mxu0 0.0
    %4229 = vmatpush1.msra.mxu0 0.0
    %4230 = vmatprep.subr.mxu0 0.0
    %4231 = vmatpush1.msra.mxu0 0.0
    %4232 = vmatprep.mubr.f32.mxu0 0.0
    %4233 = vmatmul.mubr.f32.gmra.mrb[0].mxu0 %v3922
    %v4234 = vpop.f32.mrb[0].mxu0
    %v4235 = vadd.f32 %v4130, %v4234
    %v4236 = vpop.f32.mrb[0].mxu0
    %4237 = vmatprep.mubr.f32.mxu0 0.0
    %4238 = vmatmul.mubr.f32.gmra.mrb[0].mxu0 %v3927
    %v4239 = vpop.f32.mrb[0].mxu0
    %v4240 = vadd.f32 %v4135, %v4239
    %v4241 = vpop.f32.mrb[0].mxu0
    %4242 = vmatprep.mubr.f32.mxu0 0.0
    %4243 = vmatmul.mubr.f32.gmra.mrb[0].mxu0 %v3932
    %v4244 = vpop.f32.mrb[0].mxu0
    %v4245 = vadd.f32 %v4140, %v4244
    %v4246 = vpop.f32.mrb[0].mxu0
    %4247 = vmatprep.mubr.f32.mxu0 0.0
    %4248 = vmatmul.mubr.f32.gmra.mrb[0].mxu0 %v3937
    %v4249 = vpop.f32.mrb[0].mxu0
    %v4250 = vadd.f32 %v4145, %v4249
    %v4251 = vpop.f32.mrb[0].mxu0
    %4252 = vmatprep.mubr.f32.mxu0 0.0
    %4253 = vmatmul.mubr.f32.gmra.mrb[0].mxu0 %v3942
    %v4254 = vpop.f32.mrb[0].mxu0
    %v4255 = vadd.f32 %v4150, %v4254
    %v4256 = vpop.f32.mrb[0].mxu0
    %4257 = vmatprep.mubr.f32.mxu0 0.0
    %4258 = vmatmul.mubr.f32.gmra.mrb[0].mxu0 %v3947
    %v4259 = vpop.f32.mrb[0].mxu0
    %v4260 = vadd.f32 %v4155, %v4259
    %v4261 = vpop.f32.mrb[0].mxu0
    %4262 = vmatprep.mubr.f32.mxu0 0.0
    %4263 = vmatmul.mubr.f32.gmra.mrb[0].mxu0 %v3952
    %v4264 = vpop.f32.mrb[0].mxu0
    %v4265 = vadd.f32 %v4160, %v4264
    %v4266 = vpop.f32.mrb[0].mxu0
    %4267 = vmatprep.mubr.f32.mxu0 0.0
    %4268 = vmatmul.mubr.f32.gmra.mrb[0].mxu0 %v3957
    %v4269 = vpop.f32.mrb[0].mxu0
    %v4270 = vadd.f32 %v4165, %v4269
    %v4271 = vpop.f32.mrb[0].mxu0
    %4272 = vdwg.mxu0
    %4273 = vmatprep.subr.mxu0 0.0
    %4274 = vmatpush1.msra.mxu0 %v269
    %4275 = vmatprep.subr.mxu0 0.0
    %4276 = vmatpush1.msra.mxu0 %v270
    %4277 = vmatprep.subr.mxu0 0.0
    %4278 = vmatpush1.msra.mxu0 %v271
    %4279 = vmatprep.subr.mxu0 0.0
    %4280 = vmatpush1.msra.mxu0 %v272
    %4281 = vmatprep.subr.mxu0 0.0
    %4282 = vmatpush1.msra.mxu0 %v273
    %4283 = vmatprep.subr.mxu0 0.0
    %4284 = vmatpush1.msra.mxu0 %v274
    %4285 = vmatprep.subr.mxu0 0.0
    %4286 = vmatpush1.msra.mxu0 %v275
    %4287 = vmatprep.subr.mxu0 0.0
    %4288 = vmatpush1.msra.mxu0 %v276
    %4289 = vmatprep.subr.mxu0 0.0
    %4290 = vmatpush1.msra.mxu0 %v277
    %4291 = vmatprep.subr.mxu0 0.0
    %4292 = vmatpush1.msra.mxu0 %v278
    %4293 = vmatprep.subr.mxu0 0.0
    %4294 = vmatpush1.msra.mxu0 %v279
    %4295 = vmatprep.subr.mxu0 0.0
    %4296 = vmatpush1.msra.mxu0 %v280
    %4297 = vmatprep.subr.mxu0 0.0
    %4298 = vmatpush1.msra.mxu0 %v281
    %4299 = vmatprep.subr.mxu0 0.0
    %4300 = vmatpush1.msra.mxu0 %v282
    %4301 = vmatprep.subr.mxu0 0.0
    %4302 = vmatpush1.msra.mxu0 %v283
    %4303 = vmatprep.subr.mxu0 0.0
    %4304 = vmatpush1.msra.mxu0 %v284
    %4305 = vmatprep.subr.mxu0 0.0
    %4306 = vmatpush1.msra.mxu0 %v285
    %4307 = vmatprep.subr.mxu0 0.0
    %4308 = vmatpush1.msra.mxu0 %v286
    %4309 = vmatprep.subr.mxu0 0.0
    %4310 = vmatpush1.msra.mxu0 %v287
    %4311 = vmatprep.subr.mxu0 0.0
    %4312 = vmatpush1.msra.mxu0 %v288
    %4313 = vmatprep.subr.mxu0 0.0
    %4314 = vmatpush1.msra.mxu0 %v289
    %4315 = vmatprep.subr.mxu0 0.0
    %4316 = vmatpush1.msra.mxu0 %v290
    %4317 = vmatprep.subr.mxu0 0.0
    %4318 = vmatpush1.msra.mxu0 %v291
    %4319 = vmatprep.subr.mxu0 0.0
    %4320 = vmatpush1.msra.mxu0 %v292
    %4321 = vmatprep.subr.mxu0 0.0
    %4322 = vmatpush1.msra.mxu0 %v293
    %4323 = vmatprep.subr.mxu0 0.0
    %4324 = vmatpush1.msra.mxu0 %v294
    %4325 = vmatprep.subr.mxu0 0.0
    %4326 = vmatpush1.msra.mxu0 %v295
    %4327 = vmatprep.subr.mxu0 0.0
    %4328 = vmatpush1.msra.mxu0 %v296
    %4329 = vmatprep.subr.mxu0 0.0
    %4330 = vmatpush1.msra.mxu0 %v297
    %4331 = vmatprep.subr.mxu0 0.0
    %4332 = vmatpush1.msra.mxu0 %v298
    %4333 = vmatprep.subr.mxu0 0.0
    %4334 = vmatpush1.msra.mxu0 %v299
    %4335 = vmatprep.subr.mxu0 0.0
    %4336 = vmatpush1.msra.mxu0 %v300
    %4337 = vmatprep.mubr.f32.mxu0 %v3903
    %4338 = vmatmul.mubr.f32.gmra.mrb[0].mxu0 %v3902
    %v4339 = vpop.f32.mrb[0].mxu0
    %v4340 = vadd.f32 %v4235, %v4339
    %v4341 = vpop.f32.mrb[0].mxu0
    %4342 = vmatprep.mubr.f32.mxu0 %v3905
    %4343 = vmatmul.mubr.f32.gmra.mrb[0].mxu0 %v3904
    %v4344 = vpop.f32.mrb[0].mxu0
    %v4345 = vadd.f32 %v4240, %v4344
    %v4346 = vpop.f32.mrb[0].mxu0
    %4347 = vmatprep.mubr.f32.mxu0 %v3907
    %4348 = vmatmul.mubr.f32.gmra.mrb[0].mxu0 %v3906
    %v4349 = vpop.f32.mrb[0].mxu0
    %v4350 = vadd.f32 %v4245, %v4349
    %v4351 = vpop.f32.mrb[0].mxu0
    %4352 = vmatprep.mubr.f32.mxu0 %v3909
    %4353 = vmatmul.mubr.f32.gmra.mrb[0].mxu0 %v3908
    %v4354 = vpop.f32.mrb[0].mxu0
    %v4355 = vadd.f32 %v4250, %v4354
    %v4356 = vpop.f32.mrb[0].mxu0
    %4357 = vmatprep.mubr.f32.mxu0 %v3911
    %4358 = vmatmul.mubr.f32.gmra.mrb[0].mxu0 %v3910
    %v4359 = vpop.f32.mrb[0].mxu0
    %v4360 = vadd.f32 %v4255, %v4359
    %v4361 = vpop.f32.mrb[0].mxu0
    %4362 = vmatprep.mubr.f32.mxu0 %v3913
    %4363 = vmatmul.mubr.f32.gmra.mrb[0].mxu0 %v3912
    %v4364 = vpop.f32.mrb[0].mxu0
    %v4365 = vadd.f32 %v4260, %v4364
    %v4366 = vpop.f32.mrb[0].mxu0
    %4367 = vmatprep.mubr.f32.mxu0 %v3915
    %4368 = vmatmul.mubr.f32.gmra.mrb[0].mxu0 %v3914
    %v4369 = vpop.f32.mrb[0].mxu0
    %v4370 = vadd.f32 %v4265, %v4369
    %v4371 = vpop.f32.mrb[0].mxu0
    %4372 = vmatprep.mubr.f32.mxu0 %v3917
    %4373 = vmatmul.mubr.f32.gmra.mrb[0].mxu0 %v3916
    %v4374 = vpop.f32.mrb[0].mxu0
    %v4375 = vadd.f32 %v4270, %v4374
    %v4376 = vpop.f32.mrb[0].mxu0
    %4377 = vdwg.mxu0
    %vm4378 = vcmask 7168
    %4379 = vst.msk [vmem:[%s8] sm:$0xff] %vm4378, %v4340
    %4380 = vst.msk [vmem:[%s8 + $0x8] sm:$0xff] %vm4378, %v4345
    %4381 = vst.msk [vmem:[%s8 + $0x10] sm:$0xff] %vm4378, %v4350
    %4382 = vst.msk [vmem:[%s8 + $0x18] sm:$0xff] %vm4378, %v4355
    %4383 = vst.msk [vmem:[%s8 + $0x20] sm:$0xff] %vm4378, %v4360
    %4384 = vst.msk [vmem:[%s8 + $0x28] sm:$0xff] %vm4378, %v4365
    %4385 = vst.msk [vmem:[%s8 + $0x30] sm:$0xff] %vm4378, %v4370
    %4386 = vst.msk [vmem:[%s8 + $0x38] sm:$0xff] %vm4378, %v4375
    // Predicated region
    $region46: #{tpu_custom_call.1} parent=1 // pred_check
      _
    $region47: #{tpu_custom_call.1} parent=1 // pred_check_branch
      %4388 = sbr.rel (0) target = $region49
    $region48: #{tpu_custom_call.1} parent=1 // pred_region
      _
    $region49: #{tpu_custom_call.1} parent=1 // pred_fallthru
      _
    // Predicated region
    $region50: #{tpu_custom_call.1} parent=1 // pred_check
      _
    $region51: #{tpu_custom_call.1} parent=1 // pred_check_branch
      %4390 = sbr.rel (0) target = $region53
    $region52: #{tpu_custom_call.1} parent=1 // pred_region
      _
    $region53: #{tpu_custom_call.1} parent=1 // pred_fallthru
      _
    %4391 = vsyncpa [#allocation4], 1
    %4392 = vsyncpa [#allocation6], 1

</llo_original>
